<compile_context>
chip_gen: v7x
topology: tpu7x:2x2x1
jax: 0.10.0
libtpu: 0.0.40
codegen_flags: <defaults>
</compile_context>

<pallas_src>
from functools import lru_cache

import numpy as np
import jax
import jax.numpy as jnp
from jax import lax
from jax.experimental import pallas as pl
from jax.experimental.pallas import tpu as pltpu

COMPUTE_DTYPE = jnp.bfloat16   # MXU operand dtype; accumulation / epilogues stay f32.


# ----------------------------------------------------------------------------
# Constant spatial operators (numpy, built once and cached)
# ----------------------------------------------------------------------------
def _adaptive_pool_matrix(out_size, in_size):
    """PyTorch AdaptiveAvgPool bins: [floor(i*I/O), ceil((i+1)*I/O))."""
    P = np.zeros((out_size, in_size), np.float32)
    for i in range(out_size):
        start = (i * in_size) // out_size
        end = -((-(i + 1) * in_size) // out_size)   # ceil division
        P[i, start:end] = 1.0 / float(end - start)
    return P


def _bilinear_matrix(out_size, in_size):
    """F.interpolate(..., mode='bilinear', align_corners=True), 1-D factor."""
    M = np.zeros((out_size, in_size), np.float32)
    if in_size == 1:
        M[:, 0] = 1.0
        return M
    for h in range(out_size):
        src = h * (in_size - 1) / (out_size - 1)
        i0 = int(np.floor(src))
        i1 = min(i0 + 1, in_size - 1)
        w1 = src - i0
        M[h, i0] += 1.0 - w1
        M[h, i1] += w1
    return M


@lru_cache(maxsize=None)
def _build_spatial_operators(H, W, scales_rev):
    """Stacked pool / upsample / mask operators for all pyramid scales.

    Returns (numpy):
      Pt_all   : (HW, S_tot)      transposed stacked adaptive-avg-pool operator
      Ut_all   : (S_tot, HW)      stacked bilinear (align_corners=True) upsample op
      col_mask : (n_stages, S_tot) 0/1 selector of each stage's pooled columns
      sm       : (9, 1, HW)       3x3-conv tap validity masks (zero padding)
    """
    HW = H * W
    P_blocks, Ut_blocks, sizes = [], [], []
    for s in scales_rev:
        P = np.kron(_adaptive_pool_matrix(s, H), _adaptive_pool_matrix(s, W))  # (s*s, HW)
        U = np.kron(_bilinear_matrix(H, s), _bilinear_matrix(W, s))            # (HW, s*s)
        P_blocks.append(P)
        Ut_blocks.append(U.T)
        sizes.append(s * s)
    Pt_all = np.concatenate(P_blocks, axis=0).T.astype(np.float32)             # (HW, S_tot)
    Ut_all = np.concatenate(Ut_blocks, axis=0).astype(np.float32)              # (S_tot, HW)
    S_tot = int(sum(sizes))

    col_mask = np.zeros((len(scales_rev), S_tot), np.float32)
    off = 0
    for i, sz in enumerate(sizes):
        col_mask[i, off:off + sz] = 1.0
        off += sz

    yy, xx = np.meshgrid(np.arange(H), np.arange(W), indexing="ij")
    yy = yy.reshape(-1)
    xx = xx.reshape(-1)
    sm = np.zeros((9, 1, HW), np.float32)
    for t in range(9):
        oy, ox = t // 3 - 1, t % 3 - 1
        valid = (yy + oy >= 0) & (yy + oy < H) & (xx + ox >= 0) & (xx + ox < W)
        sm[t, 0] = valid.astype(np.float32)
    return Pt_all, Ut_all, col_mask, sm


# ----------------------------------------------------------------------------
# Fused PPM Pallas kernel
# ----------------------------------------------------------------------------
def _make_ppm_kernel(H, W, C2, compute_dtype):
    HW = H * W

    def kernel(x_ref, pt_ref, ws_ref, bs_ref, bm_ref, ut_ref,
               wbx_ref, wbs_ref, bb_ref, sm_ref, o_ref):
        # x_ref  : (1, C1, HW)     one image, channels-first, HW on the lane axis [bf16]
        # pt_ref : (HW, S_tot)     stacked adaptive-avg-pool operator (transposed) [f32]
        # ws_ref : (nS*C2, C1)     stacked, BN-scale-folded 1x1 conv weights       [bf16]
        # bs_ref : (nS*C2, 1)      stacked BN biases                               [f32]
        # bm_ref : (nS*C2, S_tot)  per-stage column block mask                     [f32]
        # ut_ref : (S_tot, HW)     stacked bilinear upsample operator              [f32]
        # wbx_ref: (9*C2, C1)      stacked bottleneck taps acting on x channels    [bf16]
        # wbs_ref: (9*C2, nS*C2)   stacked bottleneck taps acting on stage chans   [bf16]
        # bb_ref : (C2, 1)         bottleneck BN bias                              [f32]
        # sm_ref : (9, 1, HW)      tap validity masks (zero padding)               [f32]
        # o_ref  : (1, C2, HW)     output, lane-dense (HW on the lane axis)        [f32]
        cd = compute_dtype
        f32 = jnp.float32
        x_bf = x_ref[0]                                             # (C1, HW) bf16

        # ---- pyramid stages: pool -> 1x1 conv (BN folded) -> ReLU -> upsample
        # pool / upsample operators stay f32 (negligible FLOPs, exact weights).
        pooled = jnp.dot(x_bf.astype(f32), pt_ref[...],
                         preferred_element_type=f32)                # (C1, S_tot)
        y = jnp.dot(ws_ref[...], pooled.astype(cd),
                    preferred_element_type=f32)                     # (nS*C2, S_tot)
        y = jnp.maximum(y + bs_ref[...], 0.0) * bm_ref[...]         # bias + ReLU + block mask
        stages = jnp.dot(y, ut_ref[...],
                         preferred_element_type=f32)                # (nS*C2, HW) f32

        # ---- bottleneck 3x3 conv (BN folded) + ReLU, stacked-tap formulation.
        # z[t*C2:(t+1)*C2] = W_t @ concat([x, stages]) for every tap t, computed
        # with two well-shaped matmuls (split over the channel concat, so the
        # concat is never materialized).  Activations are cast to bf16 ONCE.
        stages_bf = stages.astype(cd)
        z = (jnp.dot(wbx_ref[...], x_bf, preferred_element_type=f32)
             + jnp.dot(wbs_ref[...], stages_bf, preferred_element_type=f32))  # (9*C2, HW)

        # Finish the conv as 9 shifted taps on the SMALL (C2, HW) slabs of z:
        # column shift + border masking commute exactly with the channel matmul.
        # Centre tap (t = 4): zero shift, mask is all ones.
        acc = z[4 * C2:5 * C2]                                      # (C2, HW) f32
        for t in (0, 1, 2, 3, 5, 6, 7, 8):
            oy, ox = t // 3 - 1, t % 3 - 1
            off = oy * W + ox                                       # static, nonzero
            zt = pltpu.roll(z[t * C2:(t + 1) * C2], shift=(-off) % HW, axis=1)
            acc = acc + zt * sm_ref[t]                              # (C2,HW)*(1,HW)
        o_ref[0] = jnp.maximum(acc + bb_ref[...], 0.0).astype(o_ref.dtype)

    return kernel


def ppm_pallas(x_flat, ops, *, single_buffer_constants=True):
    """x_flat: (N, C1, HW) bf16  ->  (N, C2, HW) f32 (already NCHW-flattened)."""
    N, C1, HW = x_flat.shape
    H, W = ops["H"], ops["W"]
    C2 = ops["bb"].shape[0]
    nS_C2 = ops["ws"].shape[0]
    S_tot = ops["pt"].shape[1]
    cin = C1 + nS_C2

    kernel = _make_ppm_kernel(H, W, C2, COMPUTE_DTYPE)

    def const_spec(shape):
        idx = lambda n: (0,) * len(shape)
        if single_buffer_constants:
            # Constant index_map => never re-fetched; single-buffer to avoid
            # doubling the VMEM footprint of the invariant weights/operators.
            return pl.BlockSpec(shape, idx, pipeline_mode=pl.Buffered(1))
        return pl.BlockSpec(shape, idx)

    flops = N * (2 * C1 * HW * S_tot            # pooling matmul
                 + 2 * nS_C2 * C1 * S_tot       # stage 1x1 convs
                 + 2 * nS_C2 * S_tot * HW       # upsample matmul
                 + 2 * (9 * C2) * cin * HW)     # stacked-tap bottleneck
    const_bytes = sum(int(np.prod(ops[k].shape)) * int(ops[k].dtype.itemsize)
                      for k in ("pt", "ws", "bs", "bm", "ut", "wbx", "wbs", "bb", "sm"))
    bytes_accessed = (int(x_flat.size) * int(x_flat.dtype.itemsize)
                      + const_bytes + N * C2 * HW * 4)
    cost = pl.CostEstimate(flops=int(flops), transcendentals=0,
                           bytes_accessed=int(bytes_accessed))

    return pl.pallas_call(
        kernel,
        out_shape=jax.ShapeDtypeStruct((N, C2, HW), jnp.float32),
        grid=(N,),
        in_specs=[
            pl.BlockSpec((1, C1, HW), lambda n: (n, 0, 0)),
            const_spec((HW, S_tot)),
            const_spec((nS_C2, C1)),
            const_spec((nS_C2, 1)),
            const_spec((nS_C2, S_tot)),
            const_spec((S_tot, HW)),
            const_spec((9 * C2, C1)),
            const_spec((9 * C2, nS_C2)),
            const_spec((C2, 1)),
            const_spec((9, 1, HW)),
        ],
        out_specs=pl.BlockSpec((1, C2, HW), lambda n: (n, 0, 0)),
        compiler_params=pltpu.CompilerParams(
            dimension_semantics=("parallel",),
            vmem_limit_bytes=64 * 1024 * 1024,
        ),
        cost_estimate=cost,
    )(x_flat, ops["pt"], ops["ws"], ops["bs"], ops["bm"], ops["ut"],
      ops["wbx"], ops["wbs"], ops["bb"], ops["sm"])


# ----------------------------------------------------------------------------
# Parameters (synthetic, matching the PyTorch module's structure / eval-mode BN)
# ----------------------------------------------------------------------------
def init_params(key, c1, c2, scales, eps=1e-5):
    params = {"stages": [], "eps": eps}
    for _ in scales:
        key, k1, k2, k3, k4, k5 = jax.random.split(key, 6)
        params["stages"].append(dict(
            w=jax.random.normal(k1, (c1, c2), jnp.float32) * 0.1,   # 1x1 conv, no bias
            gamma=jax.random.uniform(k2, (c2,), jnp.float32, 0.5, 1.5),
            beta=jax.random.normal(k3, (c2,), jnp.float32) * 0.1,
            mean=jax.random.normal(k4, (c2,), jnp.float32) * 0.1,
            var=jax.random.uniform(k5, (c2,), jnp.float32, 0.5, 1.5),
        ))
    cin = c1 + c2 * len(scales)
    key, k1, k2, k3, k4, k5 = jax.random.split(key, 6)
    params["bottleneck"] = dict(
        w=jax.random.normal(k1, (3, 3, cin, c2), jnp.float32) * 0.05,  # 3x3 conv, HWIO
        gamma=jax.random.uniform(k2, (c2,), jnp.float32, 0.5, 1.5),
        beta=jax.random.normal(k3, (c2,), jnp.float32) * 0.1,
        mean=jax.random.normal(k4, (c2,), jnp.float32) * 0.1,
        var=jax.random.uniform(k5, (c2,), jnp.float32, 0.5, 1.5),
    )
    return params


def prepare_ppm(params, H, W, scales, compute_dtype=COMPUTE_DTYPE):
    """Fold eval-mode BN into the conv weights, pack / stack per-stage and per-tap
    weights, and build the constant pool / upsample / mask operators (once)."""
    eps = params["eps"]
    c1, c2 = params["stages"][0]["w"].shape
    n_stages = len(scales)
    scales_rev = tuple(reversed(scales))     # torch concat order: [x] + outs[::-1]

    Pt_all, Ut_all, col_mask, sm = _build_spatial_operators(H, W, scales_rev)

    # Stage 1x1 convs stacked in reversed-scale order, BN scale folded into W.
    ws_blocks, bs_blocks = [], []
    for idx in reversed(range(n_stages)):
        p = params["stages"][idx]
        scale = p["gamma"] / jnp.sqrt(p["var"] + eps)
        bias = p["beta"] - p["mean"] * scale
        ws_blocks.append((p["w"] * scale[None, :]).T)        # (C2, C1)
        bs_blocks.append(bias.reshape(c2, 1))
    ws = jnp.concatenate(ws_blocks, axis=0)                  # (nS*C2, C1)
    bs = jnp.concatenate(bs_blocks, axis=0)                  # (nS*C2, 1)
    bm = jnp.asarray(np.repeat(col_mask, c2, axis=0))        # (nS*C2, S_tot)

    # Bottleneck 3x3 conv: fold BN scale, stack the 9 taps into one matrix, split
    # the input channels into the x part and the stage part (concat order).
    pb = params["bottleneck"]
    cin = c1 + c2 * n_stages
    scale_b = pb["gamma"] / jnp.sqrt(pb["var"] + eps)
    bias_b = pb["beta"] - pb["mean"] * scale_b
    wb = (pb["w"] * scale_b[None, None, None, :]).reshape(9, cin, c2)   # (9, cin, C2)
    wb_t = jnp.transpose(wb, (0, 2, 1))                                 # (9, C2, cin)
    wbx = wb_t[:, :, :c1].reshape(9 * c2, c1)                           # (9*C2, C1)
    wbs = wb_t[:, :, c1:].reshape(9 * c2, cin - c1)                     # (9*C2, nS*C2)

    cd = compute_dtype
    return {
        "H": H, "W": W,
        "pt": jnp.asarray(Pt_all),     # f32 (exact pooling weights)
        "ut": jnp.asarray(Ut_all),     # f32 (exact interpolation weights)
        "ws": ws.astype(cd),
        "bs": bs,                      # f32 epilogue
        "bm": bm,                      # f32 epilogue
        "wbx": wbx.astype(cd),
        "wbs": wbs.astype(cd),
        "bb": bias_b.reshape(c2, 1),   # f32 epilogue
        "sm": jnp.asarray(sm),         # f32
    }


# ----------------------------------------------------------------------------
# Full PPM forward (NCHW in, NCHW out — only free reshapes on either side)
# ----------------------------------------------------------------------------
def ppm_forward(x_nchw, ops):
    N, C1, H, W = x_nchw.shape
    assert (H, W) == (ops["H"], ops["W"])
    # bf16 activations: the kernel computes its matmuls in bf16 anyway; feeding
    # f32 would only double HBM read bytes of the largest operand.
    x_flat = x_nchw.reshape(N, C1, H * W).astype(COMPUTE_DTYPE)
    try:
        out = ppm_pallas(x_flat, ops, single_buffer_constants=True)
    except Exception:
        # Fallback if this JAX build rejects Buffered(1) single-buffering; the
        # constants are then double-buffered (harmless at these sizes).
        out = ppm_pallas(x_flat, ops, single_buffer_constants=False)
    return out.reshape(N, out.shape[1], H, W)    # pure reshape back to NCHW


# ----------------------------------------------------------------------------
# Pure-JAX f32 reference (PyTorch PPM semantics) for numerical validation
# ----------------------------------------------------------------------------
def ppm_reference(x, params, scales):
    eps = params["eps"]
    N, C1, H, W = x.shape
    outs = []
    for p, s in zip(params["stages"], scales):
        ph = jnp.asarray(_adaptive_pool_matrix(s, H))                 # (s, H)
        pw = jnp.asarray(_adaptive_pool_matrix(s, W))                 # (s, W)
        pooled = jnp.einsum("ah,nchw->ncaw", ph, x)
        pooled = jnp.einsum("bw,ncaw->ncab", pw, pooled)              # (N,C1,s,s)
        y = jnp.einsum("ncab,cd->ndab", pooled, p["w"])               # 1x1 conv
        scale = p["gamma"] / jnp.sqrt(p["var"] + eps)
        y = (y - p["mean"][None, :, None, None]) * scale[None, :, None, None] \
            + p["beta"][None, :, None, None]
        y = jnp.maximum(y, 0.0)
        uh = jnp.asarray(_bilinear_matrix(H, s))                      # (H, s)
        uw = jnp.asarray(_bilinear_matrix(W, s))                      # (W, s)
        up = jnp.einsum("ha,ncab->nchb", uh, y)
        up = jnp.einsum("wb,nchb->nchw", uw, up)
        outs.append(up)
    cat = jnp.concatenate([x] + outs[::-1], axis=1)                   # (N, cin, H, W)
    pb = params["bottleneck"]
    z = lax.conv_general_dilated(cat, pb["w"], window_strides=(1, 1),
                                 padding=((1, 1), (1, 1)),
                                 dimension_numbers=("NCHW", "HWIO", "NCHW"))
    scale = pb["gamma"] / jnp.sqrt(pb["var"] + eps)
    z = (z - pb["mean"][None, :, None, None]) * scale[None, :, None, None] \
        + pb["beta"][None, :, None, None]
    return jnp.maximum(z, 0.0)


if __name__ == "__main__":
    key = jax.random.PRNGKey(0)
    k_x, k_p = jax.random.split(key)

    N, C1, H, W = 2, 4, 16, 16
    C2 = 8
    scales = (1, 2, 3, 6)

    x = jax.random.normal(k_x, (N, C1, H, W), jnp.float32)
    params = init_params(k_p, C1, C2, scales)
    ops = prepare_ppm(params, H, W, scales)      # one-time setup (cached operators)

    out = ppm_forward(x, ops)
    out = jax.block_until_ready(out)
    assert out.shape == (N, C2, H, W)
    assert bool(jnp.all(jnp.isfinite(out)))

    ref = jax.block_until_ready(ppm_reference(x, params, scales))
    max_abs_err = float(jnp.max(jnp.abs(out - ref)))
    peak = float(jnp.max(jnp.abs(ref)))
    assert max_abs_err <= 0.05 * peak + 0.01, (
        f"kernel/reference mismatch: max_abs_err={max_abs_err}, peak={peak}")

    print("KERNEL_OK")
</pallas_src>

<mosaic_0001>
module attributes {stable_mosaic.version = 11 : i64} {
  func.func @kernel(%arg0: i32, %arg1: memref<1x4x256xbf16, #tpu.memory_space<vmem>>, %arg2: memref<256x50xf32, #tpu.memory_space<vmem>>, %arg3: memref<32x4xbf16, #tpu.memory_space<vmem>>, %arg4: memref<32x1xf32, #tpu.memory_space<vmem>>, %arg5: memref<32x50xf32, #tpu.memory_space<vmem>>, %arg6: memref<50x256xf32, #tpu.memory_space<vmem>>, %arg7: memref<72x4xbf16, #tpu.memory_space<vmem>>, %arg8: memref<72x32xbf16, #tpu.memory_space<vmem>>, %arg9: memref<8x1xf32, #tpu.memory_space<vmem>>, %arg10: memref<9x1x256xf32, #tpu.memory_space<vmem>>, %arg11: memref<1x8x256xf32, #tpu.memory_space<vmem>>) attributes {dimension_semantics = [#tpu.dimension_semantics<parallel>], iteration_bounds = array<i64: 2>, scalar_prefetch = 0 : i64, scratch_operands = 0 : i64, tpu.core_type = #tpu.core_type<tc>, window_params = [{transform_indices = @transform_0, window_bounds = array<i64: 1, 4, 256>}, {pipeline_mode = #tpu.pipeline_mode<synchronous>, transform_indices = @transform_1, window_bounds = array<i64: 256, 50>}, {pipeline_mode = #tpu.pipeline_mode<synchronous>, transform_indices = @transform_2, window_bounds = array<i64: 32, 4>}, {pipeline_mode = #tpu.pipeline_mode<synchronous>, transform_indices = @transform_3, window_bounds = array<i64: 32, 1>}, {pipeline_mode = #tpu.pipeline_mode<synchronous>, transform_indices = @transform_4, window_bounds = array<i64: 32, 50>}, {pipeline_mode = #tpu.pipeline_mode<synchronous>, transform_indices = @transform_5, window_bounds = array<i64: 50, 256>}, {pipeline_mode = #tpu.pipeline_mode<synchronous>, transform_indices = @transform_6, window_bounds = array<i64: 72, 4>}, {pipeline_mode = #tpu.pipeline_mode<synchronous>, transform_indices = @transform_7, window_bounds = array<i64: 72, 32>}, {pipeline_mode = #tpu.pipeline_mode<synchronous>, transform_indices = @transform_8, window_bounds = array<i64: 8, 1>}, {pipeline_mode = #tpu.pipeline_mode<synchronous>, transform_indices = @transform_9, window_bounds = array<i64: 9, 1, 256>}, {transform_indices = @transform_10, window_bounds = array<i64: 1, 8, 256>}]} {
    %c0 = arith.constant 0 : index
    %c0_0 = arith.constant 0 : index
    %c0_1 = arith.constant 0 : index
    %0 = vector.load %arg1[%c0, %c0_0, %c0_1] : memref<1x4x256xbf16, #tpu.memory_space<vmem>>, vector<1x4x256xbf16>
    %1 = vector.shape_cast %0 : vector<1x4x256xbf16> to vector<4x256xbf16>
    %2 = arith.extf %1 : vector<4x256xbf16> to vector<4x256xf32>
    %c0_2 = arith.constant 0 : index
    %c0_3 = arith.constant 0 : index
    %3 = vector.load %arg2[%c0_2, %c0_3] : memref<256x50xf32, #tpu.memory_space<vmem>>, vector<256x50xf32>
    %cst = arith.constant dense<0.000000e+00> : vector<4x50xf32>
    %4 = tpu.matmul %2, %3, %cst {dimension_numbers = #tpu.dot_dimension_numbers<[1], [0], [0], [1], [0, 0, 1, 1], [], []>} : vector<4x256xf32>, vector<256x50xf32>, vector<4x50xf32> -> vector<4x50xf32>
    %c0_4 = arith.constant 0 : index
    %c0_5 = arith.constant 0 : index
    %5 = vector.load %arg3[%c0_4, %c0_5] : memref<32x4xbf16, #tpu.memory_space<vmem>>, vector<32x4xbf16>
    %6 = arith.truncf %4 : vector<4x50xf32> to vector<4x50xbf16>
    %cst_6 = arith.constant dense<0.000000e+00> : vector<32x50xf32>
    %7 = tpu.matmul %5, %6, %cst_6 {dimension_numbers = #tpu.dot_dimension_numbers<[1], [0], [0], [1], [0, 0, 1, 1], [], []>} : vector<32x4xbf16>, vector<4x50xbf16>, vector<32x50xf32> -> vector<32x50xf32>
    %c0_7 = arith.constant 0 : index
    %c0_8 = arith.constant 0 : index
    %8 = vector.load %arg4[%c0_7, %c0_8] : memref<32x1xf32, #tpu.memory_space<vmem>>, vector<32x1xf32>
    %9 = vector.broadcast %8 : vector<32x1xf32> to vector<32x50xf32>
    %10 = arith.addf %7, %9 : vector<32x50xf32>
    %cst_9 = arith.constant 0.000000e+00 : f32
    %11 = vector.broadcast %cst_9 : f32 to vector<32x50xf32>
    %12 = arith.maximumf %10, %11 : vector<32x50xf32>
    %c0_10 = arith.constant 0 : index
    %c0_11 = arith.constant 0 : index
    %13 = vector.load %arg5[%c0_10, %c0_11] : memref<32x50xf32, #tpu.memory_space<vmem>>, vector<32x50xf32>
    %14 = arith.mulf %12, %13 : vector<32x50xf32>
    %c0_12 = arith.constant 0 : index
    %c0_13 = arith.constant 0 : index
    %15 = vector.load %arg6[%c0_12, %c0_13] : memref<50x256xf32, #tpu.memory_space<vmem>>, vector<50x256xf32>
    %cst_14 = arith.constant dense<0.000000e+00> : vector<32x256xf32>
    %16 = tpu.matmul %14, %15, %cst_14 {dimension_numbers = #tpu.dot_dimension_numbers<[1], [0], [0], [1], [0, 0, 1, 1], [], []>} : vector<32x50xf32>, vector<50x256xf32>, vector<32x256xf32> -> vector<32x256xf32>
    %17 = arith.truncf %16 : vector<32x256xf32> to vector<32x256xbf16>
    %c0_15 = arith.constant 0 : index
    %c0_16 = arith.constant 0 : index
    %18 = vector.load %arg7[%c0_15, %c0_16] : memref<72x4xbf16, #tpu.memory_space<vmem>>, vector<72x4xbf16>
    %cst_17 = arith.constant dense<0.000000e+00> : vector<72x256xf32>
    %19 = tpu.matmul %18, %1, %cst_17 {dimension_numbers = #tpu.dot_dimension_numbers<[1], [0], [0], [1], [0, 0, 1, 1], [], []>} : vector<72x4xbf16>, vector<4x256xbf16>, vector<72x256xf32> -> vector<72x256xf32>
    %c0_18 = arith.constant 0 : index
    %c0_19 = arith.constant 0 : index
    %20 = vector.load %arg8[%c0_18, %c0_19] : memref<72x32xbf16, #tpu.memory_space<vmem>>, vector<72x32xbf16>
    %cst_20 = arith.constant dense<0.000000e+00> : vector<72x256xf32>
    %21 = tpu.matmul %20, %17, %cst_20 {dimension_numbers = #tpu.dot_dimension_numbers<[1], [0], [0], [1], [0, 0, 1, 1], [], []>} : vector<72x32xbf16>, vector<32x256xbf16>, vector<72x256xf32> -> vector<72x256xf32>
    %22 = arith.addf %19, %21 : vector<72x256xf32>
    %23 = vector.extract_strided_slice %22 {offsets = [32, 0], sizes = [8, 256], strides = [1, 1]} : vector<72x256xf32> to vector<8x256xf32>
    %24 = vector.extract_strided_slice %22 {offsets = [0, 0], sizes = [8, 256], strides = [1, 1]} : vector<72x256xf32> to vector<8x256xf32>
    %c17_i32 = arith.constant 17 : i32
    %25 = tpu.dynamic_rotate %24 by %c17_i32 dim 1 : vector<8x256xf32>, i32 -> vector<8x256xf32>
    %c0_21 = arith.constant 0 : index
    %c0_22 = arith.constant 0 : index
    %c0_23 = arith.constant 0 : index
    %26 = vector.load %arg10[%c0_21, %c0_22, %c0_23] : memref<9x1x256xf32, #tpu.memory_space<vmem>>, vector<1x1x256xf32>
    %27 = vector.shape_cast %26 : vector<1x1x256xf32> to vector<1x256xf32>
    %28 = vector.broadcast %27 : vector<1x256xf32> to vector<8x256xf32>
    %29 = arith.mulf %25, %28 : vector<8x256xf32>
    %30 = arith.addf %23, %29 : vector<8x256xf32>
    %31 = vector.extract_strided_slice %22 {offsets = [8, 0], sizes = [8, 256], strides = [1, 1]} : vector<72x256xf32> to vector<8x256xf32>
    %c16_i32 = arith.constant 16 : i32
    %32 = tpu.dynamic_rotate %31 by %c16_i32 dim 1 : vector<8x256xf32>, i32 -> vector<8x256xf32>
    %c1 = arith.constant 1 : index
    %c0_24 = arith.constant 0 : index
    %c0_25 = arith.constant 0 : index
    %33 = vector.load %arg10[%c1, %c0_24, %c0_25] : memref<9x1x256xf32, #tpu.memory_space<vmem>>, vector<1x1x256xf32>
    %34 = vector.shape_cast %33 : vector<1x1x256xf32> to vector<1x256xf32>
    %35 = vector.broadcast %34 : vector<1x256xf32> to vector<8x256xf32>
    %36 = arith.mulf %32, %35 : vector<8x256xf32>
    %37 = arith.addf %30, %36 : vector<8x256xf32>
    %38 = vector.extract_strided_slice %22 {offsets = [16, 0], sizes = [8, 256], strides = [1, 1]} : vector<72x256xf32> to vector<8x256xf32>
    %c15_i32 = arith.constant 15 : i32
    %39 = tpu.dynamic_rotate %38 by %c15_i32 dim 1 : vector<8x256xf32>, i32 -> vector<8x256xf32>
    %c2 = arith.constant 2 : index
    %c0_26 = arith.constant 0 : index
    %c0_27 = arith.constant 0 : index
    %40 = vector.load %arg10[%c2, %c0_26, %c0_27] : memref<9x1x256xf32, #tpu.memory_space<vmem>>, vector<1x1x256xf32>
    %41 = vector.shape_cast %40 : vector<1x1x256xf32> to vector<1x256xf32>
    %42 = vector.broadcast %41 : vector<1x256xf32> to vector<8x256xf32>
    %43 = arith.mulf %39, %42 : vector<8x256xf32>
    %44 = arith.addf %37, %43 : vector<8x256xf32>
    %45 = vector.extract_strided_slice %22 {offsets = [24, 0], sizes = [8, 256], strides = [1, 1]} : vector<72x256xf32> to vector<8x256xf32>
    %c1_i32 = arith.constant 1 : i32
    %46 = tpu.dynamic_rotate %45 by %c1_i32 dim 1 : vector<8x256xf32>, i32 -> vector<8x256xf32>
    %c3 = arith.constant 3 : index
    %c0_28 = arith.constant 0 : index
    %c0_29 = arith.constant 0 : index
    %47 = vector.load %arg10[%c3, %c0_28, %c0_29] : memref<9x1x256xf32, #tpu.memory_space<vmem>>, vector<1x1x256xf32>
    %48 = vector.shape_cast %47 : vector<1x1x256xf32> to vector<1x256xf32>
    %49 = vector.broadcast %48 : vector<1x256xf32> to vector<8x256xf32>
    %50 = arith.mulf %46, %49 : vector<8x256xf32>
    %51 = arith.addf %44, %50 : vector<8x256xf32>
    %52 = vector.extract_strided_slice %22 {offsets = [40, 0], sizes = [8, 256], strides = [1, 1]} : vector<72x256xf32> to vector<8x256xf32>
    %c255_i32 = arith.constant 255 : i32
    %53 = tpu.dynamic_rotate %52 by %c255_i32 dim 1 : vector<8x256xf32>, i32 -> vector<8x256xf32>
    %c5 = arith.constant 5 : index
    %c0_30 = arith.constant 0 : index
    %c0_31 = arith.constant 0 : index
    %54 = vector.load %arg10[%c5, %c0_30, %c0_31] : memref<9x1x256xf32, #tpu.memory_space<vmem>>, vector<1x1x256xf32>
    %55 = vector.shape_cast %54 : vector<1x1x256xf32> to vector<1x256xf32>
    %56 = vector.broadcast %55 : vector<1x256xf32> to vector<8x256xf32>
    %57 = arith.mulf %53, %56 : vector<8x256xf32>
    %58 = arith.addf %51, %57 : vector<8x256xf32>
    %59 = vector.extract_strided_slice %22 {offsets = [48, 0], sizes = [8, 256], strides = [1, 1]} : vector<72x256xf32> to vector<8x256xf32>
    %c241_i32 = arith.constant 241 : i32
    %60 = tpu.dynamic_rotate %59 by %c241_i32 dim 1 : vector<8x256xf32>, i32 -> vector<8x256xf32>
    %c6 = arith.constant 6 : index
    %c0_32 = arith.constant 0 : index
    %c0_33 = arith.constant 0 : index
    %61 = vector.load %arg10[%c6, %c0_32, %c0_33] : memref<9x1x256xf32, #tpu.memory_space<vmem>>, vector<1x1x256xf32>
    %62 = vector.shape_cast %61 : vector<1x1x256xf32> to vector<1x256xf32>
    %63 = vector.broadcast %62 : vector<1x256xf32> to vector<8x256xf32>
    %64 = arith.mulf %60, %63 : vector<8x256xf32>
    %65 = arith.addf %58, %64 : vector<8x256xf32>
    %66 = vector.extract_strided_slice %22 {offsets = [56, 0], sizes = [8, 256], strides = [1, 1]} : vector<72x256xf32> to vector<8x256xf32>
    %c240_i32 = arith.constant 240 : i32
    %67 = tpu.dynamic_rotate %66 by %c240_i32 dim 1 : vector<8x256xf32>, i32 -> vector<8x256xf32>
    %c7 = arith.constant 7 : index
    %c0_34 = arith.constant 0 : index
    %c0_35 = arith.constant 0 : index
    %68 = vector.load %arg10[%c7, %c0_34, %c0_35] : memref<9x1x256xf32, #tpu.memory_space<vmem>>, vector<1x1x256xf32>
    %69 = vector.shape_cast %68 : vector<1x1x256xf32> to vector<1x256xf32>
    %70 = vector.broadcast %69 : vector<1x256xf32> to vector<8x256xf32>
    %71 = arith.mulf %67, %70 : vector<8x256xf32>
    %72 = arith.addf %65, %71 : vector<8x256xf32>
    %73 = vector.extract_strided_slice %22 {offsets = [64, 0], sizes = [8, 256], strides = [1, 1]} : vector<72x256xf32> to vector<8x256xf32>
    %c239_i32 = arith.constant 239 : i32
    %74 = tpu.dynamic_rotate %73 by %c239_i32 dim 1 : vector<8x256xf32>, i32 -> vector<8x256xf32>
    %c8 = arith.constant 8 : index
    %c0_36 = arith.constant 0 : index
    %c0_37 = arith.constant 0 : index
    %75 = vector.load %arg10[%c8, %c0_36, %c0_37] : memref<9x1x256xf32, #tpu.memory_space<vmem>>, vector<1x1x256xf32>
    %76 = vector.shape_cast %75 : vector<1x1x256xf32> to vector<1x256xf32>
    %77 = vector.broadcast %76 : vector<1x256xf32> to vector<8x256xf32>
    %78 = arith.mulf %74, %77 : vector<8x256xf32>
    %79 = arith.addf %72, %78 : vector<8x256xf32>
    %c0_38 = arith.constant 0 : index
    %c0_39 = arith.constant 0 : index
    %80 = vector.load %arg9[%c0_38, %c0_39] : memref<8x1xf32, #tpu.memory_space<vmem>>, vector<8x1xf32>
    %81 = vector.broadcast %80 : vector<8x1xf32> to vector<8x256xf32>
    %82 = arith.addf %79, %81 : vector<8x256xf32>
    %cst_40 = arith.constant 0.000000e+00 : f32
    %83 = vector.broadcast %cst_40 : f32 to vector<8x256xf32>
    %84 = arith.maximumf %82, %83 : vector<8x256xf32>
    %c0_41 = arith.constant 0 : index
    %c0_42 = arith.constant 0 : index
    %c0_43 = arith.constant 0 : index
    %85 = vector.load %arg11[%c0_41, %c0_42, %c0_43] : memref<1x8x256xf32, #tpu.memory_space<vmem>>, vector<1x8x256xf32>
    %86 = vector.shape_cast %85 : vector<1x8x256xf32> to vector<8x256xf32>
    %87 = vector.shape_cast %84 : vector<8x256xf32> to vector<1x8x256xf32>
    tpu.vector_store %arg11[%c0_41, %c0_42, %c0_43], %87 {strides = array<i32>} : memref<1x8x256xf32, #tpu.memory_space<vmem>>, vector<1x8x256xf32>,
    return
  }
  func.func @transform_0(%arg0: i32) -> (i32, i32, i32) {
    %c0_i32 = arith.constant 0 : i32
    %c0_i32_0 = arith.constant 0 : i32
    %c0_i32_1 = arith.constant 0 : i32
    return %arg0, %c0_i32, %c0_i32_0 : i32, i32, i32
  }
  func.func @transform_1(%arg0: i32) -> (i32, i32) {
    %c0_i32 = arith.constant 0 : i32
    %c0_i32_0 = arith.constant 0 : i32
    %c0_i32_1 = arith.constant 0 : i32
    return %c0_i32, %c0_i32_0 : i32, i32
  }
  func.func @transform_2(%arg0: i32) -> (i32, i32) {
    %c0_i32 = arith.constant 0 : i32
    %c0_i32_0 = arith.constant 0 : i32
    %c0_i32_1 = arith.constant 0 : i32
    return %c0_i32, %c0_i32_0 : i32, i32
  }
  func.func @transform_3(%arg0: i32) -> (i32, i32) {
    %c0_i32 = arith.constant 0 : i32
    %c0_i32_0 = arith.constant 0 : i32
    %c0_i32_1 = arith.constant 0 : i32
    return %c0_i32, %c0_i32_0 : i32, i32
  }
  func.func @transform_4(%arg0: i32) -> (i32, i32) {
    %c0_i32 = arith.constant 0 : i32
    %c0_i32_0 = arith.constant 0 : i32
    %c0_i32_1 = arith.constant 0 : i32
    return %c0_i32, %c0_i32_0 : i32, i32
  }
  func.func @transform_5(%arg0: i32) -> (i32, i32) {
    %c0_i32 = arith.constant 0 : i32
    %c0_i32_0 = arith.constant 0 : i32
    %c0_i32_1 = arith.constant 0 : i32
    return %c0_i32, %c0_i32_0 : i32, i32
  }
  func.func @transform_6(%arg0: i32) -> (i32, i32) {
    %c0_i32 = arith.constant 0 : i32
    %c0_i32_0 = arith.constant 0 : i32
    %c0_i32_1 = arith.constant 0 : i32
    return %c0_i32, %c0_i32_0 : i32, i32
  }
  func.func @transform_7(%arg0: i32) -> (i32, i32) {
    %c0_i32 = arith.constant 0 : i32
    %c0_i32_0 = arith.constant 0 : i32
    %c0_i32_1 = arith.constant 0 : i32
    return %c0_i32, %c0_i32_0 : i32, i32
  }
  func.func @transform_8(%arg0: i32) -> (i32, i32) {
    %c0_i32 = arith.constant 0 : i32
    %c0_i32_0 = arith.constant 0 : i32
    %c0_i32_1 = arith.constant 0 : i32
    return %c0_i32, %c0_i32_0 : i32, i32
  }
  func.func @transform_9(%arg0: i32) -> (i32, i32, i32) {
    %c0_i32 = arith.constant 0 : i32
    %c0_i32_0 = arith.constant 0 : i32
    %c0_i32_1 = arith.constant 0 : i32
    %c0_i32_2 = arith.constant 0 : i32
    return %c0_i32, %c0_i32_0, %c0_i32_1 : i32, i32, i32
  }
  func.func @transform_10(%arg0: i32) -> (i32, i32, i32) {
    %c0_i32 = arith.constant 0 : i32
    %c0_i32_0 = arith.constant 0 : i32
    %c0_i32_1 = arith.constant 0 : i32
    return %arg0, %c0_i32, %c0_i32_0 : i32, i32, i32
  }
}

module attributes {stable_mosaic.version = 11 : i64} {
  func.func @kernel(%arg0: i32, %arg1: memref<1x4x256xbf16, #tpu.memory_space<vmem>>, %arg2: memref<256x50xf32, #tpu.memory_space<vmem>>, %arg3: memref<32x4xbf16, #tpu.memory_space<vmem>>, %arg4: memref<32x1xf32, #tpu.memory_space<vmem>>, %arg5: memref<32x50xf32, #tpu.memory_space<vmem>>, %arg6: memref<50x256xf32, #tpu.memory_space<vmem>>, %arg7: memref<72x4xbf16, #tpu.memory_space<vmem>>, %arg8: memref<72x32xbf16, #tpu.memory_space<vmem>>, %arg9: memref<8x1xf32, #tpu.memory_space<vmem>>, %arg10: memref<9x1x256xf32, #tpu.memory_space<vmem>>, %arg11: memref<1x8x256xf32, #tpu.memory_space<vmem>>) attributes {dimension_semantics = [#tpu.dimension_semantics<parallel>], iteration_bounds = array<i64: 2>, scalar_prefetch = 0 : i64, scratch_operands = 0 : i64, tpu.core_type = #tpu.core_type<tc>, window_params = [{transform_indices = @transform_0, window_bounds = array<i64: 1, 4, 256>}, {pipeline_mode = #tpu.pipeline_mode<synchronous>, transform_indices = @transform_1, window_bounds = array<i64: 256, 50>}, {pipeline_mode = #tpu.pipeline_mode<synchronous>, transform_indices = @transform_2, window_bounds = array<i64: 32, 4>}, {pipeline_mode = #tpu.pipeline_mode<synchronous>, transform_indices = @transform_3, window_bounds = array<i64: 32, 1>}, {pipeline_mode = #tpu.pipeline_mode<synchronous>, transform_indices = @transform_4, window_bounds = array<i64: 32, 50>}, {pipeline_mode = #tpu.pipeline_mode<synchronous>, transform_indices = @transform_5, window_bounds = array<i64: 50, 256>}, {pipeline_mode = #tpu.pipeline_mode<synchronous>, transform_indices = @transform_6, window_bounds = array<i64: 72, 4>}, {pipeline_mode = #tpu.pipeline_mode<synchronous>, transform_indices = @transform_7, window_bounds = array<i64: 72, 32>}, {pipeline_mode = #tpu.pipeline_mode<synchronous>, transform_indices = @transform_8, window_bounds = array<i64: 8, 1>}, {pipeline_mode = #tpu.pipeline_mode<synchronous>, transform_indices = @transform_9, window_bounds = array<i64: 9, 1, 256>}, {transform_indices = @transform_10, window_bounds = array<i64: 1, 8, 256>}]} {
    %c0 = arith.constant 0 : index
    %c0_0 = arith.constant 0 : index
    %c0_1 = arith.constant 0 : index
    %0 = vector.load %arg1[%c0, %c0_0, %c0_1] : memref<1x4x256xbf16, #tpu.memory_space<vmem>>, vector<1x4x256xbf16>
    %1 = vector.shape_cast %0 : vector<1x4x256xbf16> to vector<4x256xbf16>
    %2 = arith.extf %1 : vector<4x256xbf16> to vector<4x256xf32>
    %c0_2 = arith.constant 0 : index
    %c0_3 = arith.constant 0 : index
    %3 = vector.load %arg2[%c0_2, %c0_3] : memref<256x50xf32, #tpu.memory_space<vmem>>, vector<256x50xf32>
    %cst = arith.constant dense<0.000000e+00> : vector<4x50xf32>
    %4 = tpu.matmul %2, %3, %cst {dimension_numbers = #tpu.dot_dimension_numbers<[1], [0], [0], [1], [0, 0, 1, 1], [], []>} : vector<4x256xf32>, vector<256x50xf32>, vector<4x50xf32> -> vector<4x50xf32>
    %c0_4 = arith.constant 0 : index
    %c0_5 = arith.constant 0 : index
    %5 = vector.load %arg3[%c0_4, %c0_5] : memref<32x4xbf16, #tpu.memory_space<vmem>>, vector<32x4xbf16>
    %6 = arith.truncf %4 : vector<4x50xf32> to vector<4x50xbf16>
    %cst_6 = arith.constant dense<0.000000e+00> : vector<32x50xf32>
    %7 = tpu.matmul %5, %6, %cst_6 {dimension_numbers = #tpu.dot_dimension_numbers<[1], [0], [0], [1], [0, 0, 1, 1], [], []>} : vector<32x4xbf16>, vector<4x50xbf16>, vector<32x50xf32> -> vector<32x50xf32>
    %c0_7 = arith.constant 0 : index
    %c0_8 = arith.constant 0 : index
    %8 = vector.load %arg4[%c0_7, %c0_8] : memref<32x1xf32, #tpu.memory_space<vmem>>, vector<32x1xf32>
    %9 = vector.broadcast %8 : vector<32x1xf32> to vector<32x50xf32>
    %10 = arith.addf %7, %9 : vector<32x50xf32>
    %cst_9 = arith.constant 0.000000e+00 : f32
    %11 = vector.broadcast %cst_9 : f32 to vector<32x50xf32>
    %12 = arith.maximumf %10, %11 : vector<32x50xf32>
    %c0_10 = arith.constant 0 : index
    %c0_11 = arith.constant 0 : index
    %13 = vector.load %arg5[%c0_10, %c0_11] : memref<32x50xf32, #tpu.memory_space<vmem>>, vector<32x50xf32>
    %14 = arith.mulf %12, %13 : vector<32x50xf32>
    %c0_12 = arith.constant 0 : index
    %c0_13 = arith.constant 0 : index
    %15 = vector.load %arg6[%c0_12, %c0_13] : memref<50x256xf32, #tpu.memory_space<vmem>>, vector<50x256xf32>
    %cst_14 = arith.constant dense<0.000000e+00> : vector<32x256xf32>
    %16 = tpu.matmul %14, %15, %cst_14 {dimension_numbers = #tpu.dot_dimension_numbers<[1], [0], [0], [1], [0, 0, 1, 1], [], []>} : vector<32x50xf32>, vector<50x256xf32>, vector<32x256xf32> -> vector<32x256xf32>
    %17 = arith.truncf %16 : vector<32x256xf32> to vector<32x256xbf16>
    %c0_15 = arith.constant 0 : index
    %c0_16 = arith.constant 0 : index
    %18 = vector.load %arg7[%c0_15, %c0_16] : memref<72x4xbf16, #tpu.memory_space<vmem>>, vector<72x4xbf16>
    %cst_17 = arith.constant dense<0.000000e+00> : vector<72x256xf32>
    %19 = tpu.matmul %18, %1, %cst_17 {dimension_numbers = #tpu.dot_dimension_numbers<[1], [0], [0], [1], [0, 0, 1, 1], [], []>} : vector<72x4xbf16>, vector<4x256xbf16>, vector<72x256xf32> -> vector<72x256xf32>
    %c0_18 = arith.constant 0 : index
    %c0_19 = arith.constant 0 : index
    %20 = vector.load %arg8[%c0_18, %c0_19] : memref<72x32xbf16, #tpu.memory_space<vmem>>, vector<72x32xbf16>
    %cst_20 = arith.constant dense<0.000000e+00> : vector<72x256xf32>
    %21 = tpu.matmul %20, %17, %cst_20 {dimension_numbers = #tpu.dot_dimension_numbers<[1], [0], [0], [1], [0, 0, 1, 1], [], []>} : vector<72x32xbf16>, vector<32x256xbf16>, vector<72x256xf32> -> vector<72x256xf32>
    %22 = arith.addf %19, %21 : vector<72x256xf32>
    %23 = vector.extract_strided_slice %22 {offsets = [32, 0], sizes = [8, 256], strides = [1, 1]} : vector<72x256xf32> to vector<8x256xf32>
    %24 = vector.extract_strided_slice %22 {offsets = [0, 0], sizes = [8, 256], strides = [1, 1]} : vector<72x256xf32> to vector<8x256xf32>
    %c17_i32 = arith.constant 17 : i32
    %25 = tpu.dynamic_rotate %24 by %c17_i32 dim 1 : vector<8x256xf32>, i32 -> vector<8x256xf32>
    %c0_21 = arith.constant 0 : index
    %c0_22 = arith.constant 0 : index
    %c0_23 = arith.constant 0 : index
    %26 = vector.load %arg10[%c0_21, %c0_22, %c0_23] : memref<9x1x256xf32, #tpu.memory_space<vmem>>, vector<1x1x256xf32>
    %27 = vector.shape_cast %26 : vector<1x1x256xf32> to vector<1x256xf32>
    %28 = vector.broadcast %27 : vector<1x256xf32> to vector<8x256xf32>
    %29 = arith.mulf %25, %28 : vector<8x256xf32>
    %30 = arith.addf %23, %29 : vector<8x256xf32>
    %31 = vector.extract_strided_slice %22 {offsets = [8, 0], sizes = [8, 256], strides = [1, 1]} : vector<72x256xf32> to vector<8x256xf32>
    %c16_i32 = arith.constant 16 : i32
    %32 = tpu.dynamic_rotate %31 by %c16_i32 dim 1 : vector<8x256xf32>, i32 -> vector<8x256xf32>
    %c1 = arith.constant 1 : index
    %c0_24 = arith.constant 0 : index
    %c0_25 = arith.constant 0 : index
    %33 = vector.load %arg10[%c1, %c0_24, %c0_25] : memref<9x1x256xf32, #tpu.memory_space<vmem>>, vector<1x1x256xf32>
    %34 = vector.shape_cast %33 : vector<1x1x256xf32> to vector<1x256xf32>
    %35 = vector.broadcast %34 : vector<1x256xf32> to vector<8x256xf32>
    %36 = arith.mulf %32, %35 : vector<8x256xf32>
    %37 = arith.addf %30, %36 : vector<8x256xf32>
    %38 = vector.extract_strided_slice %22 {offsets = [16, 0], sizes = [8, 256], strides = [1, 1]} : vector<72x256xf32> to vector<8x256xf32>
    %c15_i32 = arith.constant 15 : i32
    %39 = tpu.dynamic_rotate %38 by %c15_i32 dim 1 : vector<8x256xf32>, i32 -> vector<8x256xf32>
    %c2 = arith.constant 2 : index
    %c0_26 = arith.constant 0 : index
    %c0_27 = arith.constant 0 : index
    %40 = vector.load %arg10[%c2, %c0_26, %c0_27] : memref<9x1x256xf32, #tpu.memory_space<vmem>>, vector<1x1x256xf32>
    %41 = vector.shape_cast %40 : vector<1x1x256xf32> to vector<1x256xf32>
    %42 = vector.broadcast %41 : vector<1x256xf32> to vector<8x256xf32>
    %43 = arith.mulf %39, %42 : vector<8x256xf32>
    %44 = arith.addf %37, %43 : vector<8x256xf32>
    %45 = vector.extract_strided_slice %22 {offsets = [24, 0], sizes = [8, 256], strides = [1, 1]} : vector<72x256xf32> to vector<8x256xf32>
    %c1_i32 = arith.constant 1 : i32
    %46 = tpu.dynamic_rotate %45 by %c1_i32 dim 1 : vector<8x256xf32>, i32 -> vector<8x256xf32>
    %c3 = arith.constant 3 : index
    %c0_28 = arith.constant 0 : index
    %c0_29 = arith.constant 0 : index
    %47 = vector.load %arg10[%c3, %c0_28, %c0_29] : memref<9x1x256xf32, #tpu.memory_space<vmem>>, vector<1x1x256xf32>
    %48 = vector.shape_cast %47 : vector<1x1x256xf32> to vector<1x256xf32>
    %49 = vector.broadcast %48 : vector<1x256xf32> to vector<8x256xf32>
    %50 = arith.mulf %46, %49 : vector<8x256xf32>
    %51 = arith.addf %44, %50 : vector<8x256xf32>
    %52 = vector.extract_strided_slice %22 {offsets = [40, 0], sizes = [8, 256], strides = [1, 1]} : vector<72x256xf32> to vector<8x256xf32>
    %c255_i32 = arith.constant 255 : i32
    %53 = tpu.dynamic_rotate %52 by %c255_i32 dim 1 : vector<8x256xf32>, i32 -> vector<8x256xf32>
    %c5 = arith.constant 5 : index
    %c0_30 = arith.constant 0 : index
    %c0_31 = arith.constant 0 : index
    %54 = vector.load %arg10[%c5, %c0_30, %c0_31] : memref<9x1x256xf32, #tpu.memory_space<vmem>>, vector<1x1x256xf32>
    %55 = vector.shape_cast %54 : vector<1x1x256xf32> to vector<1x256xf32>
    %56 = vector.broadcast %55 : vector<1x256xf32> to vector<8x256xf32>
    %57 = arith.mulf %53, %56 : vector<8x256xf32>
    %58 = arith.addf %51, %57 : vector<8x256xf32>
    %59 = vector.extract_strided_slice %22 {offsets = [48, 0], sizes = [8, 256], strides = [1, 1]} : vector<72x256xf32> to vector<8x256xf32>
    %c241_i32 = arith.constant 241 : i32
    %60 = tpu.dynamic_rotate %59 by %c241_i32 dim 1 : vector<8x256xf32>, i32 -> vector<8x256xf32>
    %c6 = arith.constant 6 : index
    %c0_32 = arith.constant 0 : index
    %c0_33 = arith.constant 0 : index
    %61 = vector.load %arg10[%c6, %c0_32, %c0_33] : memref<9x1x256xf32, #tpu.memory_space<vmem>>, vector<1x1x256xf32>
    %62 = vector.shape_cast %61 : vector<1x1x256xf32> to vector<1x256xf32>
    %63 = vector.broadcast %62 : vector<1x256xf32> to vector<8x256xf32>
    %64 = arith.mulf %60, %63 : vector<8x256xf32>
    %65 = arith.addf %58, %64 : vector<8x256xf32>
    %66 = vector.extract_strided_slice %22 {offsets = [56, 0], sizes = [8, 256], strides = [1, 1]} : vector<72x256xf32> to vector<8x256xf32>
    %c240_i32 = arith.constant 240 : i32
    %67 = tpu.dynamic_rotate %66 by %c240_i32 dim 1 : vector<8x256xf32>, i32 -> vector<8x256xf32>
    %c7 = arith.constant 7 : index
    %c0_34 = arith.constant 0 : index
    %c0_35 = arith.constant 0 : index
    %68 = vector.load %arg10[%c7, %c0_34, %c0_35] : memref<9x1x256xf32, #tpu.memory_space<vmem>>, vector<1x1x256xf32>
    %69 = vector.shape_cast %68 : vector<1x1x256xf32> to vector<1x256xf32>
    %70 = vector.broadcast %69 : vector<1x256xf32> to vector<8x256xf32>
    %71 = arith.mulf %67, %70 : vector<8x256xf32>
    %72 = arith.addf %65, %71 : vector<8x256xf32>
    %73 = vector.extract_strided_slice %22 {offsets = [64, 0], sizes = [8, 256], strides = [1, 1]} : vector<72x256xf32> to vector<8x256xf32>
    %c239_i32 = arith.constant 239 : i32
    %74 = tpu.dynamic_rotate %73 by %c239_i32 dim 1 : vector<8x256xf32>, i32 -> vector<8x256xf32>
    %c8 = arith.constant 8 : index
    %c0_36 = arith.constant 0 : index
    %c0_37 = arith.constant 0 : index
    %75 = vector.load %arg10[%c8, %c0_36, %c0_37] : memref<9x1x256xf32, #tpu.memory_space<vmem>>, vector<1x1x256xf32>
    %76 = vector.shape_cast %75 : vector<1x1x256xf32> to vector<1x256xf32>
    %77 = vector.broadcast %76 : vector<1x256xf32> to vector<8x256xf32>
    %78 = arith.mulf %74, %77 : vector<8x256xf32>
    %79 = arith.addf %72, %78 : vector<8x256xf32>
    %c0_38 = arith.constant 0 : index
    %c0_39 = arith.constant 0 : index
    %80 = vector.load %arg9[%c0_38, %c0_39] : memref<8x1xf32, #tpu.memory_space<vmem>>, vector<8x1xf32>
    %81 = vector.broadcast %80 : vector<8x1xf32> to vector<8x256xf32>
    %82 = arith.addf %79, %81 : vector<8x256xf32>
    %cst_40 = arith.constant 0.000000e+00 : f32
    %83 = vector.broadcast %cst_40 : f32 to vector<8x256xf32>
    %84 = arith.maximumf %82, %83 : vector<8x256xf32>
    %c0_41 = arith.constant 0 : index
    %c0_42 = arith.constant 0 : index
    %c0_43 = arith.constant 0 : index
    %85 = vector.load %arg11[%c0_41, %c0_42, %c0_43] : memref<1x8x256xf32, #tpu.memory_space<vmem>>, vector<1x8x256xf32>
    %86 = vector.shape_cast %85 : vector<1x8x256xf32> to vector<8x256xf32>
    %87 = vector.shape_cast %84 : vector<8x256xf32> to vector<1x8x256xf32>
    tpu.vector_store %arg11[%c0_41, %c0_42, %c0_43], %87 {strides = array<i32>} : memref<1x8x256xf32, #tpu.memory_space<vmem>>, vector<1x8x256xf32>,
    return
  }
  func.func @transform_0(%arg0: i32) -> (i32, i32, i32) {
    %c0_i32 = arith.constant 0 : i32
    %c0_i32_0 = arith.constant 0 : i32
    %c0_i32_1 = arith.constant 0 : i32
    return %arg0, %c0_i32, %c0_i32_0 : i32, i32, i32
  }
  func.func @transform_1(%arg0: i32) -> (i32, i32) {
    %c0_i32 = arith.constant 0 : i32
    %c0_i32_0 = arith.constant 0 : i32
    %c0_i32_1 = arith.constant 0 : i32
    return %c0_i32, %c0_i32_0 : i32, i32
  }
  func.func @transform_2(%arg0: i32) -> (i32, i32) {
    %c0_i32 = arith.constant 0 : i32
    %c0_i32_0 = arith.constant 0 : i32
    %c0_i32_1 = arith.constant 0 : i32
    return %c0_i32, %c0_i32_0 : i32, i32
  }
  func.func @transform_3(%arg0: i32) -> (i32, i32) {
    %c0_i32 = arith.constant 0 : i32
    %c0_i32_0 = arith.constant 0 : i32
    %c0_i32_1 = arith.constant 0 : i32
    return %c0_i32, %c0_i32_0 : i32, i32
  }
  func.func @transform_4(%arg0: i32) -> (i32, i32) {
    %c0_i32 = arith.constant 0 : i32
    %c0_i32_0 = arith.constant 0 : i32
    %c0_i32_1 = arith.constant 0 : i32
    return %c0_i32, %c0_i32_0 : i32, i32
  }
  func.func @transform_5(%arg0: i32) -> (i32, i32) {
    %c0_i32 = arith.constant 0 : i32
    %c0_i32_0 = arith.constant 0 : i32
    %c0_i32_1 = arith.constant 0 : i32
    return %c0_i32, %c0_i32_0 : i32, i32
  }
  func.func @transform_6(%arg0: i32) -> (i32, i32) {
    %c0_i32 = arith.constant 0 : i32
    %c0_i32_0 = arith.constant 0 : i32
    %c0_i32_1 = arith.constant 0 : i32
    return %c0_i32, %c0_i32_0 : i32, i32
  }
  func.func @transform_7(%arg0: i32) -> (i32, i32) {
    %c0_i32 = arith.constant 0 : i32
    %c0_i32_0 = arith.constant 0 : i32
    %c0_i32_1 = arith.constant 0 : i32
    return %c0_i32, %c0_i32_0 : i32, i32
  }
  func.func @transform_8(%arg0: i32) -> (i32, i32) {
    %c0_i32 = arith.constant 0 : i32
    %c0_i32_0 = arith.constant 0 : i32
    %c0_i32_1 = arith.constant 0 : i32
    return %c0_i32, %c0_i32_0 : i32, i32
  }
  func.func @transform_9(%arg0: i32) -> (i32, i32, i32) {
    %c0_i32 = arith.constant 0 : i32
    %c0_i32_0 = arith.constant 0 : i32
    %c0_i32_1 = arith.constant 0 : i32
    %c0_i32_2 = arith.constant 0 : i32
    return %c0_i32, %c0_i32_0, %c0_i32_1 : i32, i32, i32
  }
  func.func @transform_10(%arg0: i32) -> (i32, i32, i32) {
    %c0_i32 = arith.constant 0 : i32
    %c0_i32_0 = arith.constant 0 : i32
    %c0_i32_1 = arith.constant 0 : i32
    return %arg0, %c0_i32, %c0_i32_0 : i32, i32, i32
  }
}

</mosaic_0001>

<llo_original>
// kernel: tpu_custom_call.1
$region0: #{tpu_custom_call.1}
  #allocation0 [shape = 'u32[]', space=smem, size = 0x4, offset = 0x4, fixed_abs, tag = 'smem constant byte address 0x4 - core index']
  #allocation1 [shape = 'u32[144,128]{1,0:T(1,128)}', space=vmem, size = 0x12000, scoped, tag = 'internal scratch']
  %s0 = inlined_call_operand.hbm [shape: bf16[2,4,256], index: 0, kind: input, shape index: {}]
  %s1 = inlined_call_operand.hbm [shape: f32[256,50], index: 1, kind: input, shape index: {}]
  %s2 = inlined_call_operand.hbm [shape: bf16[32,4], index: 2, kind: input, shape index: {}]
  %s3 = inlined_call_operand.hbm [shape: f32[32,1], index: 3, kind: input, shape index: {}]
  %s4 = inlined_call_operand.hbm [shape: f32[32,50], index: 4, kind: input, shape index: {}]
  %s5 = inlined_call_operand.hbm [shape: f32[50,256], index: 5, kind: input, shape index: {}]
  %s6 = inlined_call_operand.hbm [shape: bf16[72,4], index: 6, kind: input, shape index: {}]
  %s7 = inlined_call_operand.hbm [shape: bf16[72,32], index: 7, kind: input, shape index: {}]
  %s8 = inlined_call_operand.hbm [shape: f32[8,1], index: 8, kind: input, shape index: {}]
  %s9 = inlined_call_operand.hbm [shape: f32[9,1,256], index: 9, kind: input, shape index: {}]
  %s10 = inlined_call_operand.hbm [shape: f32[2,8,256], index: 10, kind: output, shape index: {}]
  %s11 = sld [smem:[#allocation0]]
  $region113: #{tpu_custom_call.1} parent=0
    _
  %s13 = ssub.s32 1, %s11
  %s14 = scalar_select 0, %s13, %s11
  $region1: #{tpu_custom_call.1} parent=0
    #allocation2 [shape = 'u8[4096]{0}', space=vmem, size = 0x1000, scoped, tag = 'input window, operand 0']
    #allocation3 [shape = 's32[2]{0}', space=sflag, size = 0x8, scoped, tag = 'scoped memory for tpu_custom_call.1']
    #allocation4 [shape = 's32[2]{0}', space=sflag, size = 0x8, scoped, tag = 'scoped memory for tpu_custom_call.1']
    #allocation5 [shape = 'u8[131072]{0}', space=vmem, size = 0x20000, scoped, tag = 'input window, operand 1, single buffered']
    #allocation6 [shape = 's32[1]{0}', space=sflag, size = 0x4, scoped, tag = 'scoped memory for tpu_custom_call.1']
    #allocation7 [shape = 'u8[8192]{0}', space=vmem, size = 0x2000, scoped, tag = 'input window, operand 2, single buffered']
    #allocation8 [shape = 'u8[16384]{0}', space=vmem, size = 0x4000, scoped, tag = 'input window, operand 3, single buffered']
    #allocation9 [shape = 's32[1]{0}', space=sflag, size = 0x4, scoped, tag = 'scoped memory for tpu_custom_call.1']
    #allocation10 [shape = 'u8[16384]{0}', space=vmem, size = 0x4000, scoped, tag = 'input window, operand 4, single buffered']
    #allocation11 [shape = 'u8[57344]{0}', space=vmem, size = 0xe000, scoped, tag = 'input window, operand 5, single buffered']
    #allocation12 [shape = 's32[1]{0}', space=sflag, size = 0x4, scoped, tag = 'scoped memory for tpu_custom_call.1']
    #allocation13 [shape = 'u8[18432]{0}', space=vmem, size = 0x4800, scoped, tag = 'input window, operand 6, single buffered']
    #allocation14 [shape = 'u8[18432]{0}', space=vmem, size = 0x4800, scoped, tag = 'input window, operand 7, single buffered']
    #allocation15 [shape = 's32[1]{0}', space=sflag, size = 0x4, scoped, tag = 'scoped memory for tpu_custom_call.1']
    #allocation16 [shape = 'u8[4096]{0}', space=vmem, size = 0x1000, scoped, tag = 'input window, operand 8, single buffered']
    #allocation17 [shape = 'u8[9216]{0}', space=vmem, size = 0x2400, scoped, tag = 'input window, operand 9, single buffered']
    #allocation18 [shape = 's32[1]{0}', space=sflag, size = 0x4, scoped, tag = 'scoped memory for tpu_custom_call.1']
    #allocation19 [shape = 'u8[16384]{0}', space=vmem, size = 0x4000, scoped, tag = 'output window, operand 0']
    %15 = vsyncpa [#allocation3], 0
    %s16 = scalar_lea.sflag [#allocation3], 1
    %17 = vsyncpa %s16, 0
    %18 = vsyncpa [#allocation6], 0
    %19 = vsyncpa [#allocation9], 0
    %20 = vsyncpa [#allocation12], 0
    %21 = vsyncpa [#allocation15], 0
    %22 = vsyncpa [#allocation18], 0
    %23 = vsyncpa [#allocation4], 0
    %s24 = scalar_lea.sflag [#allocation4], 1
    %25 = vsyncpa %s24, 0
    loop: start=0, step=1, limit=4
    $region2: #{tpu_custom_call.1} parent=1 // loop_pre_header
      _
    $region3: #{tpu_custom_call.1} parent=1 // loop_header
      %s27 = sphi 0, %s31
      %p28 = scmp.ge.s32.totalorder %s27, 4
      %s37 = sphi 0, %s39
      %s40 = sphi 0, %s37
      %s41 = sphi 0, %s40
      %s57 = sphi 0, %s41
      %s61 = sphi 0, %s61
      %s63 = sphi 0, %s61
      %s64 = sphi 0, %s63
      %s78 = sphi 0, %s64
      %s82 = sphi 0, %s82
      %s84 = sphi 0, %s82
      %s85 = sphi 0, %s84
      %s99 = sphi 0, %s85
      %s103 = sphi 0, %s103
      %s105 = sphi 0, %s103
      %s106 = sphi 0, %s105
      %s120 = sphi 0, %s106
      %s124 = sphi 0, %s124
      %s126 = sphi 0, %s124
      %s127 = sphi 0, %s126
      %s141 = sphi 0, %s127
      %s145 = sphi 0, %s145
      %s147 = sphi 0, %s145
      %s148 = sphi 0, %s147
      %s162 = sphi 0, %s148
      %s166 = sphi 0, %s166
      %s168 = sphi 0, %s166
      %s169 = sphi 0, %s168
      %s183 = sphi 0, %s169
      %s187 = sphi 0, %s187
      %s189 = sphi 0, %s187
      %s190 = sphi 0, %s189
      %s204 = sphi 0, %s190
      %s208 = sphi 0, %s208
      %s210 = sphi 0, %s208
      %s211 = sphi 0, %s210
      %s225 = sphi 0, %s211
      %s229 = sphi 0, %s229
      %s231 = sphi 0, %s229
      %s232 = sphi 0, %s231
      %s246 = sphi 0, %s232
      %s252 = sphi 0, %s254
      %s255 = sphi 0, %s252
      %s256 = sphi 0, %s255
      %s272 = sphi 0, %s256
    $region4: #{tpu_custom_call.1} parent=1 // loop_header_branch
      %30 = sbr.rel (%p28) target = $region8
    $region5: #{tpu_custom_call.1} parent=1 // loop_body
      %s32 = ssub.s32 %s27, 1
      %s33 = ssub.s32 %s27, 2
      %s34 = sadd.s32 %s27, 1
      %s35 = ssub.s32 %s27, %s34
      %p36 = scmp.eq.s32.totalorder %s35, 0
      %s38 = sadd.s32 %s37, 1
      %s39 = scalar_select %p36, %s37, %s38
      %p42 = pneg %p36
      %p43 = scmp.eq.s32.totalorder %s27, 1
      %p44 = por %p42, %p43
      %p45 = scmp.ne.s32.totalorder %s37, %s40
      %p46 = scmp.eq.s32.totalorder %s27, 0
      %p47 = por %p45, %p46
      %p48 = scmp.ne.s32.totalorder %s37, %s40
      %p49 = scmp.eq.s32.totalorder %s32, 1
      %p50 = por %p48, %p49
      %p51 = scmp.ne.s32.totalorder %s40, %s41
      %p52 = scmp.eq.s32.totalorder %s32, 0
      %p53 = por %p51, %p52
      %p54 = scmp.ne.s32.totalorder %s40, %s41
      %p55 = scmp.eq.s32.totalorder %s33, 1
      %p56 = por %p54, %p55
      %p58 = scmp.ne.s32.totalorder %s41, %s57
      %p59 = scmp.eq.s32.totalorder %s33, 0
      %p60 = por %p58, %p59
      %s62 = sadd.s32 %s61, 1
      %p65 = scmp.eq.s32.totalorder %s27, 1
      %p66 = scmp.ne.s32.totalorder %s61, %s63
      %p67 = scmp.eq.s32.totalorder %s27, 0
      %p68 = por %p66, %p67
      %p69 = scmp.ne.s32.totalorder %s61, %s63
      %p70 = scmp.eq.s32.totalorder %s32, 1
      %p71 = por %p69, %p70
      %p72 = scmp.ne.s32.totalorder %s63, %s64
      %p73 = scmp.eq.s32.totalorder %s32, 0
      %p74 = por %p72, %p73
      %p75 = scmp.ne.s32.totalorder %s63, %s64
      %p76 = scmp.eq.s32.totalorder %s33, 1
      %p77 = por %p75, %p76
      %p79 = scmp.ne.s32.totalorder %s64, %s78
      %p80 = scmp.eq.s32.totalorder %s33, 0
      %p81 = por %p79, %p80
      %s83 = sadd.s32 %s82, 1
      %p86 = scmp.eq.s32.totalorder %s27, 1
      %p87 = scmp.ne.s32.totalorder %s82, %s84
      %p88 = scmp.eq.s32.totalorder %s27, 0
      %p89 = por %p87, %p88
      %p90 = scmp.ne.s32.totalorder %s82, %s84
      %p91 = scmp.eq.s32.totalorder %s32, 1
      %p92 = por %p90, %p91
      %p93 = scmp.ne.s32.totalorder %s84, %s85
      %p94 = scmp.eq.s32.totalorder %s32, 0
      %p95 = por %p93, %p94
      %p96 = scmp.ne.s32.totalorder %s84, %s85
      %p97 = scmp.eq.s32.totalorder %s33, 1
      %p98 = por %p96, %p97
      %p100 = scmp.ne.s32.totalorder %s85, %s99
      %p101 = scmp.eq.s32.totalorder %s33, 0
      %p102 = por %p100, %p101
      %s104 = sadd.s32 %s103, 1
      %p107 = scmp.eq.s32.totalorder %s27, 1
      %p108 = scmp.ne.s32.totalorder %s103, %s105
      %p109 = scmp.eq.s32.totalorder %s27, 0
      %p110 = por %p108, %p109
      %p111 = scmp.ne.s32.totalorder %s103, %s105
      %p112 = scmp.eq.s32.totalorder %s32, 1
      %p113 = por %p111, %p112
      %p114 = scmp.ne.s32.totalorder %s105, %s106
      %p115 = scmp.eq.s32.totalorder %s32, 0
      %p116 = por %p114, %p115
      %p117 = scmp.ne.s32.totalorder %s105, %s106
      %p118 = scmp.eq.s32.totalorder %s33, 1
      %p119 = por %p117, %p118
      %p121 = scmp.ne.s32.totalorder %s106, %s120
      %p122 = scmp.eq.s32.totalorder %s33, 0
      %p123 = por %p121, %p122
      %s125 = sadd.s32 %s124, 1
      %p128 = scmp.eq.s32.totalorder %s27, 1
      %p129 = scmp.ne.s32.totalorder %s124, %s126
      %p130 = scmp.eq.s32.totalorder %s27, 0
      %p131 = por %p129, %p130
      %p132 = scmp.ne.s32.totalorder %s124, %s126
      %p133 = scmp.eq.s32.totalorder %s32, 1
      %p134 = por %p132, %p133
      %p135 = scmp.ne.s32.totalorder %s126, %s127
      %p136 = scmp.eq.s32.totalorder %s32, 0
      %p137 = por %p135, %p136
      %p138 = scmp.ne.s32.totalorder %s126, %s127
      %p139 = scmp.eq.s32.totalorder %s33, 1
      %p140 = por %p138, %p139
      %p142 = scmp.ne.s32.totalorder %s127, %s141
      %p143 = scmp.eq.s32.totalorder %s33, 0
      %p144 = por %p142, %p143
      %s146 = sadd.s32 %s145, 1
      %p149 = scmp.eq.s32.totalorder %s27, 1
      %p150 = scmp.ne.s32.totalorder %s145, %s147
      %p151 = scmp.eq.s32.totalorder %s27, 0
      %p152 = por %p150, %p151
      %p153 = scmp.ne.s32.totalorder %s145, %s147
      %p154 = scmp.eq.s32.totalorder %s32, 1
      %p155 = por %p153, %p154
      %p156 = scmp.ne.s32.totalorder %s147, %s148
      %p157 = scmp.eq.s32.totalorder %s32, 0
      %p158 = por %p156, %p157
      %p159 = scmp.ne.s32.totalorder %s147, %s148
      %p160 = scmp.eq.s32.totalorder %s33, 1
      %p161 = por %p159, %p160
      %p163 = scmp.ne.s32.totalorder %s148, %s162
      %p164 = scmp.eq.s32.totalorder %s33, 0
      %p165 = por %p163, %p164
      %s167 = sadd.s32 %s166, 1
      %p170 = scmp.eq.s32.totalorder %s27, 1
      %p171 = scmp.ne.s32.totalorder %s166, %s168
      %p172 = scmp.eq.s32.totalorder %s27, 0
      %p173 = por %p171, %p172
      %p174 = scmp.ne.s32.totalorder %s166, %s168
      %p175 = scmp.eq.s32.totalorder %s32, 1
      %p176 = por %p174, %p175
      %p177 = scmp.ne.s32.totalorder %s168, %s169
      %p178 = scmp.eq.s32.totalorder %s32, 0
      %p179 = por %p177, %p178
      %p180 = scmp.ne.s32.totalorder %s168, %s169
      %p181 = scmp.eq.s32.totalorder %s33, 1
      %p182 = por %p180, %p181
      %p184 = scmp.ne.s32.totalorder %s169, %s183
      %p185 = scmp.eq.s32.totalorder %s33, 0
      %p186 = por %p184, %p185
      %s188 = sadd.s32 %s187, 1
      %p191 = scmp.eq.s32.totalorder %s27, 1
      %p192 = scmp.ne.s32.totalorder %s187, %s189
      %p193 = scmp.eq.s32.totalorder %s27, 0
      %p194 = por %p192, %p193
      %p195 = scmp.ne.s32.totalorder %s187, %s189
      %p196 = scmp.eq.s32.totalorder %s32, 1
      %p197 = por %p195, %p196
      %p198 = scmp.ne.s32.totalorder %s189, %s190
      %p199 = scmp.eq.s32.totalorder %s32, 0
      %p200 = por %p198, %p199
      %p201 = scmp.ne.s32.totalorder %s189, %s190
      %p202 = scmp.eq.s32.totalorder %s33, 1
      %p203 = por %p201, %p202
      %p205 = scmp.ne.s32.totalorder %s190, %s204
      %p206 = scmp.eq.s32.totalorder %s33, 0
      %p207 = por %p205, %p206
      %s209 = sadd.s32 %s208, 1
      %p212 = scmp.eq.s32.totalorder %s27, 1
      %p213 = scmp.ne.s32.totalorder %s208, %s210
      %p214 = scmp.eq.s32.totalorder %s27, 0
      %p215 = por %p213, %p214
      %p216 = scmp.ne.s32.totalorder %s208, %s210
      %p217 = scmp.eq.s32.totalorder %s32, 1
      %p218 = por %p216, %p217
      %p219 = scmp.ne.s32.totalorder %s210, %s211
      %p220 = scmp.eq.s32.totalorder %s32, 0
      %p221 = por %p219, %p220
      %p222 = scmp.ne.s32.totalorder %s210, %s211
      %p223 = scmp.eq.s32.totalorder %s33, 1
      %p224 = por %p222, %p223
      %p226 = scmp.ne.s32.totalorder %s211, %s225
      %p227 = scmp.eq.s32.totalorder %s33, 0
      %p228 = por %p226, %p227
      %s230 = sadd.s32 %s229, 1
      %p233 = scmp.eq.s32.totalorder %s27, 1
      %p234 = scmp.ne.s32.totalorder %s229, %s231
      %p235 = scmp.eq.s32.totalorder %s27, 0
      %p236 = por %p234, %p235
      %p237 = scmp.ne.s32.totalorder %s229, %s231
      %p238 = scmp.eq.s32.totalorder %s32, 1
      %p239 = por %p237, %p238
      %p240 = scmp.ne.s32.totalorder %s231, %s232
      %p241 = scmp.eq.s32.totalorder %s32, 0
      %p242 = por %p240, %p241
      %p243 = scmp.ne.s32.totalorder %s231, %s232
      %p244 = scmp.eq.s32.totalorder %s33, 1
      %p245 = por %p243, %p244
      %p247 = scmp.ne.s32.totalorder %s232, %s246
      %p248 = scmp.eq.s32.totalorder %s33, 0
      %p249 = por %p247, %p248
      %s250 = ssub.s32 %s27, %s34
      %p251 = scmp.eq.s32.totalorder %s250, 0
      %s253 = sadd.s32 %s252, 1
      %s254 = scalar_select %p251, %s252, %s253
      %p257 = pneg %p251
      %p258 = scmp.eq.s32.totalorder %s27, 1
      %p259 = por %p257, %p258
      %p260 = scmp.ne.s32.totalorder %s252, %s255
      %p261 = scmp.eq.s32.totalorder %s27, 0
      %p262 = por %p260, %p261
      %p263 = scmp.ne.s32.totalorder %s252, %s255
      %p264 = scmp.eq.s32.totalorder %s32, 1
      %p265 = por %p263, %p264
      %p266 = scmp.ne.s32.totalorder %s255, %s256
      %p267 = scmp.eq.s32.totalorder %s32, 0
      %p268 = por %p266, %p267
      %p269 = scmp.ne.s32.totalorder %s255, %s256
      %p270 = scmp.eq.s32.totalorder %s33, 1
      %p271 = por %p269, %p270
      %p273 = scmp.ne.s32.totalorder %s256, %s272
      %p274 = scmp.eq.s32.totalorder %s33, 0
      %p275 = por %p273, %p274
      %p276 = scmp.le.s32.totalorder 1, %s27
      %p277 = scmp.lt.s32.totalorder %s27, 3
      %p278 = pnand %p276, %p277
      %p279 = pneg %p278
      // Predicated region
      $region9: #{tpu_custom_call.1} parent=5 // pred_check
        _
      $region10: #{tpu_custom_call.1} parent=5 // pred_check_branch
        %281 = sbr.rel (%p278) target = $region12
      $region11: #{tpu_custom_call.1} parent=5 // pred_region
        %s282 = ssub.s32 %s27, 1
        // Predicated region
        $region13: #{tpu_custom_call.1} parent=11 // pred_check
          %p283 = pneg %p74
        $region14: #{tpu_custom_call.1} parent=11 // pred_check_branch
          %285 = sbr.rel (%p283) target = $region16
        $region15: #{tpu_custom_call.1} parent=11 // pred_region
          %s287 = ssub.s32 4096, 4096
          %288 = vsyncadd [#allocation6], %s287
          %s289 = sshll.u32 [#allocation5], 4
          %s290 = int_to_ptr.vmem [resolvable:$true] %s289
          %295 = dma.hbm_to_vmem [thread:$0]  %s1, 4096, %s290, [#allocation6], 128, 128, 8
        $region16: #{tpu_custom_call.1} parent=11 // pred_fallthru
          _
        // Predicated region
        $region17: #{tpu_custom_call.1} parent=11 // pred_check
          %p296 = pneg %p95
        $region18: #{tpu_custom_call.1} parent=11 // pred_check_branch
          %298 = sbr.rel (%p296) target = $region20
        $region19: #{tpu_custom_call.1} parent=11 // pred_region
          %s300 = ssub.s32 256, 256
          %301 = vsyncadd [#allocation6], %s300
          %s302 = sshll.u32 [#allocation7], 4
          %s303 = int_to_ptr.vmem [resolvable:$true] %s302
          %308 = dma.hbm_to_vmem [thread:$0]  %s2, 256, %s303, [#allocation6], 64, 64, 4
        $region20: #{tpu_custom_call.1} parent=11 // pred_fallthru
          _
        // Predicated region
        $region21: #{tpu_custom_call.1} parent=11 // pred_check
          %p309 = pneg %p116
        $region22: #{tpu_custom_call.1} parent=11 // pred_check_branch
          %311 = sbr.rel (%p309) target = $region24
        $region23: #{tpu_custom_call.1} parent=11 // pred_region
          %s313 = ssub.s32 512, 512
          %314 = vsyncadd [#allocation9], %s313
          %s315 = sshll.u32 [#allocation8], 4
          %s316 = int_to_ptr.vmem [resolvable:$true] %s315
          %321 = dma.hbm_to_vmem [thread:$0]  %s3, 512, %s316, [#allocation9], 128, 128, 8
        $region24: #{tpu_custom_call.1} parent=11 // pred_fallthru
          _
        // Predicated region
        $region25: #{tpu_custom_call.1} parent=11 // pred_check
          %p322 = pneg %p137
        $region26: #{tpu_custom_call.1} parent=11 // pred_check_branch
          %324 = sbr.rel (%p322) target = $region28
        $region27: #{tpu_custom_call.1} parent=11 // pred_region
          %s326 = ssub.s32 512, 512
          %327 = vsyncadd [#allocation9], %s326
          %s328 = sshll.u32 [#allocation10], 4
          %s329 = int_to_ptr.vmem [resolvable:$true] %s328
          %334 = dma.hbm_to_vmem [thread:$0]  %s4, 512, %s329, [#allocation9], 128, 128, 8
        $region28: #{tpu_custom_call.1} parent=11 // pred_fallthru
          _
        // Predicated region
        $region29: #{tpu_custom_call.1} parent=11 // pred_check
          %p335 = pneg %p158
        $region30: #{tpu_custom_call.1} parent=11 // pred_check_branch
          %337 = sbr.rel (%p335) target = $region32
        $region31: #{tpu_custom_call.1} parent=11 // pred_region
          %s339 = ssub.s32 1792, 1792
          %340 = vsyncadd [#allocation12], %s339
          %s341 = sshll.u32 [#allocation11], 4
          %s342 = int_to_ptr.vmem [resolvable:$true] %s341
          %347 = dma.hbm_to_vmem [thread:$0]  %s5, 1792, %s342, [#allocation12], 256, 256, 16
        $region32: #{tpu_custom_call.1} parent=11 // pred_fallthru
          _
        // Predicated region
        $region33: #{tpu_custom_call.1} parent=11 // pred_check
          %p348 = pneg %p179
        $region34: #{tpu_custom_call.1} parent=11 // pred_check_branch
          %350 = sbr.rel (%p348) target = $region36
        $region35: #{tpu_custom_call.1} parent=11 // pred_region
          %s352 = ssub.s32 576, 576
          %353 = vsyncadd [#allocation12], %s352
          %s354 = sshll.u32 [#allocation13], 4
          %s355 = int_to_ptr.vmem [resolvable:$true] %s354
          %360 = dma.hbm_to_vmem [thread:$0]  %s6, 576, %s355, [#allocation12], 64, 64, 4
        $region36: #{tpu_custom_call.1} parent=11 // pred_fallthru
          _
        // Predicated region
        $region37: #{tpu_custom_call.1} parent=11 // pred_check
          %p361 = pneg %p200
        $region38: #{tpu_custom_call.1} parent=11 // pred_check_branch
          %363 = sbr.rel (%p361) target = $region40
        $region39: #{tpu_custom_call.1} parent=11 // pred_region
          %s365 = ssub.s32 576, 576
          %366 = vsyncadd [#allocation15], %s365
          %s367 = sshll.u32 [#allocation14], 4
          %s368 = int_to_ptr.vmem [resolvable:$true] %s367
          %373 = dma.hbm_to_vmem [thread:$0]  %s7, 576, %s368, [#allocation15], 64, 64, 4
        $region40: #{tpu_custom_call.1} parent=11 // pred_fallthru
          _
        // Predicated region
        $region41: #{tpu_custom_call.1} parent=11 // pred_check
          %p374 = pneg %p221
        $region42: #{tpu_custom_call.1} parent=11 // pred_check_branch
          %376 = sbr.rel (%p374) target = $region44
        $region43: #{tpu_custom_call.1} parent=11 // pred_region
          %s378 = ssub.s32 128, 128
          %379 = vsyncadd [#allocation15], %s378
          %s381 = sshll.u32 [#allocation16], 4
          %s382 = int_to_ptr.vmem [resolvable:$true] %s381
          %384 = dma.hbm_to_vmem [thread:$0]  %s8, 128, %s382, [#allocation15]
        $region44: #{tpu_custom_call.1} parent=11 // pred_fallthru
          _
        // Predicated region
        $region45: #{tpu_custom_call.1} parent=11 // pred_check
          %p385 = pneg %p242
        $region46: #{tpu_custom_call.1} parent=11 // pred_check_branch
          %387 = sbr.rel (%p385) target = $region48
        $region47: #{tpu_custom_call.1} parent=11 // pred_region
          %s389 = ssub.s32 288, 288
          %390 = vsyncadd [#allocation18], %s389
          %s391 = sshll.u32 [#allocation17], 4
          %s392 = int_to_ptr.vmem [resolvable:$true] %s391
          %397 = dma.hbm_to_vmem [thread:$0]  %s9, 288, %s392, [#allocation18], 32, 32, 2
        $region48: #{tpu_custom_call.1} parent=11 // pred_fallthru
          _
      $region12: #{tpu_custom_call.1} parent=5 // pred_fallthru
        _
      %p398 = scmp.lt.s32.totalorder %s27, 2
      // Predicated region
      $region49: #{tpu_custom_call.1} parent=5 // pred_check
        %p399 = pneg %p398
      $region50: #{tpu_custom_call.1} parent=5 // pred_check_branch
        %401 = sbr.rel (%p399) target = $region52
      $region51: #{tpu_custom_call.1} parent=5 // pred_region
        // Predicated region
        $region53: #{tpu_custom_call.1} parent=51 // pred_check
          %p402 = pneg %p47
        $region54: #{tpu_custom_call.1} parent=51 // pred_check_branch
          %404 = sbr.rel (%p402) target = $region56
        $region55: #{tpu_custom_call.1} parent=51 // pred_region
          %s405 = sand.u32 %s37, 1
          %s406 = scalar_lea.sflag [#allocation3], %s405
          %s407 = sand.u32 %s37, 1
          %s408 = smul.addr %s407, 4
          %s409 = scalar_lea.vmem [#allocation2], %s408
          %s411 = ssub.s32 64, 64
          %412 = vsyncadd %s406, %s411
          %s413 = smul.addr %s27, 2
          %s414 = smul.addr %s413, 32
          %s415 = scalar_lea.hbm %s0, %s414
          %s417 = sshll.u32 %s409, 4
          %s418 = int_to_ptr.vmem [resolvable:$true] %s417
          %420 = dma.hbm_to_vmem [thread:$0]  %s415, 64, %s418, %s406
        $region56: #{tpu_custom_call.1} parent=51 // pred_fallthru
          _
      $region52: #{tpu_custom_call.1} parent=5 // pred_fallthru
        _
      %p421 = scmp.le.s32.totalorder 1, %s27
      %p422 = scmp.lt.s32.totalorder %s27, 3
      %p423 = pnand %p421, %p422
      %p424 = pneg %p423
      // Predicated region
      $region57: #{tpu_custom_call.1} parent=5 // pred_check
        _
      $region58: #{tpu_custom_call.1} parent=5 // pred_check_branch
        %426 = sbr.rel (%p423) target = $region60
      $region59: #{tpu_custom_call.1} parent=5 // pred_region
        %s427 = ssub.s32 %s27, 1
        %s428 = sand.u32 %s40, 1
        %s429 = scalar_lea.sflag [#allocation3], %s428
        %s430 = sand.u32 %s40, 1
        %s431 = smul.addr %s430, 4
        %s432 = scalar_lea.vmem [#allocation2], %s431
        // Predicated region
        $region61: #{tpu_custom_call.1} parent=59 // pred_check
          %p433 = pneg %p53
        $region62: #{tpu_custom_call.1} parent=59 // pred_check_branch
          %435 = sbr.rel (%p433) target = $region64
        $region63: #{tpu_custom_call.1} parent=59 // pred_region
          %436 = dma.done %s429, 64
        $region64: #{tpu_custom_call.1} parent=59 // pred_fallthru
          _
        // Predicated region
        $region65: #{tpu_custom_call.1} parent=59 // pred_check
          %p437 = pneg %p74
        $region66: #{tpu_custom_call.1} parent=59 // pred_check_branch
          %439 = sbr.rel (%p437) target = $region68
        $region67: #{tpu_custom_call.1} parent=59 // pred_region
          %440 = dma.done [#allocation6], 4096
        $region68: #{tpu_custom_call.1} parent=59 // pred_fallthru
          _
        // Predicated region
        $region69: #{tpu_custom_call.1} parent=59 // pred_check
          %p441 = pneg %p95
        $region70: #{tpu_custom_call.1} parent=59 // pred_check_branch
          %443 = sbr.rel (%p441) target = $region72
        $region71: #{tpu_custom_call.1} parent=59 // pred_region
          %444 = dma.done [#allocation6], 256
        $region72: #{tpu_custom_call.1} parent=59 // pred_fallthru
          _
        // Predicated region
        $region73: #{tpu_custom_call.1} parent=59 // pred_check
          %p445 = pneg %p116
        $region74: #{tpu_custom_call.1} parent=59 // pred_check_branch
          %447 = sbr.rel (%p445) target = $region76
        $region75: #{tpu_custom_call.1} parent=59 // pred_region
          %448 = dma.done [#allocation9], 512
        $region76: #{tpu_custom_call.1} parent=59 // pred_fallthru
          _
        // Predicated region
        $region77: #{tpu_custom_call.1} parent=59 // pred_check
          %p449 = pneg %p137
        $region78: #{tpu_custom_call.1} parent=59 // pred_check_branch
          %451 = sbr.rel (%p449) target = $region80
        $region79: #{tpu_custom_call.1} parent=59 // pred_region
          %452 = dma.done [#allocation9], 512
        $region80: #{tpu_custom_call.1} parent=59 // pred_fallthru
          _
        // Predicated region
        $region81: #{tpu_custom_call.1} parent=59 // pred_check
          %p453 = pneg %p158
        $region82: #{tpu_custom_call.1} parent=59 // pred_check_branch
          %455 = sbr.rel (%p453) target = $region84
        $region83: #{tpu_custom_call.1} parent=59 // pred_region
          %456 = dma.done [#allocation12], 1792
        $region84: #{tpu_custom_call.1} parent=59 // pred_fallthru
          _
        // Predicated region
        $region85: #{tpu_custom_call.1} parent=59 // pred_check
          %p457 = pneg %p179
        $region86: #{tpu_custom_call.1} parent=59 // pred_check_branch
          %459 = sbr.rel (%p457) target = $region88
        $region87: #{tpu_custom_call.1} parent=59 // pred_region
          %460 = dma.done [#allocation12], 576
        $region88: #{tpu_custom_call.1} parent=59 // pred_fallthru
          _
        // Predicated region
        $region89: #{tpu_custom_call.1} parent=59 // pred_check
          %p461 = pneg %p200
        $region90: #{tpu_custom_call.1} parent=59 // pred_check_branch
          %463 = sbr.rel (%p461) target = $region92
        $region91: #{tpu_custom_call.1} parent=59 // pred_region
          %464 = dma.done [#allocation15], 576
        $region92: #{tpu_custom_call.1} parent=59 // pred_fallthru
          _
        // Predicated region
        $region93: #{tpu_custom_call.1} parent=59 // pred_check
          %p465 = pneg %p221
        $region94: #{tpu_custom_call.1} parent=59 // pred_check_branch
          %467 = sbr.rel (%p465) target = $region96
        $region95: #{tpu_custom_call.1} parent=59 // pred_region
          %468 = dma.done [#allocation15], 128
        $region96: #{tpu_custom_call.1} parent=59 // pred_fallthru
          _
        // Predicated region
        $region97: #{tpu_custom_call.1} parent=59 // pred_check
          %p469 = pneg %p242
        $region98: #{tpu_custom_call.1} parent=59 // pred_check_branch
          %471 = sbr.rel (%p469) target = $region100
        $region99: #{tpu_custom_call.1} parent=59 // pred_region
          %472 = dma.done [#allocation18], 288
        $region100: #{tpu_custom_call.1} parent=59 // pred_fallthru
          _
        %s473 = sand.u32 %s40, 1
        %s474 = scalar_lea.sflag [#allocation3], %s473
        %s475 = sand.u32 %s40, 1
        %s476 = smul.addr %s475, 4
        %s477 = scalar_lea.vmem [#allocation2], %s476
        %p478 = pneg %p53
        %p479 = pneg %p50
        %p480 = pneg %p74
        %p481 = pneg %p71
        %p482 = pneg %p95
        %p483 = pneg %p92
        %p484 = pneg %p116
        %p485 = pneg %p113
        %p486 = pneg %p137
        %p487 = pneg %p134
        %p488 = pneg %p158
        %p489 = pneg %p155
        %p490 = pneg %p179
        %p491 = pneg %p176
        %p492 = pneg %p200
        %p493 = pneg %p197
        %p494 = pneg %p221
        %p495 = pneg %p218
        %p496 = pneg %p242
        %p497 = pneg %p239
        %p498 = pneg %p268
        %p499 = pneg %p265
        %s500 = sand.u32 %s255, 1
        %s501 = scalar_lea.sflag [#allocation4], %s500
        %s502 = sand.u32 %s255, 1
        %s503 = smul.addr %s502, 16
        %s504 = scalar_lea.vmem [#allocation19], %s503
        %v506 = vld [vmem:[%s432] sm:$0xf]
        %v507 = vunpack.c.l.bf16 %v506
        %v508 = vld [vmem:[#allocation5] sm:$0xff]
        %v509 = vld [vmem:[#allocation5 + $0x8] sm:$0xff]
        %v510 = vld [vmem:[#allocation5 + $0x10] sm:$0xff]
        %v511 = vld [vmem:[#allocation5 + $0x18] sm:$0xff]
        %v512 = vld [vmem:[#allocation5 + $0x20] sm:$0xff]
        %v513 = vld [vmem:[#allocation5 + $0x28] sm:$0xff]
        %v514 = vld [vmem:[#allocation5 + $0x30] sm:$0xff]
        %v515 = vld [vmem:[#allocation5 + $0x38] sm:$0xff]
        %v516 = vld [vmem:[#allocation5 + $0x40] sm:$0xff]
        %v517 = vld [vmem:[#allocation5 + $0x48] sm:$0xff]
        %v518 = vld [vmem:[#allocation5 + $0x50] sm:$0xff]
        %v519 = vld [vmem:[#allocation5 + $0x58] sm:$0xff]
        %v520 = vld [vmem:[#allocation5 + $0x60] sm:$0xff]
        %v521 = vld [vmem:[#allocation5 + $0x68] sm:$0xff]
        %v522 = vld [vmem:[#allocation5 + $0x70] sm:$0xff]
        %v523 = vld [vmem:[#allocation5 + $0x78] sm:$0xff]
        %v524 = vld [vmem:[#allocation5 + $0x80] sm:$0xff]
        %v525 = vld [vmem:[#allocation5 + $0x88] sm:$0xff]
        %v526 = vld [vmem:[#allocation5 + $0x90] sm:$0xff]
        %v527 = vld [vmem:[#allocation5 + $0x98] sm:$0xff]
        %v528 = vld [vmem:[#allocation5 + $0xa0] sm:$0xff]
        %v529 = vld [vmem:[#allocation5 + $0xa8] sm:$0xff]
        %v530 = vld [vmem:[#allocation5 + $0xb0] sm:$0xff]
        %v531 = vld [vmem:[#allocation5 + $0xb8] sm:$0xff]
        %v532 = vld [vmem:[#allocation5 + $0xc0] sm:$0xff]
        %v533 = vld [vmem:[#allocation5 + $0xc8] sm:$0xff]
        %v534 = vld [vmem:[#allocation5 + $0xd0] sm:$0xff]
        %v535 = vld [vmem:[#allocation5 + $0xd8] sm:$0xff]
        %v536 = vld [vmem:[#allocation5 + $0xe0] sm:$0xff]
        %v537 = vld [vmem:[#allocation5 + $0xe8] sm:$0xff]
        %v538 = vld [vmem:[#allocation5 + $0xf0] sm:$0xff]
        %v539 = vld [vmem:[#allocation5 + $0xf8] sm:$0xff]
        %v541 = vcombine.high %v507, %v507
        %543 = vmatprep.subr.mxu0 0.0
        %544 = vmatpush1.msra.mxu0 %v508
        %545 = vmatprep.subr.mxu0 0.0
        %546 = vmatpush1.msra.mxu0 %v509
        %547 = vmatprep.subr.mxu0 0.0
        %548 = vmatpush1.msra.mxu0 %v510
        %549 = vmatprep.subr.mxu0 0.0
        %550 = vmatpush1.msra.mxu0 %v511
        %551 = vmatprep.subr.mxu0 0.0
        %552 = vmatpush1.msra.mxu0 %v512
        %553 = vmatprep.subr.mxu0 0.0
        %554 = vmatpush1.msra.mxu0 %v513
        %555 = vmatprep.subr.mxu0 0.0
        %556 = vmatpush1.msra.mxu0 %v514
        %557 = vmatprep.subr.mxu0 0.0
        %558 = vmatpush1.msra.mxu0 %v515
        %559 = vmatprep.subr.mxu0 0.0
        %560 = vmatpush1.msra.mxu0 %v516
        %561 = vmatprep.subr.mxu0 0.0
        %562 = vmatpush1.msra.mxu0 %v517
        %563 = vmatprep.subr.mxu0 0.0
        %564 = vmatpush1.msra.mxu0 %v518
        %565 = vmatprep.subr.mxu0 0.0
        %566 = vmatpush1.msra.mxu0 %v519
        %567 = vmatprep.subr.mxu0 0.0
        %568 = vmatpush1.msra.mxu0 %v520
        %569 = vmatprep.subr.mxu0 0.0
        %570 = vmatpush1.msra.mxu0 %v521
        %571 = vmatprep.subr.mxu0 0.0
        %572 = vmatpush1.msra.mxu0 %v522
        %573 = vmatprep.subr.mxu0 0.0
        %574 = vmatpush1.msra.mxu0 %v523
        %575 = vmatprep.subr.mxu0 0.0
        %576 = vmatpush1.msra.mxu0 %v524
        %577 = vmatprep.subr.mxu0 0.0
        %578 = vmatpush1.msra.mxu0 %v525
        %579 = vmatprep.subr.mxu0 0.0
        %580 = vmatpush1.msra.mxu0 %v526
        %581 = vmatprep.subr.mxu0 0.0
        %582 = vmatpush1.msra.mxu0 %v527
        %583 = vmatprep.subr.mxu0 0.0
        %584 = vmatpush1.msra.mxu0 %v528
        %585 = vmatprep.subr.mxu0 0.0
        %586 = vmatpush1.msra.mxu0 %v529
        %587 = vmatprep.subr.mxu0 0.0
        %588 = vmatpush1.msra.mxu0 %v530
        %589 = vmatprep.subr.mxu0 0.0
        %590 = vmatpush1.msra.mxu0 %v531
        %591 = vmatprep.subr.mxu0 0.0
        %592 = vmatpush1.msra.mxu0 %v532
        %593 = vmatprep.subr.mxu0 0.0
        %594 = vmatpush1.msra.mxu0 %v533
        %595 = vmatprep.subr.mxu0 0.0
        %596 = vmatpush1.msra.mxu0 %v534
        %597 = vmatprep.subr.mxu0 0.0
        %598 = vmatpush1.msra.mxu0 %v535
        %599 = vmatprep.subr.mxu0 0.0
        %600 = vmatpush1.msra.mxu0 %v536
        %601 = vmatprep.subr.mxu0 0.0
        %602 = vmatpush1.msra.mxu0 %v537
        %603 = vmatprep.subr.mxu0 0.0
        %604 = vmatpush1.msra.mxu0 %v538
        %605 = vmatprep.subr.mxu0 0.0
        %606 = vmatpush1.msra.mxu0 %v539
        %607 = vmatprep.mubr.f32.mxu0 %v541
        %608 = vmatmul.mubr.f32.gmra.mrb[0].mxu0 %v507
        %v609 = vpop.f32.mrb[0].mxu0
        %v610 = vadd.f32 0.0, %v609
        %v611 = vpop.f32.mrb[0].mxu0
        %612 = vdwg.mxu0
        %v613 = vld [vmem:[#allocation7] sm:$0xf]
        %v614 = vld [vmem:[#allocation7 + $0x4] sm:$0xf]
        %v615 = vld [vmem:[#allocation7 + $0x8] sm:$0xf]
        %v616 = vld [vmem:[#allocation7 + $0xc] sm:$0xf]
        %v617 = vpack.c.bf16 %v610, %v610
        %v618 = vld [vmem:[#allocation8] sm:$0xff]
        %v619 = vld [vmem:[#allocation8 + $0x8] sm:$0xff]
        %v620 = vld [vmem:[#allocation8 + $0x10] sm:$0xff]
        %v621 = vld [vmem:[#allocation8 + $0x18] sm:$0xff]
        %623 = vset.pattern.permute.xlu0 0
        %624 = vperm.xlu0 %623, %v618
        %v625 = vpop.permute.xlu0 %624
        %628 = vset.pattern.permute.xlu0 0
        %629 = vperm.xlu0 %628, %v619
        %v630 = vpop.permute.xlu0 %629
        %633 = vset.pattern.permute.xlu0 0
        %634 = vperm.xlu0 %633, %v620
        %v635 = vpop.permute.xlu0 %634
        %638 = vset.pattern.permute.xlu0 0
        %639 = vperm.xlu0 %638, %v621
        %v640 = vpop.permute.xlu0 %639
        %v646 = vunpack.c.l.b16 %v613
        %v647 = vunpack.c.l.b16 %v614
        %v648 = vunpack.c.l.b16 %v615
        %v649 = vunpack.c.l.b16 %v616
        %v650 = vpack.c.b16 %v647, %v646
        %v651 = vpack.c.b16 %v649, %v648
        %vm652 = vcmask 31744
        %v654 = vsel %vm652, %v650, 0
        %v657 = vsel %vm652, %v651, 0
        %vm659 = vcmask 1041408
        %v661 = vsel %vm659, %v617, 0
        %663 = vmatprep.subr.bf16.mxu0 0
        %664 = vmatpush1.bf16.msra.mxu0 %v661
        %665 = vmatprep.subr.bf16.mxu0 0
        %666 = vmatpush1.bf16.msra.mxu0 0
        %667 = vmatprep.subr.bf16.mxu0 0
        %668 = vmatpush1.bf16.msra.mxu0 0
        %669 = vmatprep.subr.bf16.mxu0 0
        %670 = vmatpush1.bf16.msra.mxu0 0
        %671 = vmatprep.subr.bf16.mxu0 0
        %672 = vmatpush1.bf16.msra.mxu0 0
        %673 = vmatprep.subr.bf16.mxu0 0
        %674 = vmatpush1.bf16.msra.mxu0 0
        %675 = vmatprep.subr.bf16.mxu0 0
        %676 = vmatpush1.bf16.msra.mxu0 0
        %677 = vmatprep.subr.bf16.mxu0 0
        %678 = vmatpush1.bf16.msra.mxu0 0
        %679 = vmatprep.subr.bf16.mxu0 0
        %680 = vmatpush1.bf16.msra.mxu0 0
        %681 = vmatprep.subr.bf16.mxu0 0
        %682 = vmatpush1.bf16.msra.mxu0 0
        %683 = vmatprep.subr.bf16.mxu0 0
        %684 = vmatpush1.bf16.msra.mxu0 0
        %685 = vmatprep.subr.bf16.mxu0 0
        %686 = vmatpush1.bf16.msra.mxu0 0
        %687 = vmatprep.subr.bf16.mxu0 0
        %688 = vmatpush1.bf16.msra.mxu0 0
        %689 = vmatprep.subr.bf16.mxu0 0
        %690 = vmatpush1.bf16.msra.mxu0 0
        %691 = vmatprep.subr.bf16.mxu0 0
        %692 = vmatpush1.bf16.msra.mxu0 0
        %693 = vmatprep.subr.bf16.mxu0 0
        %694 = vmatpush1.bf16.msra.mxu0 0
        %695 = vmatprep.mubr.bf16.mxu0 0
        %696 = vmatmul.mubr.bf16.gmra.mrb[0].mxu0 %v654
        %v697 = vpop.f32.mrb[0].mxu0
        %v698 = vadd.f32 %v625, %v697
        %v699 = vpop.f32.mrb[0].mxu0
        %v700 = vpop.f32.mrb[0].mxu0
        %v701 = vadd.f32 %v630, %v700
        %v702 = vpop.f32.mrb[0].mxu0
        %703 = vmatprep.mubr.bf16.mxu0 0
        %704 = vmatmul.mubr.bf16.gmra.mrb[0].mxu0 %v657
        %v705 = vpop.f32.mrb[0].mxu0
        %v706 = vadd.f32 %v635, %v705
        %v707 = vpop.f32.mrb[0].mxu0
        %v708 = vpop.f32.mrb[0].mxu0
        %v709 = vadd.f32 %v640, %v708
        %v710 = vpop.f32.mrb[0].mxu0
        %711 = vdwg.mxu0
        %v712 = vmax.f32 %v698, 0.0
        %v713 = vmax.f32 %v701, 0.0
        %v714 = vmax.f32 %v706, 0.0
        %v715 = vmax.f32 %v709, 0.0
        %v716 = vld [vmem:[#allocation10] sm:$0xff]
        %v717 = vld [vmem:[#allocation10 + $0x8] sm:$0xff]
        %v718 = vld [vmem:[#allocation10 + $0x10] sm:$0xff]
        %v719 = vld [vmem:[#allocation10 + $0x18] sm:$0xff]
        %v720 = vmul.f32 %v712, %v716
        %v721 = vmul.f32 %v713, %v717
        %v722 = vmul.f32 %v714, %v718
        %v723 = vmul.f32 %v715, %v719
        %v724 = vld [vmem:[#allocation11] sm:$0xff]
        %v725 = vld [vmem:[#allocation11 + $0x8] sm:$0xff]
        %v726 = vld [vmem:[#allocation11 + $0x10] sm:$0xff]
        %v727 = vld [vmem:[#allocation11 + $0x18] sm:$0xff]
        %v728 = vld [vmem:[#allocation11 + $0x20] sm:$0xff]
        %v729 = vld [vmem:[#allocation11 + $0x28] sm:$0xff]
        %v730 = vld [vmem:[#allocation11 + $0x30] sm:$0xff]
        %v731 = vld [vmem:[#allocation11 + $0x38] sm:$0xff]
        %v732 = vld [vmem:[#allocation11 + $0x40] sm:$0xff]
        %v733 = vld [vmem:[#allocation11 + $0x48] sm:$0xff]
        %v734 = vld [vmem:[#allocation11 + $0x50] sm:$0xff]
        %v735 = vld [vmem:[#allocation11 + $0x58] sm:$0xff]
        %v736 = vld [vmem:[#allocation11 + $0x60] sm:$0x3]
        %v737 = vld [vmem:[#allocation11 + $0x68] sm:$0x3]
        %vm738 = vcmask 408576
        %v740 = vsel %vm738, %v720, 0
        %v743 = vsel %vm738, %v721, 0
        %v746 = vsel %vm738, %v722, 0
        %v749 = vsel %vm738, %v723, 0
        %v752 = vsel %vm659, %v736, 0
        %v755 = vsel %vm659, %v737, 0
        %757 = vmatprep.subr.mxu0 %v725
        %758 = vmatpush1.msra.mxu0 %v724
        %759 = vmatprep.subr.mxu0 %v727
        %760 = vmatpush1.msra.mxu0 %v726
        %761 = vmatprep.subr.mxu0 %v729
        %762 = vmatpush1.msra.mxu0 %v728
        %763 = vmatprep.subr.mxu0 %v731
        %764 = vmatpush1.msra.mxu0 %v730
        %765 = vmatprep.subr.mxu0 %v733
        %766 = vmatpush1.msra.mxu0 %v732
        %767 = vmatprep.subr.mxu0 %v735
        %768 = vmatpush1.msra.mxu0 %v734
        %769 = vmatprep.subr.mxu0 %v755
        %770 = vmatpush1.msra.mxu0 %v752
        %771 = vmatprep.subr.mxu0 0.0
        %772 = vmatpush1.msra.mxu0 0.0
        %773 = vmatprep.subr.mxu0 0.0
        %774 = vmatpush1.msra.mxu0 0.0
        %775 = vmatprep.subr.mxu0 0.0
        %776 = vmatpush1.msra.mxu0 0.0
        %777 = vmatprep.subr.mxu0 0.0
        %778 = vmatpush1.msra.mxu0 0.0
        %779 = vmatprep.subr.mxu0 0.0
        %780 = vmatpush1.msra.mxu0 0.0
        %781 = vmatprep.subr.mxu0 0.0
        %782 = vmatpush1.msra.mxu0 0.0
        %783 = vmatprep.subr.mxu0 0.0
        %784 = vmatpush1.msra.mxu0 0.0
        %785 = vmatprep.subr.mxu0 0.0
        %786 = vmatpush1.msra.mxu0 0.0
        %787 = vmatprep.subr.mxu0 0.0
        %788 = vmatpush1.msra.mxu0 0.0
        %789 = vmatprep.subr.mxu0 0.0
        %790 = vmatpush1.msra.mxu0 0.0
        %791 = vmatprep.subr.mxu0 0.0
        %792 = vmatpush1.msra.mxu0 0.0
        %793 = vmatprep.subr.mxu0 0.0
        %794 = vmatpush1.msra.mxu0 0.0
        %795 = vmatprep.subr.mxu0 0.0
        %796 = vmatpush1.msra.mxu0 0.0
        %797 = vmatprep.subr.mxu0 0.0
        %798 = vmatpush1.msra.mxu0 0.0
        %799 = vmatprep.subr.mxu0 0.0
        %800 = vmatpush1.msra.mxu0 0.0
        %801 = vmatprep.subr.mxu0 0.0
        %802 = vmatpush1.msra.mxu0 0.0
        %803 = vmatprep.subr.mxu0 0.0
        %804 = vmatpush1.msra.mxu0 0.0
        %805 = vmatprep.subr.mxu0 0.0
        %806 = vmatpush1.msra.mxu0 0.0
        %807 = vmatprep.subr.mxu0 0.0
        %808 = vmatpush1.msra.mxu0 0.0
        %809 = vmatprep.subr.mxu0 0.0
        %810 = vmatpush1.msra.mxu0 0.0
        %811 = vmatprep.subr.mxu0 0.0
        %812 = vmatpush1.msra.mxu0 0.0
        %813 = vmatprep.subr.mxu0 0.0
        %814 = vmatpush1.msra.mxu0 0.0
        %815 = vmatprep.subr.mxu0 0.0
        %816 = vmatpush1.msra.mxu0 0.0
        %817 = vmatprep.subr.mxu0 0.0
        %818 = vmatpush1.msra.mxu0 0.0
        %819 = vmatprep.subr.mxu0 0.0
        %820 = vmatpush1.msra.mxu0 0.0
        %821 = vmatprep.mubr.f32.mxu0 0.0
        %822 = vmatmul.mubr.f32.gmra.mrb[0].mxu0 %v740
        %v823 = vpop.f32.mrb[0].mxu0
        %v824 = vadd.f32 0.0, %v823
        %v825 = vpop.f32.mrb[0].mxu0
        %v826 = vadd.f32 0.0, %v825
        %827 = vmatprep.mubr.f32.mxu0 0.0
        %828 = vmatmul.mubr.f32.gmra.mrb[0].mxu0 %v743
        %v829 = vpop.f32.mrb[0].mxu0
        %v830 = vadd.f32 0.0, %v829
        %v831 = vpop.f32.mrb[0].mxu0
        %v832 = vadd.f32 0.0, %v831
        %833 = vmatprep.mubr.f32.mxu0 0.0
        %834 = vmatmul.mubr.f32.gmra.mrb[0].mxu0 %v746
        %v835 = vpop.f32.mrb[0].mxu0
        %v836 = vadd.f32 0.0, %v835
        %v837 = vpop.f32.mrb[0].mxu0
        %v838 = vadd.f32 0.0, %v837
        %839 = vmatprep.mubr.f32.mxu0 0.0
        %840 = vmatmul.mubr.f32.gmra.mrb[0].mxu0 %v749
        %v841 = vpop.f32.mrb[0].mxu0
        %v842 = vadd.f32 0.0, %v841
        %v843 = vpop.f32.mrb[0].mxu0
        %v844 = vadd.f32 0.0, %v843
        %845 = vdwg.mxu0
        %v846 = vpack.c.bf16 %v830, %v824
        %v847 = vpack.c.bf16 %v832, %v826
        %v848 = vpack.c.bf16 %v842, %v836
        %v849 = vpack.c.bf16 %v844, %v838
        %v850 = vld [vmem:[#allocation13] sm:$0xf]
        %v851 = vld [vmem:[#allocation13 + $0x4] sm:$0xf]
        %v852 = vld [vmem:[#allocation13 + $0x8] sm:$0xf]
        %v853 = vld [vmem:[#allocation13 + $0xc] sm:$0xf]
        %v854 = vld [vmem:[#allocation13 + $0x10] sm:$0xf]
        %v855 = vld [vmem:[#allocation13 + $0x14] sm:$0xf]
        %v856 = vld [vmem:[#allocation13 + $0x18] sm:$0xf]
        %v857 = vld [vmem:[#allocation13 + $0x1c] sm:$0xf]
        %v858 = vld [vmem:[#allocation13 + $0x20] sm:$0xf]
        %v859 = vld [vmem:[#allocation14] sm:$0xf]
        %v860 = vld [vmem:[#allocation14 + $0x4] sm:$0xf]
        %v861 = vld [vmem:[#allocation14 + $0x8] sm:$0xf]
        %v862 = vld [vmem:[#allocation14 + $0xc] sm:$0xf]
        %v863 = vld [vmem:[#allocation14 + $0x10] sm:$0xf]
        %v864 = vld [vmem:[#allocation14 + $0x14] sm:$0xf]
        %v865 = vld [vmem:[#allocation14 + $0x18] sm:$0xf]
        %v866 = vld [vmem:[#allocation14 + $0x1c] sm:$0xf]
        %v867 = vld [vmem:[#allocation14 + $0x20] sm:$0xf]
        %v877 = vunpack.c.l.b16 %v859
        %v878 = vunpack.c.l.b16 %v860
        %v879 = vunpack.c.l.b16 %v861
        %v880 = vunpack.c.l.b16 %v862
        %v881 = vunpack.c.l.b16 %v863
        %v882 = vunpack.c.l.b16 %v864
        %v883 = vunpack.c.l.b16 %v865
        %v884 = vunpack.c.l.b16 %v866
        %v885 = vunpack.c.l.b16 %v867
        %v886 = vpack.c.b16 %v878, %v877
        %v887 = vpack.c.b16 %v880, %v879
        %v888 = vpack.c.b16 %v882, %v881
        %v889 = vpack.c.b16 %v884, %v883
        %v890 = vpack.c.b16 %v885, %v885
        %vm891 = vcmask 261120
        %v893 = vsel %vm891, %v886, 0
        %v896 = vsel %vm891, %v887, 0
        %v899 = vsel %vm891, %v888, 0
        %v902 = vsel %vm891, %v889, 0
        %v905 = vsel %vm891, %v890, 0
        %907 = vmatprep.subr.bf16.mxu0 %v847
        %908 = vmatpush1.bf16.msra.mxu0 %v846
        %909 = vmatprep.subr.bf16.mxu0 %v849
        %910 = vmatpush1.bf16.msra.mxu0 %v848
        %911 = vmatprep.subr.bf16.mxu0 0
        %912 = vmatpush1.bf16.msra.mxu0 0
        %913 = vmatprep.subr.bf16.mxu0 0
        %914 = vmatpush1.bf16.msra.mxu0 0
        %915 = vmatprep.subr.bf16.mxu0 0
        %916 = vmatpush1.bf16.msra.mxu0 0
        %917 = vmatprep.subr.bf16.mxu0 0
        %918 = vmatpush1.bf16.msra.mxu0 0
        %919 = vmatprep.subr.bf16.mxu0 0
        %920 = vmatpush1.bf16.msra.mxu0 0
        %921 = vmatprep.subr.bf16.mxu0 0
        %922 = vmatpush1.bf16.msra.mxu0 0
        %923 = vmatprep.subr.bf16.mxu0 0
        %924 = vmatpush1.bf16.msra.mxu0 0
        %925 = vmatprep.subr.bf16.mxu0 0
        %926 = vmatpush1.bf16.msra.mxu0 0
        %927 = vmatprep.subr.bf16.mxu0 0
        %928 = vmatpush1.bf16.msra.mxu0 0
        %929 = vmatprep.subr.bf16.mxu0 0
        %930 = vmatpush1.bf16.msra.mxu0 0
        %931 = vmatprep.subr.bf16.mxu0 0
        %932 = vmatpush1.bf16.msra.mxu0 0
        %933 = vmatprep.subr.bf16.mxu0 0
        %934 = vmatpush1.bf16.msra.mxu0 0
        %935 = vmatprep.subr.bf16.mxu0 0
        %936 = vmatpush1.bf16.msra.mxu0 0
        %937 = vmatprep.subr.bf16.mxu0 0
        %938 = vmatpush1.bf16.msra.mxu0 0
        %939 = vmatprep.mubr.bf16.mxu0 0
        %940 = vmatmul.mubr.bf16.gmra.mrb[0].mxu0 %v893
        %v941 = vpop.f32.mrb[0].mxu0
        %v942 = vadd.f32 0.0, %v941
        %v943 = vpop.f32.mrb[0].mxu0
        %v944 = vadd.f32 0.0, %v943
        %v945 = vpop.f32.mrb[0].mxu0
        %v946 = vadd.f32 0.0, %v945
        %v947 = vpop.f32.mrb[0].mxu0
        %v948 = vadd.f32 0.0, %v947
        %949 = vmatprep.mubr.bf16.mxu0 0
        %950 = vmatmul.mubr.bf16.gmra.mrb[0].mxu0 %v896
        %v951 = vpop.f32.mrb[0].mxu0
        %v952 = vadd.f32 0.0, %v951
        %v953 = vpop.f32.mrb[0].mxu0
        %v954 = vadd.f32 0.0, %v953
        %v955 = vpop.f32.mrb[0].mxu0
        %v956 = vadd.f32 0.0, %v955
        %v957 = vpop.f32.mrb[0].mxu0
        %v958 = vadd.f32 0.0, %v957
        %959 = vmatprep.mubr.bf16.mxu0 0
        %960 = vmatmul.mubr.bf16.gmra.mrb[0].mxu0 %v899
        %v961 = vpop.f32.mrb[0].mxu0
        %v962 = vadd.f32 0.0, %v961
        %v963 = vpop.f32.mrb[0].mxu0
        %v964 = vadd.f32 0.0, %v963
        %v965 = vpop.f32.mrb[0].mxu0
        %v966 = vadd.f32 0.0, %v965
        %v967 = vpop.f32.mrb[0].mxu0
        %v968 = vadd.f32 0.0, %v967
        %969 = vmatprep.mubr.bf16.mxu0 0
        %970 = vmatmul.mubr.bf16.gmra.mrb[0].mxu0 %v902
        %v971 = vpop.f32.mrb[0].mxu0
        %v972 = vadd.f32 0.0, %v971
        %v973 = vpop.f32.mrb[0].mxu0
        %v974 = vadd.f32 0.0, %v973
        %v975 = vpop.f32.mrb[0].mxu0
        %v976 = vadd.f32 0.0, %v975
        %v977 = vpop.f32.mrb[0].mxu0
        %v978 = vadd.f32 0.0, %v977
        %979 = vmatprep.mubr.bf16.mxu0 0
        %980 = vmatmul.mubr.bf16.gmra.mrb[0].mxu0 %v905
        %v981 = vpop.f32.mrb[0].mxu0
        %v982 = vadd.f32 0.0, %v981
        %v983 = vpop.f32.mrb[0].mxu0
        %v984 = vadd.f32 0.0, %v983
        %v985 = vpop.f32.mrb[0].mxu0
        %v986 = vpop.f32.mrb[0].mxu0
        %987 = vdwg.mxu0
        %v997 = vunpack.c.l.b16 %v850
        %v998 = vunpack.c.l.b16 %v851
        %v999 = vunpack.c.l.b16 %v852
        %v1000 = vunpack.c.l.b16 %v853
        %v1001 = vunpack.c.l.b16 %v854
        %v1002 = vunpack.c.l.b16 %v855
        %v1003 = vunpack.c.l.b16 %v856
        %v1004 = vunpack.c.l.b16 %v857
        %v1005 = vunpack.c.l.b16 %v858
        %v1006 = vpack.c.b16 %v998, %v997
        %v1007 = vpack.c.b16 %v1000, %v999
        %v1008 = vpack.c.b16 %v1002, %v1001
        %v1009 = vpack.c.b16 %v1004, %v1003
        %v1010 = vpack.c.b16 %v1005, %v1005
        %v1013 = vunpack.c.l.s4 1983009808
        %v1014 = vunpack.c.0.s8 %v1013
        %v1015 = vlaneseq
        %v1016 = vshrl.u32 %v1015, 7
        %v1017 = vsub.s32 %v1014, %v1016
        %v1018 = vrot.slane %v506, %v1017
        %v1019 = vcombine.high %v1018, %v1018
        %v1021 = vsel %vm652, %v1006, 0
        %v1024 = vsel %vm652, %v1007, 0
        %v1027 = vsel %vm652, %v1008, 0
        %v1030 = vsel %vm652, %v1009, 0
        %v1033 = vsel %vm652, %v1010, 0
        %v1036 = vsel %vm659, %v1018, 0
        %v1039 = vsel %vm659, %v1019, 0
        %1041 = vmatprep.subr.bf16.mxu0 %v1039
        %1042 = vmatpush1.bf16.msra.mxu0 %v1036
        %1043 = vmatprep.subr.bf16.mxu0 0
        %1044 = vmatpush1.bf16.msra.mxu0 0
        %1045 = vmatprep.subr.bf16.mxu0 0
        %1046 = vmatpush1.bf16.msra.mxu0 0
        %1047 = vmatprep.subr.bf16.mxu0 0
        %1048 = vmatpush1.bf16.msra.mxu0 0
        %1049 = vmatprep.subr.bf16.mxu0 0
        %1050 = vmatpush1.bf16.msra.mxu0 0
        %1051 = vmatprep.subr.bf16.mxu0 0
        %1052 = vmatpush1.bf16.msra.mxu0 0
        %1053 = vmatprep.subr.bf16.mxu0 0
        %1054 = vmatpush1.bf16.msra.mxu0 0
        %1055 = vmatprep.subr.bf16.mxu0 0
        %1056 = vmatpush1.bf16.msra.mxu0 0
        %1057 = vmatprep.subr.bf16.mxu0 0
        %1058 = vmatpush1.bf16.msra.mxu0 0
        %1059 = vmatprep.subr.bf16.mxu0 0
        %1060 = vmatpush1.bf16.msra.mxu0 0
        %1061 = vmatprep.subr.bf16.mxu0 0
        %1062 = vmatpush1.bf16.msra.mxu0 0
        %1063 = vmatprep.subr.bf16.mxu0 0
        %1064 = vmatpush1.bf16.msra.mxu0 0
        %1065 = vmatprep.subr.bf16.mxu0 0
        %1066 = vmatpush1.bf16.msra.mxu0 0
        %1067 = vmatprep.subr.bf16.mxu0 0
        %1068 = vmatpush1.bf16.msra.mxu0 0
        %1069 = vmatprep.subr.bf16.mxu0 0
        %1070 = vmatpush1.bf16.msra.mxu0 0
        %1071 = vmatprep.subr.bf16.mxu0 0
        %1072 = vmatpush1.bf16.msra.mxu0 0
        %1073 = vmatprep.mubr.bf16.mxu0 0
        %1074 = vmatmul.mubr.bf16.gmra.mrb[0].mxu0 %v1021
        %v1075 = vpop.f32.mrb[0].mxu0
        %v1076 = vadd.f32 %v942, %v1075
        %v1077 = vpop.f32.mrb[0].mxu0
        %v1078 = vadd.f32 %v944, %v1077
        %v1079 = vpop.f32.mrb[0].mxu0
        %v1080 = vadd.f32 %v946, %v1079
        %v1081 = vpop.f32.mrb[0].mxu0
        %v1082 = vadd.f32 %v948, %v1081
        %1083 = vmatprep.mubr.bf16.mxu0 0
        %1084 = vmatmul.mubr.bf16.gmra.mrb[0].mxu0 %v1024
        %v1085 = vpop.f32.mrb[0].mxu0
        %v1086 = vadd.f32 %v952, %v1085
        %v1087 = vpop.f32.mrb[0].mxu0
        %v1088 = vadd.f32 %v954, %v1087
        %v1089 = vpop.f32.mrb[0].mxu0
        %v1090 = vadd.f32 %v956, %v1089
        %v1091 = vpop.f32.mrb[0].mxu0
        %v1092 = vadd.f32 %v958, %v1091
        %1093 = vmatprep.mubr.bf16.mxu0 0
        %1094 = vmatmul.mubr.bf16.gmra.mrb[0].mxu0 %v1027
        %v1095 = vpop.f32.mrb[0].mxu0
        %v1096 = vadd.f32 %v962, %v1095
        %v1097 = vpop.f32.mrb[0].mxu0
        %v1098 = vadd.f32 %v964, %v1097
        %v1099 = vpop.f32.mrb[0].mxu0
        %v1100 = vadd.f32 %v966, %v1099
        %v1101 = vpop.f32.mrb[0].mxu0
        %v1102 = vadd.f32 %v968, %v1101
        %1103 = vmatprep.mubr.bf16.mxu0 0
        %1104 = vmatmul.mubr.bf16.gmra.mrb[0].mxu0 %v1030
        %v1105 = vpop.f32.mrb[0].mxu0
        %v1106 = vadd.f32 %v972, %v1105
        %v1107 = vpop.f32.mrb[0].mxu0
        %v1108 = vadd.f32 %v974, %v1107
        %v1109 = vpop.f32.mrb[0].mxu0
        %v1110 = vadd.f32 %v976, %v1109
        %v1111 = vpop.f32.mrb[0].mxu0
        %v1112 = vadd.f32 %v978, %v1111
        %1113 = vmatprep.mubr.bf16.mxu0 0
        %1114 = vmatmul.mubr.bf16.gmra.mrb[0].mxu0 %v1033
        %v1115 = vpop.f32.mrb[0].mxu0
        %v1116 = vadd.f32 %v982, %v1115
        %v1117 = vpop.f32.mrb[0].mxu0
        %v1118 = vadd.f32 %v984, %v1117
        %v1119 = vpop.f32.mrb[0].mxu0
        %v1120 = vpop.f32.mrb[0].mxu0
        %1121 = vdwg.mxu0
        %1122 = vrot.lane.b32.xlu0 %v1076, 17
        %v1123 = vpop.permute.xlu0 %1122
        %1124 = vrot.lane.b32.xlu0 %v1078, 17
        %v1125 = vpop.permute.xlu0 %1124
        %v1126 = vlaneseq
        %v1127 = vand.u32 %v1126, 127
        %vm1128 = vcmp.lt.s32.totalorder %v1127, 17
        %v1129 = vsel %vm1128, %v1123, %v1125
        %v1130 = vsel %vm1128, %v1125, %v1123
        %v1131 = vld [vmem:[#allocation17] sm:$0x3]
        %v1133 = vlaneseq
        %v1134 = vshrl.u32 %v1133, 7
        %v1135 = vsub.s32 0, %v1134
        %v1136 = vrot.slane %v1131, %v1135
        %v1137 = vlaneseq
        %v1138 = vshrl.u32 %v1137, 7
        %v1139 = vsub.s32 1, %v1138
        %v1140 = vrot.slane %v1131, %v1139
        %v1143 = vmul.f32 %v1130, %v1136
        %v1144 = vmul.f32 %v1129, %v1140
        %v1145 = vadd.f32 %v1096, %v1143
        %v1146 = vadd.f32 %v1098, %v1144
        %1147 = vrot.lane.b32.xlu0 %v1080, 16
        %v1148 = vpop.permute.xlu0 %1147
        %1149 = vrot.lane.b32.xlu0 %v1082, 16
        %v1150 = vpop.permute.xlu0 %1149
        %vm1151 = vcmp.lt.s32.totalorder %v1127, 16
        %v1152 = vsel %vm1151, %v1148, %v1150
        %v1153 = vsel %vm1151, %v1150, %v1148
        %s1154 = scalar_lea.vmem [#allocation17], 2
        %v1155 = vld [vmem:[%s1154] sm:$0x3]
        %v1157 = vlaneseq
        %v1158 = vshrl.u32 %v1157, 7
        %v1159 = vsub.s32 0, %v1158
        %v1160 = vrot.slane %v1155, %v1159
        %v1161 = vlaneseq
        %v1162 = vshrl.u32 %v1161, 7
        %v1163 = vsub.s32 1, %v1162
        %v1164 = vrot.slane %v1155, %v1163
        %v1167 = vmul.f32 %v1153, %v1160
        %v1168 = vmul.f32 %v1152, %v1164
        %v1169 = vadd.f32 %v1145, %v1167
        %v1170 = vadd.f32 %v1146, %v1168
        %1171 = vrot.lane.b32.xlu0 %v1086, 15
        %v1172 = vpop.permute.xlu0 %1171
        %1173 = vrot.lane.b32.xlu0 %v1088, 15
        %v1174 = vpop.permute.xlu0 %1173
        %vm1175 = vcmp.lt.s32.totalorder %v1127, 15
        %v1176 = vsel %vm1175, %v1172, %v1174
        %v1177 = vsel %vm1175, %v1174, %v1172
        %s1178 = scalar_lea.vmem [#allocation17], 4
        %v1179 = vld [vmem:[%s1178] sm:$0x3]
        %v1181 = vlaneseq
        %v1182 = vshrl.u32 %v1181, 7
        %v1183 = vsub.s32 0, %v1182
        %v1184 = vrot.slane %v1179, %v1183
        %v1185 = vlaneseq
        %v1186 = vshrl.u32 %v1185, 7
        %v1187 = vsub.s32 1, %v1186
        %v1188 = vrot.slane %v1179, %v1187
        %v1191 = vmul.f32 %v1177, %v1184
        %v1192 = vmul.f32 %v1176, %v1188
        %v1193 = vadd.f32 %v1169, %v1191
        %v1194 = vadd.f32 %v1170, %v1192
        %1195 = vrot.lane.b32.xlu0 %v1090, 1
        %v1196 = vpop.permute.xlu0 %1195
        %1197 = vrot.lane.b32.xlu0 %v1092, 1
        %v1198 = vpop.permute.xlu0 %1197
        %vm1199 = vcmp.lt.s32.totalorder %v1127, 1
        %v1200 = vsel %vm1199, %v1196, %v1198
        %v1201 = vsel %vm1199, %v1198, %v1196
        %s1202 = scalar_lea.vmem [#allocation17], 6
        %v1203 = vld [vmem:[%s1202] sm:$0x3]
        %v1205 = vlaneseq
        %v1206 = vshrl.u32 %v1205, 7
        %v1207 = vsub.s32 0, %v1206
        %v1208 = vrot.slane %v1203, %v1207
        %v1209 = vlaneseq
        %v1210 = vshrl.u32 %v1209, 7
        %v1211 = vsub.s32 1, %v1210
        %v1212 = vrot.slane %v1203, %v1211
        %v1215 = vmul.f32 %v1201, %v1208
        %v1216 = vmul.f32 %v1200, %v1212
        %v1217 = vadd.f32 %v1193, %v1215
        %v1218 = vadd.f32 %v1194, %v1216
        %1219 = vrot.lane.b32.xlu0 %v1100, 127
        %v1220 = vpop.permute.xlu0 %1219
        %1221 = vrot.lane.b32.xlu0 %v1102, 127
        %v1222 = vpop.permute.xlu0 %1221
        %vm1223 = vcmp.lt.s32.totalorder %v1127, 127
        %v1224 = vsel %vm1223, %v1220, %v1222
        %v1225 = vsel %vm1223, %v1222, %v1220
        %s1226 = scalar_lea.vmem [#allocation17], 10
        %v1227 = vld [vmem:[%s1226] sm:$0x3]
        %v1229 = vlaneseq
        %v1230 = vshrl.u32 %v1229, 7
        %v1231 = vsub.s32 0, %v1230
        %v1232 = vrot.slane %v1227, %v1231
        %v1233 = vlaneseq
        %v1234 = vshrl.u32 %v1233, 7
        %v1235 = vsub.s32 1, %v1234
        %v1236 = vrot.slane %v1227, %v1235
        %v1239 = vmul.f32 %v1224, %v1232
        %v1240 = vmul.f32 %v1225, %v1236
        %v1241 = vadd.f32 %v1217, %v1239
        %v1242 = vadd.f32 %v1218, %v1240
        %1243 = vrot.lane.b32.xlu0 %v1106, 113
        %v1244 = vpop.permute.xlu0 %1243
        %1245 = vrot.lane.b32.xlu0 %v1108, 113
        %v1246 = vpop.permute.xlu0 %1245
        %vm1247 = vcmp.lt.s32.totalorder %v1127, 113
        %v1248 = vsel %vm1247, %v1244, %v1246
        %v1249 = vsel %vm1247, %v1246, %v1244
        %s1250 = scalar_lea.vmem [#allocation17], 12
        %v1251 = vld [vmem:[%s1250] sm:$0x3]
        %v1253 = vlaneseq
        %v1254 = vshrl.u32 %v1253, 7
        %v1255 = vsub.s32 0, %v1254
        %v1256 = vrot.slane %v1251, %v1255
        %v1257 = vlaneseq
        %v1258 = vshrl.u32 %v1257, 7
        %v1259 = vsub.s32 1, %v1258
        %v1260 = vrot.slane %v1251, %v1259
        %v1263 = vmul.f32 %v1248, %v1256
        %v1264 = vmul.f32 %v1249, %v1260
        %v1265 = vadd.f32 %v1241, %v1263
        %v1266 = vadd.f32 %v1242, %v1264
        %1267 = vrot.lane.b32.xlu0 %v1110, 112
        %v1268 = vpop.permute.xlu0 %1267
        %1269 = vrot.lane.b32.xlu0 %v1112, 112
        %v1270 = vpop.permute.xlu0 %1269
        %vm1271 = vcmp.lt.s32.totalorder %v1127, 112
        %v1272 = vsel %vm1271, %v1268, %v1270
        %v1273 = vsel %vm1271, %v1270, %v1268
        %s1274 = scalar_lea.vmem [#allocation17], 14
        %v1275 = vld [vmem:[%s1274] sm:$0x3]
        %v1277 = vlaneseq
        %v1278 = vshrl.u32 %v1277, 7
        %v1279 = vsub.s32 0, %v1278
        %v1280 = vrot.slane %v1275, %v1279
        %v1281 = vlaneseq
        %v1282 = vshrl.u32 %v1281, 7
        %v1283 = vsub.s32 1, %v1282
        %v1284 = vrot.slane %v1275, %v1283
        %v1287 = vmul.f32 %v1272, %v1280
        %v1288 = vmul.f32 %v1273, %v1284
        %v1289 = vadd.f32 %v1265, %v1287
        %v1290 = vadd.f32 %v1266, %v1288
        %1291 = vrot.lane.b32.xlu0 %v1116, 111
        %v1292 = vpop.permute.xlu0 %1291
        %1293 = vrot.lane.b32.xlu0 %v1118, 111
        %v1294 = vpop.permute.xlu0 %1293
        %vm1295 = vcmp.lt.s32.totalorder %v1127, 111
        %v1296 = vsel %vm1295, %v1292, %v1294
        %v1297 = vsel %vm1295, %v1294, %v1292
        %s1298 = scalar_lea.vmem [#allocation17], 16
        %v1299 = vld [vmem:[%s1298] sm:$0x3]
        %v1301 = vlaneseq
        %v1302 = vshrl.u32 %v1301, 7
        %v1303 = vsub.s32 0, %v1302
        %v1304 = vrot.slane %v1299, %v1303
        %v1305 = vlaneseq
        %v1306 = vshrl.u32 %v1305, 7
        %v1307 = vsub.s32 1, %v1306
        %v1308 = vrot.slane %v1299, %v1307
        %v1311 = vmul.f32 %v1296, %v1304
        %v1312 = vmul.f32 %v1297, %v1308
        %v1313 = vadd.f32 %v1289, %v1311
        %v1314 = vadd.f32 %v1290, %v1312
        %v1315 = vld [vmem:[#allocation16] sm:$0xff]
        %1317 = vset.pattern.permute.xlu0 0
        %1318 = vperm.xlu0 %1317, %v1315
        %v1319 = vpop.permute.xlu0 %1318
        %v1321 = vadd.f32 %v1313, %v1319
        %v1322 = vadd.f32 %v1314, %v1319
        %v1323 = vmax.f32 %v1321, 0.0
        %v1324 = vmax.f32 %v1322, 0.0
        %1325 = vst [vmem:[%s504] sm:$0xff] %v1323
        %1326 = vst [vmem:[%s504 + $0x8] sm:$0xff] %v1324
        %s1327 = sand.u32 %s255, 1
        %s1328 = scalar_lea.sflag [#allocation4], %s1327
        %s1329 = sand.u32 %s255, 1
        %s1330 = smul.addr %s1329, 16
        %s1331 = scalar_lea.vmem [#allocation19], %s1330
        // Predicated region
        $region101: #{tpu_custom_call.1} parent=59 // pred_check
          %p1332 = pneg %p265
        $region102: #{tpu_custom_call.1} parent=59 // pred_check_branch
          %1334 = sbr.rel (%p1332) target = $region104
        $region103: #{tpu_custom_call.1} parent=59 // pred_region
          %s1336 = ssub.s32 256, 256
          %1337 = vsyncadd %s1328, %s1336
          %s1338 = smul.addr %s32, 2
          %s1339 = smul.addr %s1338, 128
          %s1340 = scalar_lea.hbm %s10, %s1339
          %s1342 = sshll.u32 %s1331, 4
          %s1343 = int_to_ptr.vmem [resolvable:$true] %s1342
          %1345 = dma.vmem_to_hbm [thread:$0]  %s1343, 256, %s1340, %s1328
        $region104: #{tpu_custom_call.1} parent=59 // pred_fallthru
          _
      $region60: #{tpu_custom_call.1} parent=5 // pred_fallthru
        _
      %p1346 = scmp.le.s32.totalorder 2, %s27
      // Predicated region
      $region105: #{tpu_custom_call.1} parent=5 // pred_check
        %p1347 = pneg %p1346
      $region106: #{tpu_custom_call.1} parent=5 // pred_check_branch
        %1349 = sbr.rel (%p1347) target = $region108
      $region107: #{tpu_custom_call.1} parent=5 // pred_region
        %s1350 = ssub.s32 %s27, 2
        // Predicated region
        $region109: #{tpu_custom_call.1} parent=107 // pred_check
          %p1351 = pneg %p271
        $region110: #{tpu_custom_call.1} parent=107 // pred_check_branch
          %1353 = sbr.rel (%p1351) target = $region112
        $region111: #{tpu_custom_call.1} parent=107 // pred_region
          %s1354 = sand.u32 %s256, 1
          %s1355 = scalar_lea.sflag [#allocation4], %s1354
          %s1356 = sand.u32 %s256, 1
          %s1357 = smul.addr %s1356, 16
          %s1358 = scalar_lea.vmem [#allocation19], %s1357
          %1359 = dma.done %s1355, 256
        $region112: #{tpu_custom_call.1} parent=107 // pred_fallthru
          _
      $region108: #{tpu_custom_call.1} parent=5 // pred_fallthru
        _
    $region6: #{tpu_custom_call.1} parent=1 // loop_footer
      %s31 = sadd.s32 1, %s27
    $region7: #{tpu_custom_call.1} parent=1 // loop_footer_branch
      %26 = sbr.rel target = $region3
    $region8: #{tpu_custom_call.1} parent=1 // loop_exit
      _
    %1360 = vsyncpa [#allocation3], 1
    %s1361 = scalar_lea.sflag [#allocation3], 1
    %1362 = vsyncpa %s1361, 1
    %1363 = vsyncpa [#allocation6], 1
    %1364 = vsyncpa [#allocation9], 1
    %1365 = vsyncpa [#allocation12], 1
    %1366 = vsyncpa [#allocation15], 1
    %1367 = vsyncpa [#allocation18], 1
    %1368 = vsyncpa [#allocation4], 1
    %s1369 = scalar_lea.sflag [#allocation4], 1
    %1370 = vsyncpa %s1369, 1

// kernel: tpu_custom_call.1
$region0: #{tpu_custom_call.1}
  #allocation0 [shape = 'u32[]', space=smem, size = 0x4, offset = 0x4, fixed_abs, tag = 'smem constant byte address 0x4 - core index']
  #allocation1 [shape = 'u32[144,128]{1,0:T(1,128)}', space=vmem, size = 0x12000, scoped, tag = 'internal scratch']
  %s0 = inlined_call_operand.hbm [shape: bf16[2,4,256], index: 0, kind: input, shape index: {}]
  %s1 = inlined_call_operand.hbm [shape: f32[256,50], index: 1, kind: input, shape index: {}]
  %s2 = inlined_call_operand.hbm [shape: bf16[32,4], index: 2, kind: input, shape index: {}]
  %s3 = inlined_call_operand.hbm [shape: f32[32,1], index: 3, kind: input, shape index: {}]
  %s4 = inlined_call_operand.hbm [shape: f32[32,50], index: 4, kind: input, shape index: {}]
  %s5 = inlined_call_operand.hbm [shape: f32[50,256], index: 5, kind: input, shape index: {}]
  %s6 = inlined_call_operand.hbm [shape: bf16[72,4], index: 6, kind: input, shape index: {}]
  %s7 = inlined_call_operand.hbm [shape: bf16[72,32], index: 7, kind: input, shape index: {}]
  %s8 = inlined_call_operand.hbm [shape: f32[8,1], index: 8, kind: input, shape index: {}]
  %s9 = inlined_call_operand.hbm [shape: f32[9,1,256], index: 9, kind: input, shape index: {}]
  %s10 = inlined_call_operand.hbm [shape: f32[2,8,256], index: 10, kind: output, shape index: {}]
  %s11 = sld [smem:[#allocation0]]
  $region113: #{tpu_custom_call.1} parent=0
    _
  %s13 = ssub.s32 1, %s11
  %s14 = scalar_select 0, %s13, %s11
  $region1: #{tpu_custom_call.1} parent=0
    #allocation2 [shape = 'u8[4096]{0}', space=vmem, size = 0x1000, scoped, tag = 'input window, operand 0']
    #allocation3 [shape = 's32[2]{0}', space=sflag, size = 0x8, scoped, tag = 'scoped memory for tpu_custom_call.1']
    #allocation4 [shape = 's32[2]{0}', space=sflag, size = 0x8, scoped, tag = 'scoped memory for tpu_custom_call.1']
    #allocation5 [shape = 'u8[131072]{0}', space=vmem, size = 0x20000, scoped, tag = 'input window, operand 1, single buffered']
    #allocation6 [shape = 's32[1]{0}', space=sflag, size = 0x4, scoped, tag = 'scoped memory for tpu_custom_call.1']
    #allocation7 [shape = 'u8[8192]{0}', space=vmem, size = 0x2000, scoped, tag = 'input window, operand 2, single buffered']
    #allocation8 [shape = 'u8[16384]{0}', space=vmem, size = 0x4000, scoped, tag = 'input window, operand 3, single buffered']
    #allocation9 [shape = 's32[1]{0}', space=sflag, size = 0x4, scoped, tag = 'scoped memory for tpu_custom_call.1']
    #allocation10 [shape = 'u8[16384]{0}', space=vmem, size = 0x4000, scoped, tag = 'input window, operand 4, single buffered']
    #allocation11 [shape = 'u8[57344]{0}', space=vmem, size = 0xe000, scoped, tag = 'input window, operand 5, single buffered']
    #allocation12 [shape = 's32[1]{0}', space=sflag, size = 0x4, scoped, tag = 'scoped memory for tpu_custom_call.1']
    #allocation13 [shape = 'u8[18432]{0}', space=vmem, size = 0x4800, scoped, tag = 'input window, operand 6, single buffered']
    #allocation14 [shape = 'u8[18432]{0}', space=vmem, size = 0x4800, scoped, tag = 'input window, operand 7, single buffered']
    #allocation15 [shape = 's32[1]{0}', space=sflag, size = 0x4, scoped, tag = 'scoped memory for tpu_custom_call.1']
    #allocation16 [shape = 'u8[4096]{0}', space=vmem, size = 0x1000, scoped, tag = 'input window, operand 8, single buffered']
    #allocation17 [shape = 'u8[9216]{0}', space=vmem, size = 0x2400, scoped, tag = 'input window, operand 9, single buffered']
    #allocation18 [shape = 's32[1]{0}', space=sflag, size = 0x4, scoped, tag = 'scoped memory for tpu_custom_call.1']
    #allocation19 [shape = 'u8[16384]{0}', space=vmem, size = 0x4000, scoped, tag = 'output window, operand 0']
    %15 = vsyncpa [#allocation3], 0
    %s16 = scalar_lea.sflag [#allocation3], 1
    %17 = vsyncpa %s16, 0
    %18 = vsyncpa [#allocation6], 0
    %19 = vsyncpa [#allocation9], 0
    %20 = vsyncpa [#allocation12], 0
    %21 = vsyncpa [#allocation15], 0
    %22 = vsyncpa [#allocation18], 0
    %23 = vsyncpa [#allocation4], 0
    %s24 = scalar_lea.sflag [#allocation4], 1
    %25 = vsyncpa %s24, 0
    loop: start=0, step=1, limit=4
    $region2: #{tpu_custom_call.1} parent=1 // loop_pre_header
      _
    $region3: #{tpu_custom_call.1} parent=1 // loop_header
      %s27 = sphi 0, %s31
      %p28 = scmp.ge.s32.totalorder %s27, 4
      %s37 = sphi 0, %s39
      %s40 = sphi 0, %s37
      %s41 = sphi 0, %s40
      %s57 = sphi 0, %s41
      %s61 = sphi 0, %s61
      %s63 = sphi 0, %s61
      %s64 = sphi 0, %s63
      %s78 = sphi 0, %s64
      %s82 = sphi 0, %s82
      %s84 = sphi 0, %s82
      %s85 = sphi 0, %s84
      %s99 = sphi 0, %s85
      %s103 = sphi 0, %s103
      %s105 = sphi 0, %s103
      %s106 = sphi 0, %s105
      %s120 = sphi 0, %s106
      %s124 = sphi 0, %s124
      %s126 = sphi 0, %s124
      %s127 = sphi 0, %s126
      %s141 = sphi 0, %s127
      %s145 = sphi 0, %s145
      %s147 = sphi 0, %s145
      %s148 = sphi 0, %s147
      %s162 = sphi 0, %s148
      %s166 = sphi 0, %s166
      %s168 = sphi 0, %s166
      %s169 = sphi 0, %s168
      %s183 = sphi 0, %s169
      %s187 = sphi 0, %s187
      %s189 = sphi 0, %s187
      %s190 = sphi 0, %s189
      %s204 = sphi 0, %s190
      %s208 = sphi 0, %s208
      %s210 = sphi 0, %s208
      %s211 = sphi 0, %s210
      %s225 = sphi 0, %s211
      %s229 = sphi 0, %s229
      %s231 = sphi 0, %s229
      %s232 = sphi 0, %s231
      %s246 = sphi 0, %s232
      %s252 = sphi 0, %s254
      %s255 = sphi 0, %s252
      %s256 = sphi 0, %s255
      %s272 = sphi 0, %s256
    $region4: #{tpu_custom_call.1} parent=1 // loop_header_branch
      %30 = sbr.rel (%p28) target = $region8
    $region5: #{tpu_custom_call.1} parent=1 // loop_body
      %s32 = ssub.s32 %s27, 1
      %s33 = ssub.s32 %s27, 2
      %s34 = sadd.s32 %s27, 1
      %s35 = ssub.s32 %s27, %s34
      %p36 = scmp.eq.s32.totalorder %s35, 0
      %s38 = sadd.s32 %s37, 1
      %s39 = scalar_select %p36, %s37, %s38
      %p42 = pneg %p36
      %p43 = scmp.eq.s32.totalorder %s27, 1
      %p44 = por %p42, %p43
      %p45 = scmp.ne.s32.totalorder %s37, %s40
      %p46 = scmp.eq.s32.totalorder %s27, 0
      %p47 = por %p45, %p46
      %p48 = scmp.ne.s32.totalorder %s37, %s40
      %p49 = scmp.eq.s32.totalorder %s32, 1
      %p50 = por %p48, %p49
      %p51 = scmp.ne.s32.totalorder %s40, %s41
      %p52 = scmp.eq.s32.totalorder %s32, 0
      %p53 = por %p51, %p52
      %p54 = scmp.ne.s32.totalorder %s40, %s41
      %p55 = scmp.eq.s32.totalorder %s33, 1
      %p56 = por %p54, %p55
      %p58 = scmp.ne.s32.totalorder %s41, %s57
      %p59 = scmp.eq.s32.totalorder %s33, 0
      %p60 = por %p58, %p59
      %s62 = sadd.s32 %s61, 1
      %p65 = scmp.eq.s32.totalorder %s27, 1
      %p66 = scmp.ne.s32.totalorder %s61, %s63
      %p67 = scmp.eq.s32.totalorder %s27, 0
      %p68 = por %p66, %p67
      %p69 = scmp.ne.s32.totalorder %s61, %s63
      %p70 = scmp.eq.s32.totalorder %s32, 1
      %p71 = por %p69, %p70
      %p72 = scmp.ne.s32.totalorder %s63, %s64
      %p73 = scmp.eq.s32.totalorder %s32, 0
      %p74 = por %p72, %p73
      %p75 = scmp.ne.s32.totalorder %s63, %s64
      %p76 = scmp.eq.s32.totalorder %s33, 1
      %p77 = por %p75, %p76
      %p79 = scmp.ne.s32.totalorder %s64, %s78
      %p80 = scmp.eq.s32.totalorder %s33, 0
      %p81 = por %p79, %p80
      %s83 = sadd.s32 %s82, 1
      %p86 = scmp.eq.s32.totalorder %s27, 1
      %p87 = scmp.ne.s32.totalorder %s82, %s84
      %p88 = scmp.eq.s32.totalorder %s27, 0
      %p89 = por %p87, %p88
      %p90 = scmp.ne.s32.totalorder %s82, %s84
      %p91 = scmp.eq.s32.totalorder %s32, 1
      %p92 = por %p90, %p91
      %p93 = scmp.ne.s32.totalorder %s84, %s85
      %p94 = scmp.eq.s32.totalorder %s32, 0
      %p95 = por %p93, %p94
      %p96 = scmp.ne.s32.totalorder %s84, %s85
      %p97 = scmp.eq.s32.totalorder %s33, 1
      %p98 = por %p96, %p97
      %p100 = scmp.ne.s32.totalorder %s85, %s99
      %p101 = scmp.eq.s32.totalorder %s33, 0
      %p102 = por %p100, %p101
      %s104 = sadd.s32 %s103, 1
      %p107 = scmp.eq.s32.totalorder %s27, 1
      %p108 = scmp.ne.s32.totalorder %s103, %s105
      %p109 = scmp.eq.s32.totalorder %s27, 0
      %p110 = por %p108, %p109
      %p111 = scmp.ne.s32.totalorder %s103, %s105
      %p112 = scmp.eq.s32.totalorder %s32, 1
      %p113 = por %p111, %p112
      %p114 = scmp.ne.s32.totalorder %s105, %s106
      %p115 = scmp.eq.s32.totalorder %s32, 0
      %p116 = por %p114, %p115
      %p117 = scmp.ne.s32.totalorder %s105, %s106
      %p118 = scmp.eq.s32.totalorder %s33, 1
      %p119 = por %p117, %p118
      %p121 = scmp.ne.s32.totalorder %s106, %s120
      %p122 = scmp.eq.s32.totalorder %s33, 0
      %p123 = por %p121, %p122
      %s125 = sadd.s32 %s124, 1
      %p128 = scmp.eq.s32.totalorder %s27, 1
      %p129 = scmp.ne.s32.totalorder %s124, %s126
      %p130 = scmp.eq.s32.totalorder %s27, 0
      %p131 = por %p129, %p130
      %p132 = scmp.ne.s32.totalorder %s124, %s126
      %p133 = scmp.eq.s32.totalorder %s32, 1
      %p134 = por %p132, %p133
      %p135 = scmp.ne.s32.totalorder %s126, %s127
      %p136 = scmp.eq.s32.totalorder %s32, 0
      %p137 = por %p135, %p136
      %p138 = scmp.ne.s32.totalorder %s126, %s127
      %p139 = scmp.eq.s32.totalorder %s33, 1
      %p140 = por %p138, %p139
      %p142 = scmp.ne.s32.totalorder %s127, %s141
      %p143 = scmp.eq.s32.totalorder %s33, 0
      %p144 = por %p142, %p143
      %s146 = sadd.s32 %s145, 1
      %p149 = scmp.eq.s32.totalorder %s27, 1
      %p150 = scmp.ne.s32.totalorder %s145, %s147
      %p151 = scmp.eq.s32.totalorder %s27, 0
      %p152 = por %p150, %p151
      %p153 = scmp.ne.s32.totalorder %s145, %s147
      %p154 = scmp.eq.s32.totalorder %s32, 1
      %p155 = por %p153, %p154
      %p156 = scmp.ne.s32.totalorder %s147, %s148
      %p157 = scmp.eq.s32.totalorder %s32, 0
      %p158 = por %p156, %p157
      %p159 = scmp.ne.s32.totalorder %s147, %s148
      %p160 = scmp.eq.s32.totalorder %s33, 1
      %p161 = por %p159, %p160
      %p163 = scmp.ne.s32.totalorder %s148, %s162
      %p164 = scmp.eq.s32.totalorder %s33, 0
      %p165 = por %p163, %p164
      %s167 = sadd.s32 %s166, 1
      %p170 = scmp.eq.s32.totalorder %s27, 1
      %p171 = scmp.ne.s32.totalorder %s166, %s168
      %p172 = scmp.eq.s32.totalorder %s27, 0
      %p173 = por %p171, %p172
      %p174 = scmp.ne.s32.totalorder %s166, %s168
      %p175 = scmp.eq.s32.totalorder %s32, 1
      %p176 = por %p174, %p175
      %p177 = scmp.ne.s32.totalorder %s168, %s169
      %p178 = scmp.eq.s32.totalorder %s32, 0
      %p179 = por %p177, %p178
      %p180 = scmp.ne.s32.totalorder %s168, %s169
      %p181 = scmp.eq.s32.totalorder %s33, 1
      %p182 = por %p180, %p181
      %p184 = scmp.ne.s32.totalorder %s169, %s183
      %p185 = scmp.eq.s32.totalorder %s33, 0
      %p186 = por %p184, %p185
      %s188 = sadd.s32 %s187, 1
      %p191 = scmp.eq.s32.totalorder %s27, 1
      %p192 = scmp.ne.s32.totalorder %s187, %s189
      %p193 = scmp.eq.s32.totalorder %s27, 0
      %p194 = por %p192, %p193
      %p195 = scmp.ne.s32.totalorder %s187, %s189
      %p196 = scmp.eq.s32.totalorder %s32, 1
      %p197 = por %p195, %p196
      %p198 = scmp.ne.s32.totalorder %s189, %s190
      %p199 = scmp.eq.s32.totalorder %s32, 0
      %p200 = por %p198, %p199
      %p201 = scmp.ne.s32.totalorder %s189, %s190
      %p202 = scmp.eq.s32.totalorder %s33, 1
      %p203 = por %p201, %p202
      %p205 = scmp.ne.s32.totalorder %s190, %s204
      %p206 = scmp.eq.s32.totalorder %s33, 0
      %p207 = por %p205, %p206
      %s209 = sadd.s32 %s208, 1
      %p212 = scmp.eq.s32.totalorder %s27, 1
      %p213 = scmp.ne.s32.totalorder %s208, %s210
      %p214 = scmp.eq.s32.totalorder %s27, 0
      %p215 = por %p213, %p214
      %p216 = scmp.ne.s32.totalorder %s208, %s210
      %p217 = scmp.eq.s32.totalorder %s32, 1
      %p218 = por %p216, %p217
      %p219 = scmp.ne.s32.totalorder %s210, %s211
      %p220 = scmp.eq.s32.totalorder %s32, 0
      %p221 = por %p219, %p220
      %p222 = scmp.ne.s32.totalorder %s210, %s211
      %p223 = scmp.eq.s32.totalorder %s33, 1
      %p224 = por %p222, %p223
      %p226 = scmp.ne.s32.totalorder %s211, %s225
      %p227 = scmp.eq.s32.totalorder %s33, 0
      %p228 = por %p226, %p227
      %s230 = sadd.s32 %s229, 1
      %p233 = scmp.eq.s32.totalorder %s27, 1
      %p234 = scmp.ne.s32.totalorder %s229, %s231
      %p235 = scmp.eq.s32.totalorder %s27, 0
      %p236 = por %p234, %p235
      %p237 = scmp.ne.s32.totalorder %s229, %s231
      %p238 = scmp.eq.s32.totalorder %s32, 1
      %p239 = por %p237, %p238
      %p240 = scmp.ne.s32.totalorder %s231, %s232
      %p241 = scmp.eq.s32.totalorder %s32, 0
      %p242 = por %p240, %p241
      %p243 = scmp.ne.s32.totalorder %s231, %s232
      %p244 = scmp.eq.s32.totalorder %s33, 1
      %p245 = por %p243, %p244
      %p247 = scmp.ne.s32.totalorder %s232, %s246
      %p248 = scmp.eq.s32.totalorder %s33, 0
      %p249 = por %p247, %p248
      %s250 = ssub.s32 %s27, %s34
      %p251 = scmp.eq.s32.totalorder %s250, 0
      %s253 = sadd.s32 %s252, 1
      %s254 = scalar_select %p251, %s252, %s253
      %p257 = pneg %p251
      %p258 = scmp.eq.s32.totalorder %s27, 1
      %p259 = por %p257, %p258
      %p260 = scmp.ne.s32.totalorder %s252, %s255
      %p261 = scmp.eq.s32.totalorder %s27, 0
      %p262 = por %p260, %p261
      %p263 = scmp.ne.s32.totalorder %s252, %s255
      %p264 = scmp.eq.s32.totalorder %s32, 1
      %p265 = por %p263, %p264
      %p266 = scmp.ne.s32.totalorder %s255, %s256
      %p267 = scmp.eq.s32.totalorder %s32, 0
      %p268 = por %p266, %p267
      %p269 = scmp.ne.s32.totalorder %s255, %s256
      %p270 = scmp.eq.s32.totalorder %s33, 1
      %p271 = por %p269, %p270
      %p273 = scmp.ne.s32.totalorder %s256, %s272
      %p274 = scmp.eq.s32.totalorder %s33, 0
      %p275 = por %p273, %p274
      %p276 = scmp.le.s32.totalorder 1, %s27
      %p277 = scmp.lt.s32.totalorder %s27, 3
      %p278 = pnand %p276, %p277
      %p279 = pneg %p278
      // Predicated region
      $region9: #{tpu_custom_call.1} parent=5 // pred_check
        _
      $region10: #{tpu_custom_call.1} parent=5 // pred_check_branch
        %281 = sbr.rel (%p278) target = $region12
      $region11: #{tpu_custom_call.1} parent=5 // pred_region
        %s282 = ssub.s32 %s27, 1
        // Predicated region
        $region13: #{tpu_custom_call.1} parent=11 // pred_check
          %p283 = pneg %p74
        $region14: #{tpu_custom_call.1} parent=11 // pred_check_branch
          %285 = sbr.rel (%p283) target = $region16
        $region15: #{tpu_custom_call.1} parent=11 // pred_region
          %s287 = ssub.s32 4096, 4096
          %288 = vsyncadd [#allocation6], %s287
          %s289 = sshll.u32 [#allocation5], 4
          %s290 = int_to_ptr.vmem [resolvable:$true] %s289
          %295 = dma.hbm_to_vmem [thread:$0]  %s1, 4096, %s290, [#allocation6], 128, 128, 8
        $region16: #{tpu_custom_call.1} parent=11 // pred_fallthru
          _
        // Predicated region
        $region17: #{tpu_custom_call.1} parent=11 // pred_check
          %p296 = pneg %p95
        $region18: #{tpu_custom_call.1} parent=11 // pred_check_branch
          %298 = sbr.rel (%p296) target = $region20
        $region19: #{tpu_custom_call.1} parent=11 // pred_region
          %s300 = ssub.s32 256, 256
          %301 = vsyncadd [#allocation6], %s300
          %s302 = sshll.u32 [#allocation7], 4
          %s303 = int_to_ptr.vmem [resolvable:$true] %s302
          %308 = dma.hbm_to_vmem [thread:$0]  %s2, 256, %s303, [#allocation6], 64, 64, 4
        $region20: #{tpu_custom_call.1} parent=11 // pred_fallthru
          _
        // Predicated region
        $region21: #{tpu_custom_call.1} parent=11 // pred_check
          %p309 = pneg %p116
        $region22: #{tpu_custom_call.1} parent=11 // pred_check_branch
          %311 = sbr.rel (%p309) target = $region24
        $region23: #{tpu_custom_call.1} parent=11 // pred_region
          %s313 = ssub.s32 512, 512
          %314 = vsyncadd [#allocation9], %s313
          %s315 = sshll.u32 [#allocation8], 4
          %s316 = int_to_ptr.vmem [resolvable:$true] %s315
          %321 = dma.hbm_to_vmem [thread:$0]  %s3, 512, %s316, [#allocation9], 128, 128, 8
        $region24: #{tpu_custom_call.1} parent=11 // pred_fallthru
          _
        // Predicated region
        $region25: #{tpu_custom_call.1} parent=11 // pred_check
          %p322 = pneg %p137
        $region26: #{tpu_custom_call.1} parent=11 // pred_check_branch
          %324 = sbr.rel (%p322) target = $region28
        $region27: #{tpu_custom_call.1} parent=11 // pred_region
          %s326 = ssub.s32 512, 512
          %327 = vsyncadd [#allocation9], %s326
          %s328 = sshll.u32 [#allocation10], 4
          %s329 = int_to_ptr.vmem [resolvable:$true] %s328
          %334 = dma.hbm_to_vmem [thread:$0]  %s4, 512, %s329, [#allocation9], 128, 128, 8
        $region28: #{tpu_custom_call.1} parent=11 // pred_fallthru
          _
        // Predicated region
        $region29: #{tpu_custom_call.1} parent=11 // pred_check
          %p335 = pneg %p158
        $region30: #{tpu_custom_call.1} parent=11 // pred_check_branch
          %337 = sbr.rel (%p335) target = $region32
        $region31: #{tpu_custom_call.1} parent=11 // pred_region
          %s339 = ssub.s32 1792, 1792
          %340 = vsyncadd [#allocation12], %s339
          %s341 = sshll.u32 [#allocation11], 4
          %s342 = int_to_ptr.vmem [resolvable:$true] %s341
          %347 = dma.hbm_to_vmem [thread:$0]  %s5, 1792, %s342, [#allocation12], 256, 256, 16
        $region32: #{tpu_custom_call.1} parent=11 // pred_fallthru
          _
        // Predicated region
        $region33: #{tpu_custom_call.1} parent=11 // pred_check
          %p348 = pneg %p179
        $region34: #{tpu_custom_call.1} parent=11 // pred_check_branch
          %350 = sbr.rel (%p348) target = $region36
        $region35: #{tpu_custom_call.1} parent=11 // pred_region
          %s352 = ssub.s32 576, 576
          %353 = vsyncadd [#allocation12], %s352
          %s354 = sshll.u32 [#allocation13], 4
          %s355 = int_to_ptr.vmem [resolvable:$true] %s354
          %360 = dma.hbm_to_vmem [thread:$0]  %s6, 576, %s355, [#allocation12], 64, 64, 4
        $region36: #{tpu_custom_call.1} parent=11 // pred_fallthru
          _
        // Predicated region
        $region37: #{tpu_custom_call.1} parent=11 // pred_check
          %p361 = pneg %p200
        $region38: #{tpu_custom_call.1} parent=11 // pred_check_branch
          %363 = sbr.rel (%p361) target = $region40
        $region39: #{tpu_custom_call.1} parent=11 // pred_region
          %s365 = ssub.s32 576, 576
          %366 = vsyncadd [#allocation15], %s365
          %s367 = sshll.u32 [#allocation14], 4
          %s368 = int_to_ptr.vmem [resolvable:$true] %s367
          %373 = dma.hbm_to_vmem [thread:$0]  %s7, 576, %s368, [#allocation15], 64, 64, 4
        $region40: #{tpu_custom_call.1} parent=11 // pred_fallthru
          _
        // Predicated region
        $region41: #{tpu_custom_call.1} parent=11 // pred_check
          %p374 = pneg %p221
        $region42: #{tpu_custom_call.1} parent=11 // pred_check_branch
          %376 = sbr.rel (%p374) target = $region44
        $region43: #{tpu_custom_call.1} parent=11 // pred_region
          %s378 = ssub.s32 128, 128
          %379 = vsyncadd [#allocation15], %s378
          %s381 = sshll.u32 [#allocation16], 4
          %s382 = int_to_ptr.vmem [resolvable:$true] %s381
          %384 = dma.hbm_to_vmem [thread:$0]  %s8, 128, %s382, [#allocation15]
        $region44: #{tpu_custom_call.1} parent=11 // pred_fallthru
          _
        // Predicated region
        $region45: #{tpu_custom_call.1} parent=11 // pred_check
          %p385 = pneg %p242
        $region46: #{tpu_custom_call.1} parent=11 // pred_check_branch
          %387 = sbr.rel (%p385) target = $region48
        $region47: #{tpu_custom_call.1} parent=11 // pred_region
          %s389 = ssub.s32 288, 288
          %390 = vsyncadd [#allocation18], %s389
          %s391 = sshll.u32 [#allocation17], 4
          %s392 = int_to_ptr.vmem [resolvable:$true] %s391
          %397 = dma.hbm_to_vmem [thread:$0]  %s9, 288, %s392, [#allocation18], 32, 32, 2
        $region48: #{tpu_custom_call.1} parent=11 // pred_fallthru
          _
      $region12: #{tpu_custom_call.1} parent=5 // pred_fallthru
        _
      %p398 = scmp.lt.s32.totalorder %s27, 2
      // Predicated region
      $region49: #{tpu_custom_call.1} parent=5 // pred_check
        %p399 = pneg %p398
      $region50: #{tpu_custom_call.1} parent=5 // pred_check_branch
        %401 = sbr.rel (%p399) target = $region52
      $region51: #{tpu_custom_call.1} parent=5 // pred_region
        // Predicated region
        $region53: #{tpu_custom_call.1} parent=51 // pred_check
          %p402 = pneg %p47
        $region54: #{tpu_custom_call.1} parent=51 // pred_check_branch
          %404 = sbr.rel (%p402) target = $region56
        $region55: #{tpu_custom_call.1} parent=51 // pred_region
          %s405 = sand.u32 %s37, 1
          %s406 = scalar_lea.sflag [#allocation3], %s405
          %s407 = sand.u32 %s37, 1
          %s408 = smul.addr %s407, 4
          %s409 = scalar_lea.vmem [#allocation2], %s408
          %s411 = ssub.s32 64, 64
          %412 = vsyncadd %s406, %s411
          %s413 = smul.addr %s27, 2
          %s414 = smul.addr %s413, 32
          %s415 = scalar_lea.hbm %s0, %s414
          %s417 = sshll.u32 %s409, 4
          %s418 = int_to_ptr.vmem [resolvable:$true] %s417
          %420 = dma.hbm_to_vmem [thread:$0]  %s415, 64, %s418, %s406
        $region56: #{tpu_custom_call.1} parent=51 // pred_fallthru
          _
      $region52: #{tpu_custom_call.1} parent=5 // pred_fallthru
        _
      %p421 = scmp.le.s32.totalorder 1, %s27
      %p422 = scmp.lt.s32.totalorder %s27, 3
      %p423 = pnand %p421, %p422
      %p424 = pneg %p423
      // Predicated region
      $region57: #{tpu_custom_call.1} parent=5 // pred_check
        _
      $region58: #{tpu_custom_call.1} parent=5 // pred_check_branch
        %426 = sbr.rel (%p423) target = $region60
      $region59: #{tpu_custom_call.1} parent=5 // pred_region
        %s427 = ssub.s32 %s27, 1
        %s428 = sand.u32 %s40, 1
        %s429 = scalar_lea.sflag [#allocation3], %s428
        %s430 = sand.u32 %s40, 1
        %s431 = smul.addr %s430, 4
        %s432 = scalar_lea.vmem [#allocation2], %s431
        // Predicated region
        $region61: #{tpu_custom_call.1} parent=59 // pred_check
          %p433 = pneg %p53
        $region62: #{tpu_custom_call.1} parent=59 // pred_check_branch
          %435 = sbr.rel (%p433) target = $region64
        $region63: #{tpu_custom_call.1} parent=59 // pred_region
          %436 = dma.done %s429, 64
        $region64: #{tpu_custom_call.1} parent=59 // pred_fallthru
          _
        // Predicated region
        $region65: #{tpu_custom_call.1} parent=59 // pred_check
          %p437 = pneg %p74
        $region66: #{tpu_custom_call.1} parent=59 // pred_check_branch
          %439 = sbr.rel (%p437) target = $region68
        $region67: #{tpu_custom_call.1} parent=59 // pred_region
          %440 = dma.done [#allocation6], 4096
        $region68: #{tpu_custom_call.1} parent=59 // pred_fallthru
          _
        // Predicated region
        $region69: #{tpu_custom_call.1} parent=59 // pred_check
          %p441 = pneg %p95
        $region70: #{tpu_custom_call.1} parent=59 // pred_check_branch
          %443 = sbr.rel (%p441) target = $region72
        $region71: #{tpu_custom_call.1} parent=59 // pred_region
          %444 = dma.done [#allocation6], 256
        $region72: #{tpu_custom_call.1} parent=59 // pred_fallthru
          _
        // Predicated region
        $region73: #{tpu_custom_call.1} parent=59 // pred_check
          %p445 = pneg %p116
        $region74: #{tpu_custom_call.1} parent=59 // pred_check_branch
          %447 = sbr.rel (%p445) target = $region76
        $region75: #{tpu_custom_call.1} parent=59 // pred_region
          %448 = dma.done [#allocation9], 512
        $region76: #{tpu_custom_call.1} parent=59 // pred_fallthru
          _
        // Predicated region
        $region77: #{tpu_custom_call.1} parent=59 // pred_check
          %p449 = pneg %p137
        $region78: #{tpu_custom_call.1} parent=59 // pred_check_branch
          %451 = sbr.rel (%p449) target = $region80
        $region79: #{tpu_custom_call.1} parent=59 // pred_region
          %452 = dma.done [#allocation9], 512
        $region80: #{tpu_custom_call.1} parent=59 // pred_fallthru
          _
        // Predicated region
        $region81: #{tpu_custom_call.1} parent=59 // pred_check
          %p453 = pneg %p158
        $region82: #{tpu_custom_call.1} parent=59 // pred_check_branch
          %455 = sbr.rel (%p453) target = $region84
        $region83: #{tpu_custom_call.1} parent=59 // pred_region
          %456 = dma.done [#allocation12], 1792
        $region84: #{tpu_custom_call.1} parent=59 // pred_fallthru
          _
        // Predicated region
        $region85: #{tpu_custom_call.1} parent=59 // pred_check
          %p457 = pneg %p179
        $region86: #{tpu_custom_call.1} parent=59 // pred_check_branch
          %459 = sbr.rel (%p457) target = $region88
        $region87: #{tpu_custom_call.1} parent=59 // pred_region
          %460 = dma.done [#allocation12], 576
        $region88: #{tpu_custom_call.1} parent=59 // pred_fallthru
          _
        // Predicated region
        $region89: #{tpu_custom_call.1} parent=59 // pred_check
          %p461 = pneg %p200
        $region90: #{tpu_custom_call.1} parent=59 // pred_check_branch
          %463 = sbr.rel (%p461) target = $region92
        $region91: #{tpu_custom_call.1} parent=59 // pred_region
          %464 = dma.done [#allocation15], 576
        $region92: #{tpu_custom_call.1} parent=59 // pred_fallthru
          _
        // Predicated region
        $region93: #{tpu_custom_call.1} parent=59 // pred_check
          %p465 = pneg %p221
        $region94: #{tpu_custom_call.1} parent=59 // pred_check_branch
          %467 = sbr.rel (%p465) target = $region96
        $region95: #{tpu_custom_call.1} parent=59 // pred_region
          %468 = dma.done [#allocation15], 128
        $region96: #{tpu_custom_call.1} parent=59 // pred_fallthru
          _
        // Predicated region
        $region97: #{tpu_custom_call.1} parent=59 // pred_check
          %p469 = pneg %p242
        $region98: #{tpu_custom_call.1} parent=59 // pred_check_branch
          %471 = sbr.rel (%p469) target = $region100
        $region99: #{tpu_custom_call.1} parent=59 // pred_region
          %472 = dma.done [#allocation18], 288
        $region100: #{tpu_custom_call.1} parent=59 // pred_fallthru
          _
        %s473 = sand.u32 %s40, 1
        %s474 = scalar_lea.sflag [#allocation3], %s473
        %s475 = sand.u32 %s40, 1
        %s476 = smul.addr %s475, 4
        %s477 = scalar_lea.vmem [#allocation2], %s476
        %p478 = pneg %p53
        %p479 = pneg %p50
        %p480 = pneg %p74
        %p481 = pneg %p71
        %p482 = pneg %p95
        %p483 = pneg %p92
        %p484 = pneg %p116
        %p485 = pneg %p113
        %p486 = pneg %p137
        %p487 = pneg %p134
        %p488 = pneg %p158
        %p489 = pneg %p155
        %p490 = pneg %p179
        %p491 = pneg %p176
        %p492 = pneg %p200
        %p493 = pneg %p197
        %p494 = pneg %p221
        %p495 = pneg %p218
        %p496 = pneg %p242
        %p497 = pneg %p239
        %p498 = pneg %p268
        %p499 = pneg %p265
        %s500 = sand.u32 %s255, 1
        %s501 = scalar_lea.sflag [#allocation4], %s500
        %s502 = sand.u32 %s255, 1
        %s503 = smul.addr %s502, 16
        %s504 = scalar_lea.vmem [#allocation19], %s503
        %v506 = vld [vmem:[%s432] sm:$0xf]
        %v507 = vunpack.c.l.bf16 %v506
        %v508 = vld [vmem:[#allocation5] sm:$0xff]
        %v509 = vld [vmem:[#allocation5 + $0x8] sm:$0xff]
        %v510 = vld [vmem:[#allocation5 + $0x10] sm:$0xff]
        %v511 = vld [vmem:[#allocation5 + $0x18] sm:$0xff]
        %v512 = vld [vmem:[#allocation5 + $0x20] sm:$0xff]
        %v513 = vld [vmem:[#allocation5 + $0x28] sm:$0xff]
        %v514 = vld [vmem:[#allocation5 + $0x30] sm:$0xff]
        %v515 = vld [vmem:[#allocation5 + $0x38] sm:$0xff]
        %v516 = vld [vmem:[#allocation5 + $0x40] sm:$0xff]
        %v517 = vld [vmem:[#allocation5 + $0x48] sm:$0xff]
        %v518 = vld [vmem:[#allocation5 + $0x50] sm:$0xff]
        %v519 = vld [vmem:[#allocation5 + $0x58] sm:$0xff]
        %v520 = vld [vmem:[#allocation5 + $0x60] sm:$0xff]
        %v521 = vld [vmem:[#allocation5 + $0x68] sm:$0xff]
        %v522 = vld [vmem:[#allocation5 + $0x70] sm:$0xff]
        %v523 = vld [vmem:[#allocation5 + $0x78] sm:$0xff]
        %v524 = vld [vmem:[#allocation5 + $0x80] sm:$0xff]
        %v525 = vld [vmem:[#allocation5 + $0x88] sm:$0xff]
        %v526 = vld [vmem:[#allocation5 + $0x90] sm:$0xff]
        %v527 = vld [vmem:[#allocation5 + $0x98] sm:$0xff]
        %v528 = vld [vmem:[#allocation5 + $0xa0] sm:$0xff]
        %v529 = vld [vmem:[#allocation5 + $0xa8] sm:$0xff]
        %v530 = vld [vmem:[#allocation5 + $0xb0] sm:$0xff]
        %v531 = vld [vmem:[#allocation5 + $0xb8] sm:$0xff]
        %v532 = vld [vmem:[#allocation5 + $0xc0] sm:$0xff]
        %v533 = vld [vmem:[#allocation5 + $0xc8] sm:$0xff]
        %v534 = vld [vmem:[#allocation5 + $0xd0] sm:$0xff]
        %v535 = vld [vmem:[#allocation5 + $0xd8] sm:$0xff]
        %v536 = vld [vmem:[#allocation5 + $0xe0] sm:$0xff]
        %v537 = vld [vmem:[#allocation5 + $0xe8] sm:$0xff]
        %v538 = vld [vmem:[#allocation5 + $0xf0] sm:$0xff]
        %v539 = vld [vmem:[#allocation5 + $0xf8] sm:$0xff]
        %v541 = vcombine.high %v507, %v507
        %543 = vmatprep.subr.mxu0 0.0
        %544 = vmatpush1.msra.mxu0 %v508
        %545 = vmatprep.subr.mxu0 0.0
        %546 = vmatpush1.msra.mxu0 %v509
        %547 = vmatprep.subr.mxu0 0.0
        %548 = vmatpush1.msra.mxu0 %v510
        %549 = vmatprep.subr.mxu0 0.0
        %550 = vmatpush1.msra.mxu0 %v511
        %551 = vmatprep.subr.mxu0 0.0
        %552 = vmatpush1.msra.mxu0 %v512
        %553 = vmatprep.subr.mxu0 0.0
        %554 = vmatpush1.msra.mxu0 %v513
        %555 = vmatprep.subr.mxu0 0.0
        %556 = vmatpush1.msra.mxu0 %v514
        %557 = vmatprep.subr.mxu0 0.0
        %558 = vmatpush1.msra.mxu0 %v515
        %559 = vmatprep.subr.mxu0 0.0
        %560 = vmatpush1.msra.mxu0 %v516
        %561 = vmatprep.subr.mxu0 0.0
        %562 = vmatpush1.msra.mxu0 %v517
        %563 = vmatprep.subr.mxu0 0.0
        %564 = vmatpush1.msra.mxu0 %v518
        %565 = vmatprep.subr.mxu0 0.0
        %566 = vmatpush1.msra.mxu0 %v519
        %567 = vmatprep.subr.mxu0 0.0
        %568 = vmatpush1.msra.mxu0 %v520
        %569 = vmatprep.subr.mxu0 0.0
        %570 = vmatpush1.msra.mxu0 %v521
        %571 = vmatprep.subr.mxu0 0.0
        %572 = vmatpush1.msra.mxu0 %v522
        %573 = vmatprep.subr.mxu0 0.0
        %574 = vmatpush1.msra.mxu0 %v523
        %575 = vmatprep.subr.mxu0 0.0
        %576 = vmatpush1.msra.mxu0 %v524
        %577 = vmatprep.subr.mxu0 0.0
        %578 = vmatpush1.msra.mxu0 %v525
        %579 = vmatprep.subr.mxu0 0.0
        %580 = vmatpush1.msra.mxu0 %v526
        %581 = vmatprep.subr.mxu0 0.0
        %582 = vmatpush1.msra.mxu0 %v527
        %583 = vmatprep.subr.mxu0 0.0
        %584 = vmatpush1.msra.mxu0 %v528
        %585 = vmatprep.subr.mxu0 0.0
        %586 = vmatpush1.msra.mxu0 %v529
        %587 = vmatprep.subr.mxu0 0.0
        %588 = vmatpush1.msra.mxu0 %v530
        %589 = vmatprep.subr.mxu0 0.0
        %590 = vmatpush1.msra.mxu0 %v531
        %591 = vmatprep.subr.mxu0 0.0
        %592 = vmatpush1.msra.mxu0 %v532
        %593 = vmatprep.subr.mxu0 0.0
        %594 = vmatpush1.msra.mxu0 %v533
        %595 = vmatprep.subr.mxu0 0.0
        %596 = vmatpush1.msra.mxu0 %v534
        %597 = vmatprep.subr.mxu0 0.0
        %598 = vmatpush1.msra.mxu0 %v535
        %599 = vmatprep.subr.mxu0 0.0
        %600 = vmatpush1.msra.mxu0 %v536
        %601 = vmatprep.subr.mxu0 0.0
        %602 = vmatpush1.msra.mxu0 %v537
        %603 = vmatprep.subr.mxu0 0.0
        %604 = vmatpush1.msra.mxu0 %v538
        %605 = vmatprep.subr.mxu0 0.0
        %606 = vmatpush1.msra.mxu0 %v539
        %607 = vmatprep.mubr.f32.mxu0 %v541
        %608 = vmatmul.mubr.f32.gmra.mrb[0].mxu0 %v507
        %v609 = vpop.f32.mrb[0].mxu0
        %v610 = vadd.f32 0.0, %v609
        %v611 = vpop.f32.mrb[0].mxu0
        %612 = vdwg.mxu0
        %v613 = vld [vmem:[#allocation7] sm:$0xf]
        %v614 = vld [vmem:[#allocation7 + $0x4] sm:$0xf]
        %v615 = vld [vmem:[#allocation7 + $0x8] sm:$0xf]
        %v616 = vld [vmem:[#allocation7 + $0xc] sm:$0xf]
        %v617 = vpack.c.bf16 %v610, %v610
        %v618 = vld [vmem:[#allocation8] sm:$0xff]
        %v619 = vld [vmem:[#allocation8 + $0x8] sm:$0xff]
        %v620 = vld [vmem:[#allocation8 + $0x10] sm:$0xff]
        %v621 = vld [vmem:[#allocation8 + $0x18] sm:$0xff]
        %623 = vset.pattern.permute.xlu0 0
        %624 = vperm.xlu0 %623, %v618
        %v625 = vpop.permute.xlu0 %624
        %628 = vset.pattern.permute.xlu0 0
        %629 = vperm.xlu0 %628, %v619
        %v630 = vpop.permute.xlu0 %629
        %633 = vset.pattern.permute.xlu0 0
        %634 = vperm.xlu0 %633, %v620
        %v635 = vpop.permute.xlu0 %634
        %638 = vset.pattern.permute.xlu0 0
        %639 = vperm.xlu0 %638, %v621
        %v640 = vpop.permute.xlu0 %639
        %v646 = vunpack.c.l.b16 %v613
        %v647 = vunpack.c.l.b16 %v614
        %v648 = vunpack.c.l.b16 %v615
        %v649 = vunpack.c.l.b16 %v616
        %v650 = vpack.c.b16 %v647, %v646
        %v651 = vpack.c.b16 %v649, %v648
        %vm652 = vcmask 31744
        %v654 = vsel %vm652, %v650, 0
        %v657 = vsel %vm652, %v651, 0
        %vm659 = vcmask 1041408
        %v661 = vsel %vm659, %v617, 0
        %663 = vmatprep.subr.bf16.mxu0 0
        %664 = vmatpush1.bf16.msra.mxu0 %v661
        %665 = vmatprep.subr.bf16.mxu0 0
        %666 = vmatpush1.bf16.msra.mxu0 0
        %667 = vmatprep.subr.bf16.mxu0 0
        %668 = vmatpush1.bf16.msra.mxu0 0
        %669 = vmatprep.subr.bf16.mxu0 0
        %670 = vmatpush1.bf16.msra.mxu0 0
        %671 = vmatprep.subr.bf16.mxu0 0
        %672 = vmatpush1.bf16.msra.mxu0 0
        %673 = vmatprep.subr.bf16.mxu0 0
        %674 = vmatpush1.bf16.msra.mxu0 0
        %675 = vmatprep.subr.bf16.mxu0 0
        %676 = vmatpush1.bf16.msra.mxu0 0
        %677 = vmatprep.subr.bf16.mxu0 0
        %678 = vmatpush1.bf16.msra.mxu0 0
        %679 = vmatprep.subr.bf16.mxu0 0
        %680 = vmatpush1.bf16.msra.mxu0 0
        %681 = vmatprep.subr.bf16.mxu0 0
        %682 = vmatpush1.bf16.msra.mxu0 0
        %683 = vmatprep.subr.bf16.mxu0 0
        %684 = vmatpush1.bf16.msra.mxu0 0
        %685 = vmatprep.subr.bf16.mxu0 0
        %686 = vmatpush1.bf16.msra.mxu0 0
        %687 = vmatprep.subr.bf16.mxu0 0
        %688 = vmatpush1.bf16.msra.mxu0 0
        %689 = vmatprep.subr.bf16.mxu0 0
        %690 = vmatpush1.bf16.msra.mxu0 0
        %691 = vmatprep.subr.bf16.mxu0 0
        %692 = vmatpush1.bf16.msra.mxu0 0
        %693 = vmatprep.subr.bf16.mxu0 0
        %694 = vmatpush1.bf16.msra.mxu0 0
        %695 = vmatprep.mubr.bf16.mxu0 0
        %696 = vmatmul.mubr.bf16.gmra.mrb[0].mxu0 %v654
        %v697 = vpop.f32.mrb[0].mxu0
        %v698 = vadd.f32 %v625, %v697
        %v699 = vpop.f32.mrb[0].mxu0
        %v700 = vpop.f32.mrb[0].mxu0
        %v701 = vadd.f32 %v630, %v700
        %v702 = vpop.f32.mrb[0].mxu0
        %703 = vmatprep.mubr.bf16.mxu0 0
        %704 = vmatmul.mubr.bf16.gmra.mrb[0].mxu0 %v657
        %v705 = vpop.f32.mrb[0].mxu0
        %v706 = vadd.f32 %v635, %v705
        %v707 = vpop.f32.mrb[0].mxu0
        %v708 = vpop.f32.mrb[0].mxu0
        %v709 = vadd.f32 %v640, %v708
        %v710 = vpop.f32.mrb[0].mxu0
        %711 = vdwg.mxu0
        %v712 = vmax.f32 %v698, 0.0
        %v713 = vmax.f32 %v701, 0.0
        %v714 = vmax.f32 %v706, 0.0
        %v715 = vmax.f32 %v709, 0.0
        %v716 = vld [vmem:[#allocation10] sm:$0xff]
        %v717 = vld [vmem:[#allocation10 + $0x8] sm:$0xff]
        %v718 = vld [vmem:[#allocation10 + $0x10] sm:$0xff]
        %v719 = vld [vmem:[#allocation10 + $0x18] sm:$0xff]
        %v720 = vmul.f32 %v712, %v716
        %v721 = vmul.f32 %v713, %v717
        %v722 = vmul.f32 %v714, %v718
        %v723 = vmul.f32 %v715, %v719
        %v724 = vld [vmem:[#allocation11] sm:$0xff]
        %v725 = vld [vmem:[#allocation11 + $0x8] sm:$0xff]
        %v726 = vld [vmem:[#allocation11 + $0x10] sm:$0xff]
        %v727 = vld [vmem:[#allocation11 + $0x18] sm:$0xff]
        %v728 = vld [vmem:[#allocation11 + $0x20] sm:$0xff]
        %v729 = vld [vmem:[#allocation11 + $0x28] sm:$0xff]
        %v730 = vld [vmem:[#allocation11 + $0x30] sm:$0xff]
        %v731 = vld [vmem:[#allocation11 + $0x38] sm:$0xff]
        %v732 = vld [vmem:[#allocation11 + $0x40] sm:$0xff]
        %v733 = vld [vmem:[#allocation11 + $0x48] sm:$0xff]
        %v734 = vld [vmem:[#allocation11 + $0x50] sm:$0xff]
        %v735 = vld [vmem:[#allocation11 + $0x58] sm:$0xff]
        %v736 = vld [vmem:[#allocation11 + $0x60] sm:$0x3]
        %v737 = vld [vmem:[#allocation11 + $0x68] sm:$0x3]
        %vm738 = vcmask 408576
        %v740 = vsel %vm738, %v720, 0
        %v743 = vsel %vm738, %v721, 0
        %v746 = vsel %vm738, %v722, 0
        %v749 = vsel %vm738, %v723, 0
        %v752 = vsel %vm659, %v736, 0
        %v755 = vsel %vm659, %v737, 0
        %757 = vmatprep.subr.mxu0 %v725
        %758 = vmatpush1.msra.mxu0 %v724
        %759 = vmatprep.subr.mxu0 %v727
        %760 = vmatpush1.msra.mxu0 %v726
        %761 = vmatprep.subr.mxu0 %v729
        %762 = vmatpush1.msra.mxu0 %v728
        %763 = vmatprep.subr.mxu0 %v731
        %764 = vmatpush1.msra.mxu0 %v730
        %765 = vmatprep.subr.mxu0 %v733
        %766 = vmatpush1.msra.mxu0 %v732
        %767 = vmatprep.subr.mxu0 %v735
        %768 = vmatpush1.msra.mxu0 %v734
        %769 = vmatprep.subr.mxu0 %v755
        %770 = vmatpush1.msra.mxu0 %v752
        %771 = vmatprep.subr.mxu0 0.0
        %772 = vmatpush1.msra.mxu0 0.0
        %773 = vmatprep.subr.mxu0 0.0
        %774 = vmatpush1.msra.mxu0 0.0
        %775 = vmatprep.subr.mxu0 0.0
        %776 = vmatpush1.msra.mxu0 0.0
        %777 = vmatprep.subr.mxu0 0.0
        %778 = vmatpush1.msra.mxu0 0.0
        %779 = vmatprep.subr.mxu0 0.0
        %780 = vmatpush1.msra.mxu0 0.0
        %781 = vmatprep.subr.mxu0 0.0
        %782 = vmatpush1.msra.mxu0 0.0
        %783 = vmatprep.subr.mxu0 0.0
        %784 = vmatpush1.msra.mxu0 0.0
        %785 = vmatprep.subr.mxu0 0.0
        %786 = vmatpush1.msra.mxu0 0.0
        %787 = vmatprep.subr.mxu0 0.0
        %788 = vmatpush1.msra.mxu0 0.0
        %789 = vmatprep.subr.mxu0 0.0
        %790 = vmatpush1.msra.mxu0 0.0
        %791 = vmatprep.subr.mxu0 0.0
        %792 = vmatpush1.msra.mxu0 0.0
        %793 = vmatprep.subr.mxu0 0.0
        %794 = vmatpush1.msra.mxu0 0.0
        %795 = vmatprep.subr.mxu0 0.0
        %796 = vmatpush1.msra.mxu0 0.0
        %797 = vmatprep.subr.mxu0 0.0
        %798 = vmatpush1.msra.mxu0 0.0
        %799 = vmatprep.subr.mxu0 0.0
        %800 = vmatpush1.msra.mxu0 0.0
        %801 = vmatprep.subr.mxu0 0.0
        %802 = vmatpush1.msra.mxu0 0.0
        %803 = vmatprep.subr.mxu0 0.0
        %804 = vmatpush1.msra.mxu0 0.0
        %805 = vmatprep.subr.mxu0 0.0
        %806 = vmatpush1.msra.mxu0 0.0
        %807 = vmatprep.subr.mxu0 0.0
        %808 = vmatpush1.msra.mxu0 0.0
        %809 = vmatprep.subr.mxu0 0.0
        %810 = vmatpush1.msra.mxu0 0.0
        %811 = vmatprep.subr.mxu0 0.0
        %812 = vmatpush1.msra.mxu0 0.0
        %813 = vmatprep.subr.mxu0 0.0
        %814 = vmatpush1.msra.mxu0 0.0
        %815 = vmatprep.subr.mxu0 0.0
        %816 = vmatpush1.msra.mxu0 0.0
        %817 = vmatprep.subr.mxu0 0.0
        %818 = vmatpush1.msra.mxu0 0.0
        %819 = vmatprep.subr.mxu0 0.0
        %820 = vmatpush1.msra.mxu0 0.0
        %821 = vmatprep.mubr.f32.mxu0 0.0
        %822 = vmatmul.mubr.f32.gmra.mrb[0].mxu0 %v740
        %v823 = vpop.f32.mrb[0].mxu0
        %v824 = vadd.f32 0.0, %v823
        %v825 = vpop.f32.mrb[0].mxu0
        %v826 = vadd.f32 0.0, %v825
        %827 = vmatprep.mubr.f32.mxu0 0.0
        %828 = vmatmul.mubr.f32.gmra.mrb[0].mxu0 %v743
        %v829 = vpop.f32.mrb[0].mxu0
        %v830 = vadd.f32 0.0, %v829
        %v831 = vpop.f32.mrb[0].mxu0
        %v832 = vadd.f32 0.0, %v831
        %833 = vmatprep.mubr.f32.mxu0 0.0
        %834 = vmatmul.mubr.f32.gmra.mrb[0].mxu0 %v746
        %v835 = vpop.f32.mrb[0].mxu0
        %v836 = vadd.f32 0.0, %v835
        %v837 = vpop.f32.mrb[0].mxu0
        %v838 = vadd.f32 0.0, %v837
        %839 = vmatprep.mubr.f32.mxu0 0.0
        %840 = vmatmul.mubr.f32.gmra.mrb[0].mxu0 %v749
        %v841 = vpop.f32.mrb[0].mxu0
        %v842 = vadd.f32 0.0, %v841
        %v843 = vpop.f32.mrb[0].mxu0
        %v844 = vadd.f32 0.0, %v843
        %845 = vdwg.mxu0
        %v846 = vpack.c.bf16 %v830, %v824
        %v847 = vpack.c.bf16 %v832, %v826
        %v848 = vpack.c.bf16 %v842, %v836
        %v849 = vpack.c.bf16 %v844, %v838
        %v850 = vld [vmem:[#allocation13] sm:$0xf]
        %v851 = vld [vmem:[#allocation13 + $0x4] sm:$0xf]
        %v852 = vld [vmem:[#allocation13 + $0x8] sm:$0xf]
        %v853 = vld [vmem:[#allocation13 + $0xc] sm:$0xf]
        %v854 = vld [vmem:[#allocation13 + $0x10] sm:$0xf]
        %v855 = vld [vmem:[#allocation13 + $0x14] sm:$0xf]
        %v856 = vld [vmem:[#allocation13 + $0x18] sm:$0xf]
        %v857 = vld [vmem:[#allocation13 + $0x1c] sm:$0xf]
        %v858 = vld [vmem:[#allocation13 + $0x20] sm:$0xf]
        %v859 = vld [vmem:[#allocation14] sm:$0xf]
        %v860 = vld [vmem:[#allocation14 + $0x4] sm:$0xf]
        %v861 = vld [vmem:[#allocation14 + $0x8] sm:$0xf]
        %v862 = vld [vmem:[#allocation14 + $0xc] sm:$0xf]
        %v863 = vld [vmem:[#allocation14 + $0x10] sm:$0xf]
        %v864 = vld [vmem:[#allocation14 + $0x14] sm:$0xf]
        %v865 = vld [vmem:[#allocation14 + $0x18] sm:$0xf]
        %v866 = vld [vmem:[#allocation14 + $0x1c] sm:$0xf]
        %v867 = vld [vmem:[#allocation14 + $0x20] sm:$0xf]
        %v877 = vunpack.c.l.b16 %v859
        %v878 = vunpack.c.l.b16 %v860
        %v879 = vunpack.c.l.b16 %v861
        %v880 = vunpack.c.l.b16 %v862
        %v881 = vunpack.c.l.b16 %v863
        %v882 = vunpack.c.l.b16 %v864
        %v883 = vunpack.c.l.b16 %v865
        %v884 = vunpack.c.l.b16 %v866
        %v885 = vunpack.c.l.b16 %v867
        %v886 = vpack.c.b16 %v878, %v877
        %v887 = vpack.c.b16 %v880, %v879
        %v888 = vpack.c.b16 %v882, %v881
        %v889 = vpack.c.b16 %v884, %v883
        %v890 = vpack.c.b16 %v885, %v885
        %vm891 = vcmask 261120
        %v893 = vsel %vm891, %v886, 0
        %v896 = vsel %vm891, %v887, 0
        %v899 = vsel %vm891, %v888, 0
        %v902 = vsel %vm891, %v889, 0
        %v905 = vsel %vm891, %v890, 0
        %907 = vmatprep.subr.bf16.mxu0 %v847
        %908 = vmatpush1.bf16.msra.mxu0 %v846
        %909 = vmatprep.subr.bf16.mxu0 %v849
        %910 = vmatpush1.bf16.msra.mxu0 %v848
        %911 = vmatprep.subr.bf16.mxu0 0
        %912 = vmatpush1.bf16.msra.mxu0 0
        %913 = vmatprep.subr.bf16.mxu0 0
        %914 = vmatpush1.bf16.msra.mxu0 0
        %915 = vmatprep.subr.bf16.mxu0 0
        %916 = vmatpush1.bf16.msra.mxu0 0
        %917 = vmatprep.subr.bf16.mxu0 0
        %918 = vmatpush1.bf16.msra.mxu0 0
        %919 = vmatprep.subr.bf16.mxu0 0
        %920 = vmatpush1.bf16.msra.mxu0 0
        %921 = vmatprep.subr.bf16.mxu0 0
        %922 = vmatpush1.bf16.msra.mxu0 0
        %923 = vmatprep.subr.bf16.mxu0 0
        %924 = vmatpush1.bf16.msra.mxu0 0
        %925 = vmatprep.subr.bf16.mxu0 0
        %926 = vmatpush1.bf16.msra.mxu0 0
        %927 = vmatprep.subr.bf16.mxu0 0
        %928 = vmatpush1.bf16.msra.mxu0 0
        %929 = vmatprep.subr.bf16.mxu0 0
        %930 = vmatpush1.bf16.msra.mxu0 0
        %931 = vmatprep.subr.bf16.mxu0 0
        %932 = vmatpush1.bf16.msra.mxu0 0
        %933 = vmatprep.subr.bf16.mxu0 0
        %934 = vmatpush1.bf16.msra.mxu0 0
        %935 = vmatprep.subr.bf16.mxu0 0
        %936 = vmatpush1.bf16.msra.mxu0 0
        %937 = vmatprep.subr.bf16.mxu0 0
        %938 = vmatpush1.bf16.msra.mxu0 0
        %939 = vmatprep.mubr.bf16.mxu0 0
        %940 = vmatmul.mubr.bf16.gmra.mrb[0].mxu0 %v893
        %v941 = vpop.f32.mrb[0].mxu0
        %v942 = vadd.f32 0.0, %v941
        %v943 = vpop.f32.mrb[0].mxu0
        %v944 = vadd.f32 0.0, %v943
        %v945 = vpop.f32.mrb[0].mxu0
        %v946 = vadd.f32 0.0, %v945
        %v947 = vpop.f32.mrb[0].mxu0
        %v948 = vadd.f32 0.0, %v947
        %949 = vmatprep.mubr.bf16.mxu0 0
        %950 = vmatmul.mubr.bf16.gmra.mrb[0].mxu0 %v896
        %v951 = vpop.f32.mrb[0].mxu0
        %v952 = vadd.f32 0.0, %v951
        %v953 = vpop.f32.mrb[0].mxu0
        %v954 = vadd.f32 0.0, %v953
        %v955 = vpop.f32.mrb[0].mxu0
        %v956 = vadd.f32 0.0, %v955
        %v957 = vpop.f32.mrb[0].mxu0
        %v958 = vadd.f32 0.0, %v957
        %959 = vmatprep.mubr.bf16.mxu0 0
        %960 = vmatmul.mubr.bf16.gmra.mrb[0].mxu0 %v899
        %v961 = vpop.f32.mrb[0].mxu0
        %v962 = vadd.f32 0.0, %v961
        %v963 = vpop.f32.mrb[0].mxu0
        %v964 = vadd.f32 0.0, %v963
        %v965 = vpop.f32.mrb[0].mxu0
        %v966 = vadd.f32 0.0, %v965
        %v967 = vpop.f32.mrb[0].mxu0
        %v968 = vadd.f32 0.0, %v967
        %969 = vmatprep.mubr.bf16.mxu0 0
        %970 = vmatmul.mubr.bf16.gmra.mrb[0].mxu0 %v902
        %v971 = vpop.f32.mrb[0].mxu0
        %v972 = vadd.f32 0.0, %v971
        %v973 = vpop.f32.mrb[0].mxu0
        %v974 = vadd.f32 0.0, %v973
        %v975 = vpop.f32.mrb[0].mxu0
        %v976 = vadd.f32 0.0, %v975
        %v977 = vpop.f32.mrb[0].mxu0
        %v978 = vadd.f32 0.0, %v977
        %979 = vmatprep.mubr.bf16.mxu0 0
        %980 = vmatmul.mubr.bf16.gmra.mrb[0].mxu0 %v905
        %v981 = vpop.f32.mrb[0].mxu0
        %v982 = vadd.f32 0.0, %v981
        %v983 = vpop.f32.mrb[0].mxu0
        %v984 = vadd.f32 0.0, %v983
        %v985 = vpop.f32.mrb[0].mxu0
        %v986 = vpop.f32.mrb[0].mxu0
        %987 = vdwg.mxu0
        %v997 = vunpack.c.l.b16 %v850
        %v998 = vunpack.c.l.b16 %v851
        %v999 = vunpack.c.l.b16 %v852
        %v1000 = vunpack.c.l.b16 %v853
        %v1001 = vunpack.c.l.b16 %v854
        %v1002 = vunpack.c.l.b16 %v855
        %v1003 = vunpack.c.l.b16 %v856
        %v1004 = vunpack.c.l.b16 %v857
        %v1005 = vunpack.c.l.b16 %v858
        %v1006 = vpack.c.b16 %v998, %v997
        %v1007 = vpack.c.b16 %v1000, %v999
        %v1008 = vpack.c.b16 %v1002, %v1001
        %v1009 = vpack.c.b16 %v1004, %v1003
        %v1010 = vpack.c.b16 %v1005, %v1005
        %v1013 = vunpack.c.l.s4 1983009808
        %v1014 = vunpack.c.0.s8 %v1013
        %v1015 = vlaneseq
        %v1016 = vshrl.u32 %v1015, 7
        %v1017 = vsub.s32 %v1014, %v1016
        %v1018 = vrot.slane %v506, %v1017
        %v1019 = vcombine.high %v1018, %v1018
        %v1021 = vsel %vm652, %v1006, 0
        %v1024 = vsel %vm652, %v1007, 0
        %v1027 = vsel %vm652, %v1008, 0
        %v1030 = vsel %vm652, %v1009, 0
        %v1033 = vsel %vm652, %v1010, 0
        %v1036 = vsel %vm659, %v1018, 0
        %v1039 = vsel %vm659, %v1019, 0
        %1041 = vmatprep.subr.bf16.mxu0 %v1039
        %1042 = vmatpush1.bf16.msra.mxu0 %v1036
        %1043 = vmatprep.subr.bf16.mxu0 0
        %1044 = vmatpush1.bf16.msra.mxu0 0
        %1045 = vmatprep.subr.bf16.mxu0 0
        %1046 = vmatpush1.bf16.msra.mxu0 0
        %1047 = vmatprep.subr.bf16.mxu0 0
        %1048 = vmatpush1.bf16.msra.mxu0 0
        %1049 = vmatprep.subr.bf16.mxu0 0
        %1050 = vmatpush1.bf16.msra.mxu0 0
        %1051 = vmatprep.subr.bf16.mxu0 0
        %1052 = vmatpush1.bf16.msra.mxu0 0
        %1053 = vmatprep.subr.bf16.mxu0 0
        %1054 = vmatpush1.bf16.msra.mxu0 0
        %1055 = vmatprep.subr.bf16.mxu0 0
        %1056 = vmatpush1.bf16.msra.mxu0 0
        %1057 = vmatprep.subr.bf16.mxu0 0
        %1058 = vmatpush1.bf16.msra.mxu0 0
        %1059 = vmatprep.subr.bf16.mxu0 0
        %1060 = vmatpush1.bf16.msra.mxu0 0
        %1061 = vmatprep.subr.bf16.mxu0 0
        %1062 = vmatpush1.bf16.msra.mxu0 0
        %1063 = vmatprep.subr.bf16.mxu0 0
        %1064 = vmatpush1.bf16.msra.mxu0 0
        %1065 = vmatprep.subr.bf16.mxu0 0
        %1066 = vmatpush1.bf16.msra.mxu0 0
        %1067 = vmatprep.subr.bf16.mxu0 0
        %1068 = vmatpush1.bf16.msra.mxu0 0
        %1069 = vmatprep.subr.bf16.mxu0 0
        %1070 = vmatpush1.bf16.msra.mxu0 0
        %1071 = vmatprep.subr.bf16.mxu0 0
        %1072 = vmatpush1.bf16.msra.mxu0 0
        %1073 = vmatprep.mubr.bf16.mxu0 0
        %1074 = vmatmul.mubr.bf16.gmra.mrb[0].mxu0 %v1021
        %v1075 = vpop.f32.mrb[0].mxu0
        %v1076 = vadd.f32 %v942, %v1075
        %v1077 = vpop.f32.mrb[0].mxu0
        %v1078 = vadd.f32 %v944, %v1077
        %v1079 = vpop.f32.mrb[0].mxu0
        %v1080 = vadd.f32 %v946, %v1079
        %v1081 = vpop.f32.mrb[0].mxu0
        %v1082 = vadd.f32 %v948, %v1081
        %1083 = vmatprep.mubr.bf16.mxu0 0
        %1084 = vmatmul.mubr.bf16.gmra.mrb[0].mxu0 %v1024
        %v1085 = vpop.f32.mrb[0].mxu0
        %v1086 = vadd.f32 %v952, %v1085
        %v1087 = vpop.f32.mrb[0].mxu0
        %v1088 = vadd.f32 %v954, %v1087
        %v1089 = vpop.f32.mrb[0].mxu0
        %v1090 = vadd.f32 %v956, %v1089
        %v1091 = vpop.f32.mrb[0].mxu0
        %v1092 = vadd.f32 %v958, %v1091
        %1093 = vmatprep.mubr.bf16.mxu0 0
        %1094 = vmatmul.mubr.bf16.gmra.mrb[0].mxu0 %v1027
        %v1095 = vpop.f32.mrb[0].mxu0
        %v1096 = vadd.f32 %v962, %v1095
        %v1097 = vpop.f32.mrb[0].mxu0
        %v1098 = vadd.f32 %v964, %v1097
        %v1099 = vpop.f32.mrb[0].mxu0
        %v1100 = vadd.f32 %v966, %v1099
        %v1101 = vpop.f32.mrb[0].mxu0
        %v1102 = vadd.f32 %v968, %v1101
        %1103 = vmatprep.mubr.bf16.mxu0 0
        %1104 = vmatmul.mubr.bf16.gmra.mrb[0].mxu0 %v1030
        %v1105 = vpop.f32.mrb[0].mxu0
        %v1106 = vadd.f32 %v972, %v1105
        %v1107 = vpop.f32.mrb[0].mxu0
        %v1108 = vadd.f32 %v974, %v1107
        %v1109 = vpop.f32.mrb[0].mxu0
        %v1110 = vadd.f32 %v976, %v1109
        %v1111 = vpop.f32.mrb[0].mxu0
        %v1112 = vadd.f32 %v978, %v1111
        %1113 = vmatprep.mubr.bf16.mxu0 0
        %1114 = vmatmul.mubr.bf16.gmra.mrb[0].mxu0 %v1033
        %v1115 = vpop.f32.mrb[0].mxu0
        %v1116 = vadd.f32 %v982, %v1115
        %v1117 = vpop.f32.mrb[0].mxu0
        %v1118 = vadd.f32 %v984, %v1117
        %v1119 = vpop.f32.mrb[0].mxu0
        %v1120 = vpop.f32.mrb[0].mxu0
        %1121 = vdwg.mxu0
        %1122 = vrot.lane.b32.xlu0 %v1076, 17
        %v1123 = vpop.permute.xlu0 %1122
        %1124 = vrot.lane.b32.xlu0 %v1078, 17
        %v1125 = vpop.permute.xlu0 %1124
        %v1126 = vlaneseq
        %v1127 = vand.u32 %v1126, 127
        %vm1128 = vcmp.lt.s32.totalorder %v1127, 17
        %v1129 = vsel %vm1128, %v1123, %v1125
        %v1130 = vsel %vm1128, %v1125, %v1123
        %v1131 = vld [vmem:[#allocation17] sm:$0x3]
        %v1133 = vlaneseq
        %v1134 = vshrl.u32 %v1133, 7
        %v1135 = vsub.s32 0, %v1134
        %v1136 = vrot.slane %v1131, %v1135
        %v1137 = vlaneseq
        %v1138 = vshrl.u32 %v1137, 7
        %v1139 = vsub.s32 1, %v1138
        %v1140 = vrot.slane %v1131, %v1139
        %v1143 = vmul.f32 %v1130, %v1136
        %v1144 = vmul.f32 %v1129, %v1140
        %v1145 = vadd.f32 %v1096, %v1143
        %v1146 = vadd.f32 %v1098, %v1144
        %1147 = vrot.lane.b32.xlu0 %v1080, 16
        %v1148 = vpop.permute.xlu0 %1147
        %1149 = vrot.lane.b32.xlu0 %v1082, 16
        %v1150 = vpop.permute.xlu0 %1149
        %vm1151 = vcmp.lt.s32.totalorder %v1127, 16
        %v1152 = vsel %vm1151, %v1148, %v1150
        %v1153 = vsel %vm1151, %v1150, %v1148
        %s1154 = scalar_lea.vmem [#allocation17], 2
        %v1155 = vld [vmem:[%s1154] sm:$0x3]
        %v1157 = vlaneseq
        %v1158 = vshrl.u32 %v1157, 7
        %v1159 = vsub.s32 0, %v1158
        %v1160 = vrot.slane %v1155, %v1159
        %v1161 = vlaneseq
        %v1162 = vshrl.u32 %v1161, 7
        %v1163 = vsub.s32 1, %v1162
        %v1164 = vrot.slane %v1155, %v1163
        %v1167 = vmul.f32 %v1153, %v1160
        %v1168 = vmul.f32 %v1152, %v1164
        %v1169 = vadd.f32 %v1145, %v1167
        %v1170 = vadd.f32 %v1146, %v1168
        %1171 = vrot.lane.b32.xlu0 %v1086, 15
        %v1172 = vpop.permute.xlu0 %1171
        %1173 = vrot.lane.b32.xlu0 %v1088, 15
        %v1174 = vpop.permute.xlu0 %1173
        %vm1175 = vcmp.lt.s32.totalorder %v1127, 15
        %v1176 = vsel %vm1175, %v1172, %v1174
        %v1177 = vsel %vm1175, %v1174, %v1172
        %s1178 = scalar_lea.vmem [#allocation17], 4
        %v1179 = vld [vmem:[%s1178] sm:$0x3]
        %v1181 = vlaneseq
        %v1182 = vshrl.u32 %v1181, 7
        %v1183 = vsub.s32 0, %v1182
        %v1184 = vrot.slane %v1179, %v1183
        %v1185 = vlaneseq
        %v1186 = vshrl.u32 %v1185, 7
        %v1187 = vsub.s32 1, %v1186
        %v1188 = vrot.slane %v1179, %v1187
        %v1191 = vmul.f32 %v1177, %v1184
        %v1192 = vmul.f32 %v1176, %v1188
        %v1193 = vadd.f32 %v1169, %v1191
        %v1194 = vadd.f32 %v1170, %v1192
        %1195 = vrot.lane.b32.xlu0 %v1090, 1
        %v1196 = vpop.permute.xlu0 %1195
        %1197 = vrot.lane.b32.xlu0 %v1092, 1
        %v1198 = vpop.permute.xlu0 %1197
        %vm1199 = vcmp.lt.s32.totalorder %v1127, 1
        %v1200 = vsel %vm1199, %v1196, %v1198
        %v1201 = vsel %vm1199, %v1198, %v1196
        %s1202 = scalar_lea.vmem [#allocation17], 6
        %v1203 = vld [vmem:[%s1202] sm:$0x3]
        %v1205 = vlaneseq
        %v1206 = vshrl.u32 %v1205, 7
        %v1207 = vsub.s32 0, %v1206
        %v1208 = vrot.slane %v1203, %v1207
        %v1209 = vlaneseq
        %v1210 = vshrl.u32 %v1209, 7
        %v1211 = vsub.s32 1, %v1210
        %v1212 = vrot.slane %v1203, %v1211
        %v1215 = vmul.f32 %v1201, %v1208
        %v1216 = vmul.f32 %v1200, %v1212
        %v1217 = vadd.f32 %v1193, %v1215
        %v1218 = vadd.f32 %v1194, %v1216
        %1219 = vrot.lane.b32.xlu0 %v1100, 127
        %v1220 = vpop.permute.xlu0 %1219
        %1221 = vrot.lane.b32.xlu0 %v1102, 127
        %v1222 = vpop.permute.xlu0 %1221
        %vm1223 = vcmp.lt.s32.totalorder %v1127, 127
        %v1224 = vsel %vm1223, %v1220, %v1222
        %v1225 = vsel %vm1223, %v1222, %v1220
        %s1226 = scalar_lea.vmem [#allocation17], 10
        %v1227 = vld [vmem:[%s1226] sm:$0x3]
        %v1229 = vlaneseq
        %v1230 = vshrl.u32 %v1229, 7
        %v1231 = vsub.s32 0, %v1230
        %v1232 = vrot.slane %v1227, %v1231
        %v1233 = vlaneseq
        %v1234 = vshrl.u32 %v1233, 7
        %v1235 = vsub.s32 1, %v1234
        %v1236 = vrot.slane %v1227, %v1235
        %v1239 = vmul.f32 %v1224, %v1232
        %v1240 = vmul.f32 %v1225, %v1236
        %v1241 = vadd.f32 %v1217, %v1239
        %v1242 = vadd.f32 %v1218, %v1240
        %1243 = vrot.lane.b32.xlu0 %v1106, 113
        %v1244 = vpop.permute.xlu0 %1243
        %1245 = vrot.lane.b32.xlu0 %v1108, 113
        %v1246 = vpop.permute.xlu0 %1245
        %vm1247 = vcmp.lt.s32.totalorder %v1127, 113
        %v1248 = vsel %vm1247, %v1244, %v1246
        %v1249 = vsel %vm1247, %v1246, %v1244
        %s1250 = scalar_lea.vmem [#allocation17], 12
        %v1251 = vld [vmem:[%s1250] sm:$0x3]
        %v1253 = vlaneseq
        %v1254 = vshrl.u32 %v1253, 7
        %v1255 = vsub.s32 0, %v1254
        %v1256 = vrot.slane %v1251, %v1255
        %v1257 = vlaneseq
        %v1258 = vshrl.u32 %v1257, 7
        %v1259 = vsub.s32 1, %v1258
        %v1260 = vrot.slane %v1251, %v1259
        %v1263 = vmul.f32 %v1248, %v1256
        %v1264 = vmul.f32 %v1249, %v1260
        %v1265 = vadd.f32 %v1241, %v1263
        %v1266 = vadd.f32 %v1242, %v1264
        %1267 = vrot.lane.b32.xlu0 %v1110, 112
        %v1268 = vpop.permute.xlu0 %1267
        %1269 = vrot.lane.b32.xlu0 %v1112, 112
        %v1270 = vpop.permute.xlu0 %1269
        %vm1271 = vcmp.lt.s32.totalorder %v1127, 112
        %v1272 = vsel %vm1271, %v1268, %v1270
        %v1273 = vsel %vm1271, %v1270, %v1268
        %s1274 = scalar_lea.vmem [#allocation17], 14
        %v1275 = vld [vmem:[%s1274] sm:$0x3]
        %v1277 = vlaneseq
        %v1278 = vshrl.u32 %v1277, 7
        %v1279 = vsub.s32 0, %v1278
        %v1280 = vrot.slane %v1275, %v1279
        %v1281 = vlaneseq
        %v1282 = vshrl.u32 %v1281, 7
        %v1283 = vsub.s32 1, %v1282
        %v1284 = vrot.slane %v1275, %v1283
        %v1287 = vmul.f32 %v1272, %v1280
        %v1288 = vmul.f32 %v1273, %v1284
        %v1289 = vadd.f32 %v1265, %v1287
        %v1290 = vadd.f32 %v1266, %v1288
        %1291 = vrot.lane.b32.xlu0 %v1116, 111
        %v1292 = vpop.permute.xlu0 %1291
        %1293 = vrot.lane.b32.xlu0 %v1118, 111
        %v1294 = vpop.permute.xlu0 %1293
        %vm1295 = vcmp.lt.s32.totalorder %v1127, 111
        %v1296 = vsel %vm1295, %v1292, %v1294
        %v1297 = vsel %vm1295, %v1294, %v1292
        %s1298 = scalar_lea.vmem [#allocation17], 16
        %v1299 = vld [vmem:[%s1298] sm:$0x3]
        %v1301 = vlaneseq
        %v1302 = vshrl.u32 %v1301, 7
        %v1303 = vsub.s32 0, %v1302
        %v1304 = vrot.slane %v1299, %v1303
        %v1305 = vlaneseq
        %v1306 = vshrl.u32 %v1305, 7
        %v1307 = vsub.s32 1, %v1306
        %v1308 = vrot.slane %v1299, %v1307
        %v1311 = vmul.f32 %v1296, %v1304
        %v1312 = vmul.f32 %v1297, %v1308
        %v1313 = vadd.f32 %v1289, %v1311
        %v1314 = vadd.f32 %v1290, %v1312
        %v1315 = vld [vmem:[#allocation16] sm:$0xff]
        %1317 = vset.pattern.permute.xlu0 0
        %1318 = vperm.xlu0 %1317, %v1315
        %v1319 = vpop.permute.xlu0 %1318
        %v1321 = vadd.f32 %v1313, %v1319
        %v1322 = vadd.f32 %v1314, %v1319
        %v1323 = vmax.f32 %v1321, 0.0
        %v1324 = vmax.f32 %v1322, 0.0
        %1325 = vst [vmem:[%s504] sm:$0xff] %v1323
        %1326 = vst [vmem:[%s504 + $0x8] sm:$0xff] %v1324
        %s1327 = sand.u32 %s255, 1
        %s1328 = scalar_lea.sflag [#allocation4], %s1327
        %s1329 = sand.u32 %s255, 1
        %s1330 = smul.addr %s1329, 16
        %s1331 = scalar_lea.vmem [#allocation19], %s1330
        // Predicated region
        $region101: #{tpu_custom_call.1} parent=59 // pred_check
          %p1332 = pneg %p265
        $region102: #{tpu_custom_call.1} parent=59 // pred_check_branch
          %1334 = sbr.rel (%p1332) target = $region104
        $region103: #{tpu_custom_call.1} parent=59 // pred_region
          %s1336 = ssub.s32 256, 256
          %1337 = vsyncadd %s1328, %s1336
          %s1338 = smul.addr %s32, 2
          %s1339 = smul.addr %s1338, 128
          %s1340 = scalar_lea.hbm %s10, %s1339
          %s1342 = sshll.u32 %s1331, 4
          %s1343 = int_to_ptr.vmem [resolvable:$true] %s1342
          %1345 = dma.vmem_to_hbm [thread:$0]  %s1343, 256, %s1340, %s1328
        $region104: #{tpu_custom_call.1} parent=59 // pred_fallthru
          _
      $region60: #{tpu_custom_call.1} parent=5 // pred_fallthru
        _
      %p1346 = scmp.le.s32.totalorder 2, %s27
      // Predicated region
      $region105: #{tpu_custom_call.1} parent=5 // pred_check
        %p1347 = pneg %p1346
      $region106: #{tpu_custom_call.1} parent=5 // pred_check_branch
        %1349 = sbr.rel (%p1347) target = $region108
      $region107: #{tpu_custom_call.1} parent=5 // pred_region
        %s1350 = ssub.s32 %s27, 2
        // Predicated region
        $region109: #{tpu_custom_call.1} parent=107 // pred_check
          %p1351 = pneg %p271
        $region110: #{tpu_custom_call.1} parent=107 // pred_check_branch
          %1353 = sbr.rel (%p1351) target = $region112
        $region111: #{tpu_custom_call.1} parent=107 // pred_region
          %s1354 = sand.u32 %s256, 1
          %s1355 = scalar_lea.sflag [#allocation4], %s1354
          %s1356 = sand.u32 %s256, 1
          %s1357 = smul.addr %s1356, 16
          %s1358 = scalar_lea.vmem [#allocation19], %s1357
          %1359 = dma.done %s1355, 256
        $region112: #{tpu_custom_call.1} parent=107 // pred_fallthru
          _
      $region108: #{tpu_custom_call.1} parent=5 // pred_fallthru
        _
    $region6: #{tpu_custom_call.1} parent=1 // loop_footer
      %s31 = sadd.s32 1, %s27
    $region7: #{tpu_custom_call.1} parent=1 // loop_footer_branch
      %26 = sbr.rel target = $region3
    $region8: #{tpu_custom_call.1} parent=1 // loop_exit
      _
    %1360 = vsyncpa [#allocation3], 1
    %s1361 = scalar_lea.sflag [#allocation3], 1
    %1362 = vsyncpa %s1361, 1
    %1363 = vsyncpa [#allocation6], 1
    %1364 = vsyncpa [#allocation9], 1
    %1365 = vsyncpa [#allocation12], 1
    %1366 = vsyncpa [#allocation15], 1
    %1367 = vsyncpa [#allocation18], 1
    %1368 = vsyncpa [#allocation4], 1
    %s1369 = scalar_lea.sflag [#allocation4], 1
    %1370 = vsyncpa %s1369, 1

</llo_original>
